<compile_context>
chip_gen: v6e
topology: v6e:2x2x1
jax: 0.10.0
libtpu: 0.0.40
codegen_flags: <defaults>
</compile_context>

<pallas_src>
import numpy as np
import jax
import jax.numpy as jnp
from jax import lax
from jax.experimental import pallas as pl
from jax.experimental.pallas import tpu as pltpu

# ----------------------------- model config --------------------------------
# Small, self-consistent hyper-parameters (same structure as the PyTorch
# module; d=16 / n_clayers=3 / latent=8 instead of 128/5/10 so the example
# runs at tiny shapes).
D = 16              # base channel width "d"
N_CLAYERS = 3       # -> one (conv, BN) block in conv_list
LATENT = 8          # latent_dim -> encoder output width 4*latent = 32
N_CHANNELS = 2      # Encoder's conv_first takes 2*n_channels = 4 input chans
K1 = 4              # kernel1_size
IMG = 16            # input spatial size: 16 -> 8 -> 4 -> 1 (conv_last valid)
NB = 2              # batch
BN_EPS = 1e-5
LRELU_SLOPE = 0.2


# ----------------------------- small helpers -------------------------------
def _conv_out_size(size, k, stride, pad):
    return (size + 2 * pad - k) // stride + 1


def _leaky(x):
    return jnp.where(x > 0, x, LRELU_SLOPE * x)


# ----------------------------- fused Pallas kernel -------------------------
def _sel_conv(s_ref, w_ref, act_bf16):
    """Conv as a sum over the k*k kernel positions of two tiny MXU matmuls:
         out += S_p @ act @ W_p
       S_p (rows_out, rows_in) is a 0/1 patch-selection matrix (rows are the
       flattened (n, oh, ow) positions; all-zero rows encode zero padding),
       W_p is the (C_in, C_out) weight slice at kernel position p.
       MXU operands are bf16, accumulation f32; re-casting the selected rows
       to bf16 is exact because every S_p row is one-hot (or zero)."""
    kk, rows_out, _ = s_ref.shape
    cout = w_ref.shape[2]
    acc = jnp.zeros((rows_out, cout), jnp.float32)
    for p in range(kk):
        picked = jnp.dot(s_ref[p], act_bf16, preferred_element_type=jnp.float32)
        acc = acc + jnp.dot(picked.astype(jnp.bfloat16), w_ref[p],
                            preferred_element_type=jnp.float32)
    return acc


def _row_mean_matmul(x):
    """Mean over rows (= over N,H,W) via a ones-vector MXU matmul."""
    rows = x.shape[0]
    ones = jnp.full((1, rows), 1.0 / rows, jnp.float32)
    return jnp.dot(ones, x, preferred_element_type=jnp.float32)     # (1, C)


def _make_encoder_kernel(n_blocks):
    """Fused encoder: conv_first + n_blocks*(conv+BN+leaky) + conv_last.
    All activations live in VMEM/vregs; only the final (N, 4*latent) slab is
    written back to HBM."""
    def kernel(*refs):
        # ---- conv_first (input pre-im2col'd) + leaky_relu ------------------
        col1, w1, b1 = refs[0], refs[1], refs[2]
        a = jnp.dot(col1[...], w1[...], preferred_element_type=jnp.float32)
        act = _leaky(a + b1[...]).astype(jnp.bfloat16)   # rows=(n,oh,ow), lanes=C
        i = 3
        # ---- conv_list[i] + BatchNorm2d (train-mode stats) + leaky_relu ----
        for _ in range(n_blocks):
            s_ref, w_ref, b_ref, g_ref, bt_ref = refs[i:i + 5]
            i += 5
            pre = _sel_conv(s_ref, w_ref, act) + b_ref[...]
            mean = _row_mean_matmul(pre)                      # over (N, H, W)
            cen = pre - mean
            var = _row_mean_matmul(cen * cen)                 # biased variance
            y = cen * lax.rsqrt(var + BN_EPS) * g_ref[...] + bt_ref[...]
            act = _leaky(y).astype(jnp.bfloat16)
        # ---- conv_last (no activation); rows are exactly view(-1,4*latent) -
        s_ref, w_ref, b_ref = refs[i:i + 3]
        out_ref = refs[i + 3]
        out_ref[...] = _sel_conv(s_ref, w_ref, act) + b_ref[...]
    return kernel


# ----------------------------- one-time weight packing ---------------------
def _make_selection_mats(n, h, w, k, stride, pad):
    """S[kh*k+kw, r_out, r_in] = 1 iff output row r_out=(n,oh,ow) reads input
    row r_in=(n,ih,iw) at kernel offset (kh,kw); all-zero rows = zero pad."""
    oh, ow = _conv_out_size(h, k, stride, pad), _conv_out_size(w, k, stride, pad)
    s = np.zeros((k * k, n * oh * ow, n * h * w), np.float32)
    for kh in range(k):
        for kw in range(k):
            p = kh * k + kw
            for b in range(n):
                for oy in range(oh):
                    iy = stride * oy + kh - pad
                    if not (0 <= iy < h):
                        continue
                    for ox in range(ow):
                        ix = stride * ox + kw - pad
                        if 0 <= ix < w:
                            s[p, (b * oh + oy) * ow + ox, (b * h + iy) * w + ix] = 1.0
    return s, oh, ow


def prepare_encoder(params, img=IMG, batch=NB):
    """One-time packing of PyTorch-layout weights into the fused kernel's
    layout (bf16 MXU operands, per-position weight slices, selection mats)."""
    prep = []
    # conv_first: consumed as a plain im2col matmul.
    w = params["conv_first_w"]                       # (D, 2*n_channels, 4, 4)
    cout, cin, k, _ = w.shape
    prep.append(jnp.asarray(w.reshape(cout, cin * k * k).T, jnp.bfloat16))
    prep.append(jnp.asarray(params["conv_first_b"].reshape(1, cout), jnp.float32))
    h = _conv_out_size(img, 4, 2, 1)
    # conv_list blocks (conv k=4 s=2 p=1 + BN).
    for (w, b, g, bt) in params["blocks"]:
        cout, cin, k, _ = w.shape
        sel, oh, _ = _make_selection_mats(batch, h, h, k, 2, 1)
        wp = jnp.transpose(w, (2, 3, 1, 0)).reshape(k * k, cin, cout)
        prep += [jnp.asarray(sel, jnp.bfloat16),
                 jnp.asarray(wp, jnp.bfloat16),
                 jnp.asarray(b.reshape(1, cout), jnp.float32),
                 jnp.asarray(g.reshape(1, cout), jnp.float32),
                 jnp.asarray(bt.reshape(1, cout), jnp.float32)]
        h = oh
    # conv_last (k=K1, s=1, p=0).
    w = params["conv_last_w"]
    cout, cin, k, _ = w.shape
    sel, oh, _ = _make_selection_mats(batch, h, h, k, 1, 0)
    assert oh == 1, "config must shrink the spatial size to 1x1 at conv_last"
    wp = jnp.transpose(w, (2, 3, 1, 0)).reshape(k * k, cin, cout)
    prep += [jnp.asarray(sel, jnp.bfloat16),
             jnp.asarray(wp, jnp.bfloat16),
             jnp.asarray(params["conv_last_b"].reshape(1, cout), jnp.float32)]
    return tuple(prep)


# ----------------------------- forward --------------------------------------
def _im2col_first(x, k, stride, pad):
    """Patch matrix (N*OH*OW, C*k*k) for the first conv only (its input is the
    external image; everything downstream stays inside the fused kernel)."""
    n, c, h, w = x.shape
    xp = jnp.pad(x, ((0, 0), (0, 0), (pad, pad), (pad, pad)))
    oh, ow = _conv_out_size(h, k, stride, pad), _conv_out_size(w, k, stride, pad)
    cols = [xp[:, :, kh:kh + stride * oh:stride, kw:kw + stride * ow:stride]
            for kh in range(k) for kw in range(k)]
    col = jnp.stack(cols, 0).reshape(k, k, n, c, oh, ow)
    return col.transpose(2, 4, 5, 3, 0, 1).reshape(n * oh * ow, c * k * k)


@jax.jit
def encoder_forward(x, prep):
    """Mirrors Encoder.forward(x) with ds == 1: returns (N, 4*latent_dim)."""
    # TODO(synk): the ds > 1 bilinear F.interpolate pre-scaling path is not
    # implemented (default ds=1 never takes it).
    col1 = _im2col_first(x, k=4, stride=2, pad=1).astype(jnp.bfloat16)
    kernel = _make_encoder_kernel(N_CLAYERS - 2)
    n_in = 1 + len(prep)
    return pl.pallas_call(
        kernel,
        out_shape=jax.ShapeDtypeStruct((x.shape[0], 4 * LATENT), jnp.float32),
        in_specs=[pl.BlockSpec(memory_space=pltpu.MemorySpace.VMEM)] * n_in,
        out_specs=pl.BlockSpec(memory_space=pltpu.MemorySpace.VMEM),
    )(col1, *prep)


# ----------------------------- params & pure-JAX reference ------------------
def init_params(key):
    std = 0.05
    keys = iter(jax.random.split(key, 16))

    def rnd(shape, scale=std):
        return scale * jax.random.normal(next(keys), shape, dtype=jnp.float32)

    p = {}
    p["conv_first_w"] = rnd((D, 2 * N_CHANNELS, 4, 4))
    p["conv_first_b"] = rnd((D,))
    blocks = []
    chan_in = D
    for _ in range(N_CLAYERS - 2):
        chan_out = chan_in * 2
        blocks.append((rnd((chan_out, chan_in, 4, 4)),       # conv weight
                       rnd((chan_out,)),                     # conv bias
                       1.0 + rnd((chan_out,)),               # bn gamma
                       rnd((chan_out,))))                    # bn beta
        chan_in = chan_out
    p["blocks"] = blocks
    chan_last = D * 2 ** (N_CLAYERS - 2)
    assert chan_last == chan_in
    p["conv_last_w"] = rnd((4 * LATENT, chan_last, K1, K1))
    p["conv_last_b"] = rnd((4 * LATENT,))
    return p


def encoder_reference(params, x):
    """Pure-JAX reference (lax.conv), using the same bf16-rounded weights."""
    def q(w):
        return w.astype(jnp.bfloat16).astype(jnp.float32)

    def conv(h, w, b, stride, pad):
        out = lax.conv_general_dilated(
            h, q(w), window_strides=(stride, stride),
            padding=((pad, pad), (pad, pad)),
            dimension_numbers=("NCHW", "OIHW", "NCHW"),
            precision=lax.Precision.HIGHEST)
        return out + b.reshape(1, -1, 1, 1)

    h = _leaky(conv(x, params["conv_first_w"], params["conv_first_b"], 2, 1))
    for (w, b, g, bt) in params["blocks"]:
        h = conv(h, w, b, 2, 1)
        mean = h.mean(axis=(0, 2, 3), keepdims=True)
        var = ((h - mean) ** 2).mean(axis=(0, 2, 3), keepdims=True)
        h = (h - mean) * lax.rsqrt(var + BN_EPS)
        h = h * g.reshape(1, -1, 1, 1) + bt.reshape(1, -1, 1, 1)
        h = _leaky(h)
    h = conv(h, params["conv_last_w"], params["conv_last_b"], 1, 0)
    return h.reshape(-1, 4 * LATENT)


# ----------------------------- main ------------------------------------------
if __name__ == "__main__":
    key = jax.random.PRNGKey(0)
    pkey, xkey = jax.random.split(key)

    params = init_params(pkey)
    prep = prepare_encoder(params)                # one-time weight packing
    # Encoder.forward expects 2*n_channels input channels.
    x = jax.random.normal(xkey, (NB, 2 * N_CHANNELS, IMG, IMG), dtype=jnp.float32)

    out = encoder_forward(x, prep)
    jax.block_until_ready(out)

    assert out.shape == (NB, 4 * LATENT), out.shape
    assert bool(jnp.all(jnp.isfinite(out)))

    ref = encoder_reference(params, x)
    max_err = float(jnp.max(jnp.abs(out - ref)))
    assert max_err < 0.1, f"mismatch vs reference: max abs err = {max_err}"

    print("KERNEL_OK")
</pallas_src>

<mosaic_0001>
module attributes {stable_mosaic.version = 11 : i64} {
  func.func @kernel(%arg0: memref<128x64xbf16, #tpu.memory_space<vmem>>, %arg1: memref<64x16xbf16, #tpu.memory_space<vmem>>, %arg2: memref<1x16xf32, #tpu.memory_space<vmem>>, %arg3: memref<16x32x128xbf16, #tpu.memory_space<vmem>>, %arg4: memref<16x16x32xbf16, #tpu.memory_space<vmem>>, %arg5: memref<1x32xf32, #tpu.memory_space<vmem>>, %arg6: memref<1x32xf32, #tpu.memory_space<vmem>>, %arg7: memref<1x32xf32, #tpu.memory_space<vmem>>, %arg8: memref<16x2x32xbf16, #tpu.memory_space<vmem>>, %arg9: memref<16x32x32xbf16, #tpu.memory_space<vmem>>, %arg10: memref<1x32xf32, #tpu.memory_space<vmem>>, %arg11: memref<2x32xf32, #tpu.memory_space<vmem>>) attributes {dimension_semantics = [], scalar_prefetch = 0 : i64, scratch_operands = 0 : i64, tpu.core_type = #tpu.core_type<tc>} {
    %c0 = arith.constant 0 : index
    %c0_0 = arith.constant 0 : index
    %0 = vector.load %arg0[%c0, %c0_0] : memref<128x64xbf16, #tpu.memory_space<vmem>>, vector<128x64xbf16>
    %c0_1 = arith.constant 0 : index
    %c0_2 = arith.constant 0 : index
    %1 = vector.load %arg1[%c0_1, %c0_2] : memref<64x16xbf16, #tpu.memory_space<vmem>>, vector<64x16xbf16>
    %cst = arith.constant dense<0.000000e+00> : vector<128x16xf32>
    %2 = tpu.matmul %0, %1, %cst {dimension_numbers = #tpu.dot_dimension_numbers<[1], [0], [0], [1], [0, 0, 1, 1], [], []>} : vector<128x64xbf16>, vector<64x16xbf16>, vector<128x16xf32> -> vector<128x16xf32>
    %c0_3 = arith.constant 0 : index
    %c0_4 = arith.constant 0 : index
    %3 = vector.load %arg2[%c0_3, %c0_4] : memref<1x16xf32, #tpu.memory_space<vmem>>, vector<1x16xf32>
    %4 = vector.broadcast %3 : vector<1x16xf32> to vector<128x16xf32>
    %5 = arith.addf %2, %4 : vector<128x16xf32>
    %cst_5 = arith.constant 0.000000e+00 : f32
    %6 = vector.broadcast %cst_5 : f32 to vector<128x16xf32>
    %7 = arith.cmpf ogt, %5, %6 : vector<128x16xf32>
    %cst_6 = arith.constant 2.000000e-01 : f32
    %8 = vector.broadcast %cst_6 : f32 to vector<128x16xf32>
    %9 = arith.mulf %8, %5 : vector<128x16xf32>
    %10 = arith.select %7, %5, %9 : vector<128x16xi1>, vector<128x16xf32>
    %11 = arith.truncf %10 : vector<128x16xf32> to vector<128x16xbf16>
    %cst_7 = arith.constant 0.000000e+00 : f32
    %12 = vector.broadcast %cst_7 : f32 to vector<32x32xf32>
    %c0_8 = arith.constant 0 : index
    %c0_9 = arith.constant 0 : index
    %c0_10 = arith.constant 0 : index
    %13 = vector.load %arg3[%c0_8, %c0_9, %c0_10] : memref<16x32x128xbf16, #tpu.memory_space<vmem>>, vector<1x32x128xbf16>
    %14 = vector.shape_cast %13 : vector<1x32x128xbf16> to vector<32x128xbf16>
    %cst_11 = arith.constant dense<0.000000e+00> : vector<32x16xf32>
    %15 = tpu.matmul %14, %11, %cst_11 {dimension_numbers = #tpu.dot_dimension_numbers<[1], [0], [0], [1], [0, 0, 1, 1], [], []>} : vector<32x128xbf16>, vector<128x16xbf16>, vector<32x16xf32> -> vector<32x16xf32>
    %16 = arith.truncf %15 : vector<32x16xf32> to vector<32x16xbf16>
    %c0_12 = arith.constant 0 : index
    %c0_13 = arith.constant 0 : index
    %c0_14 = arith.constant 0 : index
    %17 = vector.load %arg4[%c0_12, %c0_13, %c0_14] : memref<16x16x32xbf16, #tpu.memory_space<vmem>>, vector<1x16x32xbf16>
    %18 = vector.shape_cast %17 : vector<1x16x32xbf16> to vector<16x32xbf16>
    %cst_15 = arith.constant dense<0.000000e+00> : vector<32x32xf32>
    %19 = tpu.matmul %16, %18, %cst_15 {dimension_numbers = #tpu.dot_dimension_numbers<[1], [0], [0], [1], [0, 0, 1, 1], [], []>} : vector<32x16xbf16>, vector<16x32xbf16>, vector<32x32xf32> -> vector<32x32xf32>
    %20 = arith.addf %12, %19 : vector<32x32xf32>
    %c1 = arith.constant 1 : index
    %c0_16 = arith.constant 0 : index
    %c0_17 = arith.constant 0 : index
    %21 = vector.load %arg3[%c1, %c0_16, %c0_17] : memref<16x32x128xbf16, #tpu.memory_space<vmem>>, vector<1x32x128xbf16>
    %22 = vector.shape_cast %21 : vector<1x32x128xbf16> to vector<32x128xbf16>
    %cst_18 = arith.constant dense<0.000000e+00> : vector<32x16xf32>
    %23 = tpu.matmul %22, %11, %cst_18 {dimension_numbers = #tpu.dot_dimension_numbers<[1], [0], [0], [1], [0, 0, 1, 1], [], []>} : vector<32x128xbf16>, vector<128x16xbf16>, vector<32x16xf32> -> vector<32x16xf32>
    %24 = arith.truncf %23 : vector<32x16xf32> to vector<32x16xbf16>
    %c1_19 = arith.constant 1 : index
    %c0_20 = arith.constant 0 : index
    %c0_21 = arith.constant 0 : index
    %25 = vector.load %arg4[%c1_19, %c0_20, %c0_21] : memref<16x16x32xbf16, #tpu.memory_space<vmem>>, vector<1x16x32xbf16>
    %26 = vector.shape_cast %25 : vector<1x16x32xbf16> to vector<16x32xbf16>
    %cst_22 = arith.constant dense<0.000000e+00> : vector<32x32xf32>
    %27 = tpu.matmul %24, %26, %cst_22 {dimension_numbers = #tpu.dot_dimension_numbers<[1], [0], [0], [1], [0, 0, 1, 1], [], []>} : vector<32x16xbf16>, vector<16x32xbf16>, vector<32x32xf32> -> vector<32x32xf32>
    %28 = arith.addf %20, %27 : vector<32x32xf32>
    %c2 = arith.constant 2 : index
    %c0_23 = arith.constant 0 : index
    %c0_24 = arith.constant 0 : index
    %29 = vector.load %arg3[%c2, %c0_23, %c0_24] : memref<16x32x128xbf16, #tpu.memory_space<vmem>>, vector<1x32x128xbf16>
    %30 = vector.shape_cast %29 : vector<1x32x128xbf16> to vector<32x128xbf16>
    %cst_25 = arith.constant dense<0.000000e+00> : vector<32x16xf32>
    %31 = tpu.matmul %30, %11, %cst_25 {dimension_numbers = #tpu.dot_dimension_numbers<[1], [0], [0], [1], [0, 0, 1, 1], [], []>} : vector<32x128xbf16>, vector<128x16xbf16>, vector<32x16xf32> -> vector<32x16xf32>
    %32 = arith.truncf %31 : vector<32x16xf32> to vector<32x16xbf16>
    %c2_26 = arith.constant 2 : index
    %c0_27 = arith.constant 0 : index
    %c0_28 = arith.constant 0 : index
    %33 = vector.load %arg4[%c2_26, %c0_27, %c0_28] : memref<16x16x32xbf16, #tpu.memory_space<vmem>>, vector<1x16x32xbf16>
    %34 = vector.shape_cast %33 : vector<1x16x32xbf16> to vector<16x32xbf16>
    %cst_29 = arith.constant dense<0.000000e+00> : vector<32x32xf32>
    %35 = tpu.matmul %32, %34, %cst_29 {dimension_numbers = #tpu.dot_dimension_numbers<[1], [0], [0], [1], [0, 0, 1, 1], [], []>} : vector<32x16xbf16>, vector<16x32xbf16>, vector<32x32xf32> -> vector<32x32xf32>
    %36 = arith.addf %28, %35 : vector<32x32xf32>
    %c3 = arith.constant 3 : index
    %c0_30 = arith.constant 0 : index
    %c0_31 = arith.constant 0 : index
    %37 = vector.load %arg3[%c3, %c0_30, %c0_31] : memref<16x32x128xbf16, #tpu.memory_space<vmem>>, vector<1x32x128xbf16>
    %38 = vector.shape_cast %37 : vector<1x32x128xbf16> to vector<32x128xbf16>
    %cst_32 = arith.constant dense<0.000000e+00> : vector<32x16xf32>
    %39 = tpu.matmul %38, %11, %cst_32 {dimension_numbers = #tpu.dot_dimension_numbers<[1], [0], [0], [1], [0, 0, 1, 1], [], []>} : vector<32x128xbf16>, vector<128x16xbf16>, vector<32x16xf32> -> vector<32x16xf32>
    %40 = arith.truncf %39 : vector<32x16xf32> to vector<32x16xbf16>
    %c3_33 = arith.constant 3 : index
    %c0_34 = arith.constant 0 : index
    %c0_35 = arith.constant 0 : index
    %41 = vector.load %arg4[%c3_33, %c0_34, %c0_35] : memref<16x16x32xbf16, #tpu.memory_space<vmem>>, vector<1x16x32xbf16>
    %42 = vector.shape_cast %41 : vector<1x16x32xbf16> to vector<16x32xbf16>
    %cst_36 = arith.constant dense<0.000000e+00> : vector<32x32xf32>
    %43 = tpu.matmul %40, %42, %cst_36 {dimension_numbers = #tpu.dot_dimension_numbers<[1], [0], [0], [1], [0, 0, 1, 1], [], []>} : vector<32x16xbf16>, vector<16x32xbf16>, vector<32x32xf32> -> vector<32x32xf32>
    %44 = arith.addf %36, %43 : vector<32x32xf32>
    %c4 = arith.constant 4 : index
    %c0_37 = arith.constant 0 : index
    %c0_38 = arith.constant 0 : index
    %45 = vector.load %arg3[%c4, %c0_37, %c0_38] : memref<16x32x128xbf16, #tpu.memory_space<vmem>>, vector<1x32x128xbf16>
    %46 = vector.shape_cast %45 : vector<1x32x128xbf16> to vector<32x128xbf16>
    %cst_39 = arith.constant dense<0.000000e+00> : vector<32x16xf32>
    %47 = tpu.matmul %46, %11, %cst_39 {dimension_numbers = #tpu.dot_dimension_numbers<[1], [0], [0], [1], [0, 0, 1, 1], [], []>} : vector<32x128xbf16>, vector<128x16xbf16>, vector<32x16xf32> -> vector<32x16xf32>
    %48 = arith.truncf %47 : vector<32x16xf32> to vector<32x16xbf16>
    %c4_40 = arith.constant 4 : index
    %c0_41 = arith.constant 0 : index
    %c0_42 = arith.constant 0 : index
    %49 = vector.load %arg4[%c4_40, %c0_41, %c0_42] : memref<16x16x32xbf16, #tpu.memory_space<vmem>>, vector<1x16x32xbf16>
    %50 = vector.shape_cast %49 : vector<1x16x32xbf16> to vector<16x32xbf16>
    %cst_43 = arith.constant dense<0.000000e+00> : vector<32x32xf32>
    %51 = tpu.matmul %48, %50, %cst_43 {dimension_numbers = #tpu.dot_dimension_numbers<[1], [0], [0], [1], [0, 0, 1, 1], [], []>} : vector<32x16xbf16>, vector<16x32xbf16>, vector<32x32xf32> -> vector<32x32xf32>
    %52 = arith.addf %44, %51 : vector<32x32xf32>
    %c5 = arith.constant 5 : index
    %c0_44 = arith.constant 0 : index
    %c0_45 = arith.constant 0 : index
    %53 = vector.load %arg3[%c5, %c0_44, %c0_45] : memref<16x32x128xbf16, #tpu.memory_space<vmem>>, vector<1x32x128xbf16>
    %54 = vector.shape_cast %53 : vector<1x32x128xbf16> to vector<32x128xbf16>
    %cst_46 = arith.constant dense<0.000000e+00> : vector<32x16xf32>
    %55 = tpu.matmul %54, %11, %cst_46 {dimension_numbers = #tpu.dot_dimension_numbers<[1], [0], [0], [1], [0, 0, 1, 1], [], []>} : vector<32x128xbf16>, vector<128x16xbf16>, vector<32x16xf32> -> vector<32x16xf32>
    %56 = arith.truncf %55 : vector<32x16xf32> to vector<32x16xbf16>
    %c5_47 = arith.constant 5 : index
    %c0_48 = arith.constant 0 : index
    %c0_49 = arith.constant 0 : index
    %57 = vector.load %arg4[%c5_47, %c0_48, %c0_49] : memref<16x16x32xbf16, #tpu.memory_space<vmem>>, vector<1x16x32xbf16>
    %58 = vector.shape_cast %57 : vector<1x16x32xbf16> to vector<16x32xbf16>
    %cst_50 = arith.constant dense<0.000000e+00> : vector<32x32xf32>
    %59 = tpu.matmul %56, %58, %cst_50 {dimension_numbers = #tpu.dot_dimension_numbers<[1], [0], [0], [1], [0, 0, 1, 1], [], []>} : vector<32x16xbf16>, vector<16x32xbf16>, vector<32x32xf32> -> vector<32x32xf32>
    %60 = arith.addf %52, %59 : vector<32x32xf32>
    %c6 = arith.constant 6 : index
    %c0_51 = arith.constant 0 : index
    %c0_52 = arith.constant 0 : index
    %61 = vector.load %arg3[%c6, %c0_51, %c0_52] : memref<16x32x128xbf16, #tpu.memory_space<vmem>>, vector<1x32x128xbf16>
    %62 = vector.shape_cast %61 : vector<1x32x128xbf16> to vector<32x128xbf16>
    %cst_53 = arith.constant dense<0.000000e+00> : vector<32x16xf32>
    %63 = tpu.matmul %62, %11, %cst_53 {dimension_numbers = #tpu.dot_dimension_numbers<[1], [0], [0], [1], [0, 0, 1, 1], [], []>} : vector<32x128xbf16>, vector<128x16xbf16>, vector<32x16xf32> -> vector<32x16xf32>
    %64 = arith.truncf %63 : vector<32x16xf32> to vector<32x16xbf16>
    %c6_54 = arith.constant 6 : index
    %c0_55 = arith.constant 0 : index
    %c0_56 = arith.constant 0 : index
    %65 = vector.load %arg4[%c6_54, %c0_55, %c0_56] : memref<16x16x32xbf16, #tpu.memory_space<vmem>>, vector<1x16x32xbf16>
    %66 = vector.shape_cast %65 : vector<1x16x32xbf16> to vector<16x32xbf16>
    %cst_57 = arith.constant dense<0.000000e+00> : vector<32x32xf32>
    %67 = tpu.matmul %64, %66, %cst_57 {dimension_numbers = #tpu.dot_dimension_numbers<[1], [0], [0], [1], [0, 0, 1, 1], [], []>} : vector<32x16xbf16>, vector<16x32xbf16>, vector<32x32xf32> -> vector<32x32xf32>
    %68 = arith.addf %60, %67 : vector<32x32xf32>
    %c7 = arith.constant 7 : index
    %c0_58 = arith.constant 0 : index
    %c0_59 = arith.constant 0 : index
    %69 = vector.load %arg3[%c7, %c0_58, %c0_59] : memref<16x32x128xbf16, #tpu.memory_space<vmem>>, vector<1x32x128xbf16>
    %70 = vector.shape_cast %69 : vector<1x32x128xbf16> to vector<32x128xbf16>
    %cst_60 = arith.constant dense<0.000000e+00> : vector<32x16xf32>
    %71 = tpu.matmul %70, %11, %cst_60 {dimension_numbers = #tpu.dot_dimension_numbers<[1], [0], [0], [1], [0, 0, 1, 1], [], []>} : vector<32x128xbf16>, vector<128x16xbf16>, vector<32x16xf32> -> vector<32x16xf32>
    %72 = arith.truncf %71 : vector<32x16xf32> to vector<32x16xbf16>
    %c7_61 = arith.constant 7 : index
    %c0_62 = arith.constant 0 : index
    %c0_63 = arith.constant 0 : index
    %73 = vector.load %arg4[%c7_61, %c0_62, %c0_63] : memref<16x16x32xbf16, #tpu.memory_space<vmem>>, vector<1x16x32xbf16>
    %74 = vector.shape_cast %73 : vector<1x16x32xbf16> to vector<16x32xbf16>
    %cst_64 = arith.constant dense<0.000000e+00> : vector<32x32xf32>
    %75 = tpu.matmul %72, %74, %cst_64 {dimension_numbers = #tpu.dot_dimension_numbers<[1], [0], [0], [1], [0, 0, 1, 1], [], []>} : vector<32x16xbf16>, vector<16x32xbf16>, vector<32x32xf32> -> vector<32x32xf32>
    %76 = arith.addf %68, %75 : vector<32x32xf32>
    %c8 = arith.constant 8 : index
    %c0_65 = arith.constant 0 : index
    %c0_66 = arith.constant 0 : index
    %77 = vector.load %arg3[%c8, %c0_65, %c0_66] : memref<16x32x128xbf16, #tpu.memory_space<vmem>>, vector<1x32x128xbf16>
    %78 = vector.shape_cast %77 : vector<1x32x128xbf16> to vector<32x128xbf16>
    %cst_67 = arith.constant dense<0.000000e+00> : vector<32x16xf32>
    %79 = tpu.matmul %78, %11, %cst_67 {dimension_numbers = #tpu.dot_dimension_numbers<[1], [0], [0], [1], [0, 0, 1, 1], [], []>} : vector<32x128xbf16>, vector<128x16xbf16>, vector<32x16xf32> -> vector<32x16xf32>
    %80 = arith.truncf %79 : vector<32x16xf32> to vector<32x16xbf16>
    %c8_68 = arith.constant 8 : index
    %c0_69 = arith.constant 0 : index
    %c0_70 = arith.constant 0 : index
    %81 = vector.load %arg4[%c8_68, %c0_69, %c0_70] : memref<16x16x32xbf16, #tpu.memory_space<vmem>>, vector<1x16x32xbf16>
    %82 = vector.shape_cast %81 : vector<1x16x32xbf16> to vector<16x32xbf16>
    %cst_71 = arith.constant dense<0.000000e+00> : vector<32x32xf32>
    %83 = tpu.matmul %80, %82, %cst_71 {dimension_numbers = #tpu.dot_dimension_numbers<[1], [0], [0], [1], [0, 0, 1, 1], [], []>} : vector<32x16xbf16>, vector<16x32xbf16>, vector<32x32xf32> -> vector<32x32xf32>
    %84 = arith.addf %76, %83 : vector<32x32xf32>
    %c9 = arith.constant 9 : index
    %c0_72 = arith.constant 0 : index
    %c0_73 = arith.constant 0 : index
    %85 = vector.load %arg3[%c9, %c0_72, %c0_73] : memref<16x32x128xbf16, #tpu.memory_space<vmem>>, vector<1x32x128xbf16>
    %86 = vector.shape_cast %85 : vector<1x32x128xbf16> to vector<32x128xbf16>
    %cst_74 = arith.constant dense<0.000000e+00> : vector<32x16xf32>
    %87 = tpu.matmul %86, %11, %cst_74 {dimension_numbers = #tpu.dot_dimension_numbers<[1], [0], [0], [1], [0, 0, 1, 1], [], []>} : vector<32x128xbf16>, vector<128x16xbf16>, vector<32x16xf32> -> vector<32x16xf32>
    %88 = arith.truncf %87 : vector<32x16xf32> to vector<32x16xbf16>
    %c9_75 = arith.constant 9 : index
    %c0_76 = arith.constant 0 : index
    %c0_77 = arith.constant 0 : index
    %89 = vector.load %arg4[%c9_75, %c0_76, %c0_77] : memref<16x16x32xbf16, #tpu.memory_space<vmem>>, vector<1x16x32xbf16>
    %90 = vector.shape_cast %89 : vector<1x16x32xbf16> to vector<16x32xbf16>
    %cst_78 = arith.constant dense<0.000000e+00> : vector<32x32xf32>
    %91 = tpu.matmul %88, %90, %cst_78 {dimension_numbers = #tpu.dot_dimension_numbers<[1], [0], [0], [1], [0, 0, 1, 1], [], []>} : vector<32x16xbf16>, vector<16x32xbf16>, vector<32x32xf32> -> vector<32x32xf32>
    %92 = arith.addf %84, %91 : vector<32x32xf32>
    %c10 = arith.constant 10 : index
    %c0_79 = arith.constant 0 : index
    %c0_80 = arith.constant 0 : index
    %93 = vector.load %arg3[%c10, %c0_79, %c0_80] : memref<16x32x128xbf16, #tpu.memory_space<vmem>>, vector<1x32x128xbf16>
    %94 = vector.shape_cast %93 : vector<1x32x128xbf16> to vector<32x128xbf16>
    %cst_81 = arith.constant dense<0.000000e+00> : vector<32x16xf32>
    %95 = tpu.matmul %94, %11, %cst_81 {dimension_numbers = #tpu.dot_dimension_numbers<[1], [0], [0], [1], [0, 0, 1, 1], [], []>} : vector<32x128xbf16>, vector<128x16xbf16>, vector<32x16xf32> -> vector<32x16xf32>
    %96 = arith.truncf %95 : vector<32x16xf32> to vector<32x16xbf16>
    %c10_82 = arith.constant 10 : index
    %c0_83 = arith.constant 0 : index
    %c0_84 = arith.constant 0 : index
    %97 = vector.load %arg4[%c10_82, %c0_83, %c0_84] : memref<16x16x32xbf16, #tpu.memory_space<vmem>>, vector<1x16x32xbf16>
    %98 = vector.shape_cast %97 : vector<1x16x32xbf16> to vector<16x32xbf16>
    %cst_85 = arith.constant dense<0.000000e+00> : vector<32x32xf32>
    %99 = tpu.matmul %96, %98, %cst_85 {dimension_numbers = #tpu.dot_dimension_numbers<[1], [0], [0], [1], [0, 0, 1, 1], [], []>} : vector<32x16xbf16>, vector<16x32xbf16>, vector<32x32xf32> -> vector<32x32xf32>
    %100 = arith.addf %92, %99 : vector<32x32xf32>
    %c11 = arith.constant 11 : index
    %c0_86 = arith.constant 0 : index
    %c0_87 = arith.constant 0 : index
    %101 = vector.load %arg3[%c11, %c0_86, %c0_87] : memref<16x32x128xbf16, #tpu.memory_space<vmem>>, vector<1x32x128xbf16>
    %102 = vector.shape_cast %101 : vector<1x32x128xbf16> to vector<32x128xbf16>
    %cst_88 = arith.constant dense<0.000000e+00> : vector<32x16xf32>
    %103 = tpu.matmul %102, %11, %cst_88 {dimension_numbers = #tpu.dot_dimension_numbers<[1], [0], [0], [1], [0, 0, 1, 1], [], []>} : vector<32x128xbf16>, vector<128x16xbf16>, vector<32x16xf32> -> vector<32x16xf32>
    %104 = arith.truncf %103 : vector<32x16xf32> to vector<32x16xbf16>
    %c11_89 = arith.constant 11 : index
    %c0_90 = arith.constant 0 : index
    %c0_91 = arith.constant 0 : index
    %105 = vector.load %arg4[%c11_89, %c0_90, %c0_91] : memref<16x16x32xbf16, #tpu.memory_space<vmem>>, vector<1x16x32xbf16>
    %106 = vector.shape_cast %105 : vector<1x16x32xbf16> to vector<16x32xbf16>
    %cst_92 = arith.constant dense<0.000000e+00> : vector<32x32xf32>
    %107 = tpu.matmul %104, %106, %cst_92 {dimension_numbers = #tpu.dot_dimension_numbers<[1], [0], [0], [1], [0, 0, 1, 1], [], []>} : vector<32x16xbf16>, vector<16x32xbf16>, vector<32x32xf32> -> vector<32x32xf32>
    %108 = arith.addf %100, %107 : vector<32x32xf32>
    %c12 = arith.constant 12 : index
    %c0_93 = arith.constant 0 : index
    %c0_94 = arith.constant 0 : index
    %109 = vector.load %arg3[%c12, %c0_93, %c0_94] : memref<16x32x128xbf16, #tpu.memory_space<vmem>>, vector<1x32x128xbf16>
    %110 = vector.shape_cast %109 : vector<1x32x128xbf16> to vector<32x128xbf16>
    %cst_95 = arith.constant dense<0.000000e+00> : vector<32x16xf32>
    %111 = tpu.matmul %110, %11, %cst_95 {dimension_numbers = #tpu.dot_dimension_numbers<[1], [0], [0], [1], [0, 0, 1, 1], [], []>} : vector<32x128xbf16>, vector<128x16xbf16>, vector<32x16xf32> -> vector<32x16xf32>
    %112 = arith.truncf %111 : vector<32x16xf32> to vector<32x16xbf16>
    %c12_96 = arith.constant 12 : index
    %c0_97 = arith.constant 0 : index
    %c0_98 = arith.constant 0 : index
    %113 = vector.load %arg4[%c12_96, %c0_97, %c0_98] : memref<16x16x32xbf16, #tpu.memory_space<vmem>>, vector<1x16x32xbf16>
    %114 = vector.shape_cast %113 : vector<1x16x32xbf16> to vector<16x32xbf16>
    %cst_99 = arith.constant dense<0.000000e+00> : vector<32x32xf32>
    %115 = tpu.matmul %112, %114, %cst_99 {dimension_numbers = #tpu.dot_dimension_numbers<[1], [0], [0], [1], [0, 0, 1, 1], [], []>} : vector<32x16xbf16>, vector<16x32xbf16>, vector<32x32xf32> -> vector<32x32xf32>
    %116 = arith.addf %108, %115 : vector<32x32xf32>
    %c13 = arith.constant 13 : index
    %c0_100 = arith.constant 0 : index
    %c0_101 = arith.constant 0 : index
    %117 = vector.load %arg3[%c13, %c0_100, %c0_101] : memref<16x32x128xbf16, #tpu.memory_space<vmem>>, vector<1x32x128xbf16>
    %118 = vector.shape_cast %117 : vector<1x32x128xbf16> to vector<32x128xbf16>
    %cst_102 = arith.constant dense<0.000000e+00> : vector<32x16xf32>
    %119 = tpu.matmul %118, %11, %cst_102 {dimension_numbers = #tpu.dot_dimension_numbers<[1], [0], [0], [1], [0, 0, 1, 1], [], []>} : vector<32x128xbf16>, vector<128x16xbf16>, vector<32x16xf32> -> vector<32x16xf32>
    %120 = arith.truncf %119 : vector<32x16xf32> to vector<32x16xbf16>
    %c13_103 = arith.constant 13 : index
    %c0_104 = arith.constant 0 : index
    %c0_105 = arith.constant 0 : index
    %121 = vector.load %arg4[%c13_103, %c0_104, %c0_105] : memref<16x16x32xbf16, #tpu.memory_space<vmem>>, vector<1x16x32xbf16>
    %122 = vector.shape_cast %121 : vector<1x16x32xbf16> to vector<16x32xbf16>
    %cst_106 = arith.constant dense<0.000000e+00> : vector<32x32xf32>
    %123 = tpu.matmul %120, %122, %cst_106 {dimension_numbers = #tpu.dot_dimension_numbers<[1], [0], [0], [1], [0, 0, 1, 1], [], []>} : vector<32x16xbf16>, vector<16x32xbf16>, vector<32x32xf32> -> vector<32x32xf32>
    %124 = arith.addf %116, %123 : vector<32x32xf32>
    %c14 = arith.constant 14 : index
    %c0_107 = arith.constant 0 : index
    %c0_108 = arith.constant 0 : index
    %125 = vector.load %arg3[%c14, %c0_107, %c0_108] : memref<16x32x128xbf16, #tpu.memory_space<vmem>>, vector<1x32x128xbf16>
    %126 = vector.shape_cast %125 : vector<1x32x128xbf16> to vector<32x128xbf16>
    %cst_109 = arith.constant dense<0.000000e+00> : vector<32x16xf32>
    %127 = tpu.matmul %126, %11, %cst_109 {dimension_numbers = #tpu.dot_dimension_numbers<[1], [0], [0], [1], [0, 0, 1, 1], [], []>} : vector<32x128xbf16>, vector<128x16xbf16>, vector<32x16xf32> -> vector<32x16xf32>
    %128 = arith.truncf %127 : vector<32x16xf32> to vector<32x16xbf16>
    %c14_110 = arith.constant 14 : index
    %c0_111 = arith.constant 0 : index
    %c0_112 = arith.constant 0 : index
    %129 = vector.load %arg4[%c14_110, %c0_111, %c0_112] : memref<16x16x32xbf16, #tpu.memory_space<vmem>>, vector<1x16x32xbf16>
    %130 = vector.shape_cast %129 : vector<1x16x32xbf16> to vector<16x32xbf16>
    %cst_113 = arith.constant dense<0.000000e+00> : vector<32x32xf32>
    %131 = tpu.matmul %128, %130, %cst_113 {dimension_numbers = #tpu.dot_dimension_numbers<[1], [0], [0], [1], [0, 0, 1, 1], [], []>} : vector<32x16xbf16>, vector<16x32xbf16>, vector<32x32xf32> -> vector<32x32xf32>
    %132 = arith.addf %124, %131 : vector<32x32xf32>
    %c15 = arith.constant 15 : index
    %c0_114 = arith.constant 0 : index
    %c0_115 = arith.constant 0 : index
    %133 = vector.load %arg3[%c15, %c0_114, %c0_115] : memref<16x32x128xbf16, #tpu.memory_space<vmem>>, vector<1x32x128xbf16>
    %134 = vector.shape_cast %133 : vector<1x32x128xbf16> to vector<32x128xbf16>
    %cst_116 = arith.constant dense<0.000000e+00> : vector<32x16xf32>
    %135 = tpu.matmul %134, %11, %cst_116 {dimension_numbers = #tpu.dot_dimension_numbers<[1], [0], [0], [1], [0, 0, 1, 1], [], []>} : vector<32x128xbf16>, vector<128x16xbf16>, vector<32x16xf32> -> vector<32x16xf32>
    %136 = arith.truncf %135 : vector<32x16xf32> to vector<32x16xbf16>
    %c15_117 = arith.constant 15 : index
    %c0_118 = arith.constant 0 : index
    %c0_119 = arith.constant 0 : index
    %137 = vector.load %arg4[%c15_117, %c0_118, %c0_119] : memref<16x16x32xbf16, #tpu.memory_space<vmem>>, vector<1x16x32xbf16>
    %138 = vector.shape_cast %137 : vector<1x16x32xbf16> to vector<16x32xbf16>
    %cst_120 = arith.constant dense<0.000000e+00> : vector<32x32xf32>
    %139 = tpu.matmul %136, %138, %cst_120 {dimension_numbers = #tpu.dot_dimension_numbers<[1], [0], [0], [1], [0, 0, 1, 1], [], []>} : vector<32x16xbf16>, vector<16x32xbf16>, vector<32x32xf32> -> vector<32x32xf32>
    %140 = arith.addf %132, %139 : vector<32x32xf32>
    %c0_121 = arith.constant 0 : index
    %c0_122 = arith.constant 0 : index
    %141 = vector.load %arg5[%c0_121, %c0_122] : memref<1x32xf32, #tpu.memory_space<vmem>>, vector<1x32xf32>
    %142 = vector.broadcast %141 : vector<1x32xf32> to vector<32x32xf32>
    %143 = arith.addf %140, %142 : vector<32x32xf32>
    %cst_123 = arith.constant 3.125000e-02 : f32
    %144 = vector.broadcast %cst_123 : f32 to vector<1x32xf32>
    %cst_124 = arith.constant dense<0.000000e+00> : vector<1x32xf32>
    %145 = tpu.matmul %144, %143, %cst_124 {dimension_numbers = #tpu.dot_dimension_numbers<[1], [0], [0], [1], [0, 0, 1, 1], [], []>} : vector<1x32xf32>, vector<32x32xf32>, vector<1x32xf32> -> vector<1x32xf32>
    %146 = vector.broadcast %145 : vector<1x32xf32> to vector<32x32xf32>
    %147 = arith.subf %143, %146 : vector<32x32xf32>
    %148 = arith.mulf %147, %147 : vector<32x32xf32>
    %cst_125 = arith.constant 3.125000e-02 : f32
    %149 = vector.broadcast %cst_125 : f32 to vector<1x32xf32>
    %cst_126 = arith.constant dense<0.000000e+00> : vector<1x32xf32>
    %150 = tpu.matmul %149, %148, %cst_126 {dimension_numbers = #tpu.dot_dimension_numbers<[1], [0], [0], [1], [0, 0, 1, 1], [], []>} : vector<1x32xf32>, vector<32x32xf32>, vector<1x32xf32> -> vector<1x32xf32>
    %cst_127 = arith.constant 9.99999974E-6 : f32
    %151 = vector.broadcast %cst_127 : f32 to vector<1x32xf32>
    %152 = arith.addf %150, %151 : vector<1x32xf32>
    %153 = math.rsqrt %152 : vector<1x32xf32>
    %154 = vector.broadcast %153 : vector<1x32xf32> to vector<32x32xf32>
    %155 = arith.mulf %147, %154 : vector<32x32xf32>
    %c0_128 = arith.constant 0 : index
    %c0_129 = arith.constant 0 : index
    %156 = vector.load %arg6[%c0_128, %c0_129] : memref<1x32xf32, #tpu.memory_space<vmem>>, vector<1x32xf32>
    %157 = vector.broadcast %156 : vector<1x32xf32> to vector<32x32xf32>
    %158 = arith.mulf %155, %157 : vector<32x32xf32>
    %c0_130 = arith.constant 0 : index
    %c0_131 = arith.constant 0 : index
    %159 = vector.load %arg7[%c0_130, %c0_131] : memref<1x32xf32, #tpu.memory_space<vmem>>, vector<1x32xf32>
    %160 = vector.broadcast %159 : vector<1x32xf32> to vector<32x32xf32>
    %161 = arith.addf %158, %160 : vector<32x32xf32>
    %cst_132 = arith.constant 0.000000e+00 : f32
    %162 = vector.broadcast %cst_132 : f32 to vector<32x32xf32>
    %163 = arith.cmpf ogt, %161, %162 : vector<32x32xf32>
    %cst_133 = arith.constant 2.000000e-01 : f32
    %164 = vector.broadcast %cst_133 : f32 to vector<32x32xf32>
    %165 = arith.mulf %164, %161 : vector<32x32xf32>
    %166 = arith.select %163, %161, %165 : vector<32x32xi1>, vector<32x32xf32>
    %167 = arith.truncf %166 : vector<32x32xf32> to vector<32x32xbf16>
    %cst_134 = arith.constant 0.000000e+00 : f32
    %168 = vector.broadcast %cst_134 : f32 to vector<2x32xf32>
    %c0_135 = arith.constant 0 : index
    %c0_136 = arith.constant 0 : index
    %c0_137 = arith.constant 0 : index
    %169 = vector.load %arg8[%c0_135, %c0_136, %c0_137] : memref<16x2x32xbf16, #tpu.memory_space<vmem>>, vector<1x2x32xbf16>
    %170 = vector.shape_cast %169 : vector<1x2x32xbf16> to vector<2x32xbf16>
    %cst_138 = arith.constant dense<0.000000e+00> : vector<2x32xf32>
    %171 = tpu.matmul %170, %167, %cst_138 {dimension_numbers = #tpu.dot_dimension_numbers<[1], [0], [0], [1], [0, 0, 1, 1], [], []>} : vector<2x32xbf16>, vector<32x32xbf16>, vector<2x32xf32> -> vector<2x32xf32>
    %172 = arith.truncf %171 : vector<2x32xf32> to vector<2x32xbf16>
    %c0_139 = arith.constant 0 : index
    %c0_140 = arith.constant 0 : index
    %c0_141 = arith.constant 0 : index
    %173 = vector.load %arg9[%c0_139, %c0_140, %c0_141] : memref<16x32x32xbf16, #tpu.memory_space<vmem>>, vector<1x32x32xbf16>
    %174 = vector.shape_cast %173 : vector<1x32x32xbf16> to vector<32x32xbf16>
    %cst_142 = arith.constant dense<0.000000e+00> : vector<2x32xf32>
    %175 = tpu.matmul %172, %174, %cst_142 {dimension_numbers = #tpu.dot_dimension_numbers<[1], [0], [0], [1], [0, 0, 1, 1], [], []>} : vector<2x32xbf16>, vector<32x32xbf16>, vector<2x32xf32> -> vector<2x32xf32>
    %176 = arith.addf %168, %175 : vector<2x32xf32>
    %c1_143 = arith.constant 1 : index
    %c0_144 = arith.constant 0 : index
    %c0_145 = arith.constant 0 : index
    %177 = vector.load %arg8[%c1_143, %c0_144, %c0_145] : memref<16x2x32xbf16, #tpu.memory_space<vmem>>, vector<1x2x32xbf16>
    %178 = vector.shape_cast %177 : vector<1x2x32xbf16> to vector<2x32xbf16>
    %cst_146 = arith.constant dense<0.000000e+00> : vector<2x32xf32>
    %179 = tpu.matmul %178, %167, %cst_146 {dimension_numbers = #tpu.dot_dimension_numbers<[1], [0], [0], [1], [0, 0, 1, 1], [], []>} : vector<2x32xbf16>, vector<32x32xbf16>, vector<2x32xf32> -> vector<2x32xf32>
    %180 = arith.truncf %179 : vector<2x32xf32> to vector<2x32xbf16>
    %c1_147 = arith.constant 1 : index
    %c0_148 = arith.constant 0 : index
    %c0_149 = arith.constant 0 : index
    %181 = vector.load %arg9[%c1_147, %c0_148, %c0_149] : memref<16x32x32xbf16, #tpu.memory_space<vmem>>, vector<1x32x32xbf16>
    %182 = vector.shape_cast %181 : vector<1x32x32xbf16> to vector<32x32xbf16>
    %cst_150 = arith.constant dense<0.000000e+00> : vector<2x32xf32>
    %183 = tpu.matmul %180, %182, %cst_150 {dimension_numbers = #tpu.dot_dimension_numbers<[1], [0], [0], [1], [0, 0, 1, 1], [], []>} : vector<2x32xbf16>, vector<32x32xbf16>, vector<2x32xf32> -> vector<2x32xf32>
    %184 = arith.addf %176, %183 : vector<2x32xf32>
    %c2_151 = arith.constant 2 : index
    %c0_152 = arith.constant 0 : index
    %c0_153 = arith.constant 0 : index
    %185 = vector.load %arg8[%c2_151, %c0_152, %c0_153] : memref<16x2x32xbf16, #tpu.memory_space<vmem>>, vector<1x2x32xbf16>
    %186 = vector.shape_cast %185 : vector<1x2x32xbf16> to vector<2x32xbf16>
    %cst_154 = arith.constant dense<0.000000e+00> : vector<2x32xf32>
    %187 = tpu.matmul %186, %167, %cst_154 {dimension_numbers = #tpu.dot_dimension_numbers<[1], [0], [0], [1], [0, 0, 1, 1], [], []>} : vector<2x32xbf16>, vector<32x32xbf16>, vector<2x32xf32> -> vector<2x32xf32>
    %188 = arith.truncf %187 : vector<2x32xf32> to vector<2x32xbf16>
    %c2_155 = arith.constant 2 : index
    %c0_156 = arith.constant 0 : index
    %c0_157 = arith.constant 0 : index
    %189 = vector.load %arg9[%c2_155, %c0_156, %c0_157] : memref<16x32x32xbf16, #tpu.memory_space<vmem>>, vector<1x32x32xbf16>
    %190 = vector.shape_cast %189 : vector<1x32x32xbf16> to vector<32x32xbf16>
    %cst_158 = arith.constant dense<0.000000e+00> : vector<2x32xf32>
    %191 = tpu.matmul %188, %190, %cst_158 {dimension_numbers = #tpu.dot_dimension_numbers<[1], [0], [0], [1], [0, 0, 1, 1], [], []>} : vector<2x32xbf16>, vector<32x32xbf16>, vector<2x32xf32> -> vector<2x32xf32>
    %192 = arith.addf %184, %191 : vector<2x32xf32>
    %c3_159 = arith.constant 3 : index
    %c0_160 = arith.constant 0 : index
    %c0_161 = arith.constant 0 : index
    %193 = vector.load %arg8[%c3_159, %c0_160, %c0_161] : memref<16x2x32xbf16, #tpu.memory_space<vmem>>, vector<1x2x32xbf16>
    %194 = vector.shape_cast %193 : vector<1x2x32xbf16> to vector<2x32xbf16>
    %cst_162 = arith.constant dense<0.000000e+00> : vector<2x32xf32>
    %195 = tpu.matmul %194, %167, %cst_162 {dimension_numbers = #tpu.dot_dimension_numbers<[1], [0], [0], [1], [0, 0, 1, 1], [], []>} : vector<2x32xbf16>, vector<32x32xbf16>, vector<2x32xf32> -> vector<2x32xf32>
    %196 = arith.truncf %195 : vector<2x32xf32> to vector<2x32xbf16>
    %c3_163 = arith.constant 3 : index
    %c0_164 = arith.constant 0 : index
    %c0_165 = arith.constant 0 : index
    %197 = vector.load %arg9[%c3_163, %c0_164, %c0_165] : memref<16x32x32xbf16, #tpu.memory_space<vmem>>, vector<1x32x32xbf16>
    %198 = vector.shape_cast %197 : vector<1x32x32xbf16> to vector<32x32xbf16>
    %cst_166 = arith.constant dense<0.000000e+00> : vector<2x32xf32>
    %199 = tpu.matmul %196, %198, %cst_166 {dimension_numbers = #tpu.dot_dimension_numbers<[1], [0], [0], [1], [0, 0, 1, 1], [], []>} : vector<2x32xbf16>, vector<32x32xbf16>, vector<2x32xf32> -> vector<2x32xf32>
    %200 = arith.addf %192, %199 : vector<2x32xf32>
    %c4_167 = arith.constant 4 : index
    %c0_168 = arith.constant 0 : index
    %c0_169 = arith.constant 0 : index
    %201 = vector.load %arg8[%c4_167, %c0_168, %c0_169] : memref<16x2x32xbf16, #tpu.memory_space<vmem>>, vector<1x2x32xbf16>
    %202 = vector.shape_cast %201 : vector<1x2x32xbf16> to vector<2x32xbf16>
    %cst_170 = arith.constant dense<0.000000e+00> : vector<2x32xf32>
    %203 = tpu.matmul %202, %167, %cst_170 {dimension_numbers = #tpu.dot_dimension_numbers<[1], [0], [0], [1], [0, 0, 1, 1], [], []>} : vector<2x32xbf16>, vector<32x32xbf16>, vector<2x32xf32> -> vector<2x32xf32>
    %204 = arith.truncf %203 : vector<2x32xf32> to vector<2x32xbf16>
    %c4_171 = arith.constant 4 : index
    %c0_172 = arith.constant 0 : index
    %c0_173 = arith.constant 0 : index
    %205 = vector.load %arg9[%c4_171, %c0_172, %c0_173] : memref<16x32x32xbf16, #tpu.memory_space<vmem>>, vector<1x32x32xbf16>
    %206 = vector.shape_cast %205 : vector<1x32x32xbf16> to vector<32x32xbf16>
    %cst_174 = arith.constant dense<0.000000e+00> : vector<2x32xf32>
    %207 = tpu.matmul %204, %206, %cst_174 {dimension_numbers = #tpu.dot_dimension_numbers<[1], [0], [0], [1], [0, 0, 1, 1], [], []>} : vector<2x32xbf16>, vector<32x32xbf16>, vector<2x32xf32> -> vector<2x32xf32>
    %208 = arith.addf %200, %207 : vector<2x32xf32>
    %c5_175 = arith.constant 5 : index
    %c0_176 = arith.constant 0 : index
    %c0_177 = arith.constant 0 : index
    %209 = vector.load %arg8[%c5_175, %c0_176, %c0_177] : memref<16x2x32xbf16, #tpu.memory_space<vmem>>, vector<1x2x32xbf16>
    %210 = vector.shape_cast %209 : vector<1x2x32xbf16> to vector<2x32xbf16>
    %cst_178 = arith.constant dense<0.000000e+00> : vector<2x32xf32>
    %211 = tpu.matmul %210, %167, %cst_178 {dimension_numbers = #tpu.dot_dimension_numbers<[1], [0], [0], [1], [0, 0, 1, 1], [], []>} : vector<2x32xbf16>, vector<32x32xbf16>, vector<2x32xf32> -> vector<2x32xf32>
    %212 = arith.truncf %211 : vector<2x32xf32> to vector<2x32xbf16>
    %c5_179 = arith.constant 5 : index
    %c0_180 = arith.constant 0 : index
    %c0_181 = arith.constant 0 : index
    %213 = vector.load %arg9[%c5_179, %c0_180, %c0_181] : memref<16x32x32xbf16, #tpu.memory_space<vmem>>, vector<1x32x32xbf16>
    %214 = vector.shape_cast %213 : vector<1x32x32xbf16> to vector<32x32xbf16>
    %cst_182 = arith.constant dense<0.000000e+00> : vector<2x32xf32>
    %215 = tpu.matmul %212, %214, %cst_182 {dimension_numbers = #tpu.dot_dimension_numbers<[1], [0], [0], [1], [0, 0, 1, 1], [], []>} : vector<2x32xbf16>, vector<32x32xbf16>, vector<2x32xf32> -> vector<2x32xf32>
    %216 = arith.addf %208, %215 : vector<2x32xf32>
    %c6_183 = arith.constant 6 : index
    %c0_184 = arith.constant 0 : index
    %c0_185 = arith.constant 0 : index
    %217 = vector.load %arg8[%c6_183, %c0_184, %c0_185] : memref<16x2x32xbf16, #tpu.memory_space<vmem>>, vector<1x2x32xbf16>
    %218 = vector.shape_cast %217 : vector<1x2x32xbf16> to vector<2x32xbf16>
    %cst_186 = arith.constant dense<0.000000e+00> : vector<2x32xf32>
    %219 = tpu.matmul %218, %167, %cst_186 {dimension_numbers = #tpu.dot_dimension_numbers<[1], [0], [0], [1], [0, 0, 1, 1], [], []>} : vector<2x32xbf16>, vector<32x32xbf16>, vector<2x32xf32> -> vector<2x32xf32>
    %220 = arith.truncf %219 : vector<2x32xf32> to vector<2x32xbf16>
    %c6_187 = arith.constant 6 : index
    %c0_188 = arith.constant 0 : index
    %c0_189 = arith.constant 0 : index
    %221 = vector.load %arg9[%c6_187, %c0_188, %c0_189] : memref<16x32x32xbf16, #tpu.memory_space<vmem>>, vector<1x32x32xbf16>
    %222 = vector.shape_cast %221 : vector<1x32x32xbf16> to vector<32x32xbf16>
    %cst_190 = arith.constant dense<0.000000e+00> : vector<2x32xf32>
    %223 = tpu.matmul %220, %222, %cst_190 {dimension_numbers = #tpu.dot_dimension_numbers<[1], [0], [0], [1], [0, 0, 1, 1], [], []>} : vector<2x32xbf16>, vector<32x32xbf16>, vector<2x32xf32> -> vector<2x32xf32>
    %224 = arith.addf %216, %223 : vector<2x32xf32>
    %c7_191 = arith.constant 7 : index
    %c0_192 = arith.constant 0 : index
    %c0_193 = arith.constant 0 : index
    %225 = vector.load %arg8[%c7_191, %c0_192, %c0_193] : memref<16x2x32xbf16, #tpu.memory_space<vmem>>, vector<1x2x32xbf16>
    %226 = vector.shape_cast %225 : vector<1x2x32xbf16> to vector<2x32xbf16>
    %cst_194 = arith.constant dense<0.000000e+00> : vector<2x32xf32>
    %227 = tpu.matmul %226, %167, %cst_194 {dimension_numbers = #tpu.dot_dimension_numbers<[1], [0], [0], [1], [0, 0, 1, 1], [], []>} : vector<2x32xbf16>, vector<32x32xbf16>, vector<2x32xf32> -> vector<2x32xf32>
    %228 = arith.truncf %227 : vector<2x32xf32> to vector<2x32xbf16>
    %c7_195 = arith.constant 7 : index
    %c0_196 = arith.constant 0 : index
    %c0_197 = arith.constant 0 : index
    %229 = vector.load %arg9[%c7_195, %c0_196, %c0_197] : memref<16x32x32xbf16, #tpu.memory_space<vmem>>, vector<1x32x32xbf16>
    %230 = vector.shape_cast %229 : vector<1x32x32xbf16> to vector<32x32xbf16>
    %cst_198 = arith.constant dense<0.000000e+00> : vector<2x32xf32>
    %231 = tpu.matmul %228, %230, %cst_198 {dimension_numbers = #tpu.dot_dimension_numbers<[1], [0], [0], [1], [0, 0, 1, 1], [], []>} : vector<2x32xbf16>, vector<32x32xbf16>, vector<2x32xf32> -> vector<2x32xf32>
    %232 = arith.addf %224, %231 : vector<2x32xf32>
    %c8_199 = arith.constant 8 : index
    %c0_200 = arith.constant 0 : index
    %c0_201 = arith.constant 0 : index
    %233 = vector.load %arg8[%c8_199, %c0_200, %c0_201] : memref<16x2x32xbf16, #tpu.memory_space<vmem>>, vector<1x2x32xbf16>
    %234 = vector.shape_cast %233 : vector<1x2x32xbf16> to vector<2x32xbf16>
    %cst_202 = arith.constant dense<0.000000e+00> : vector<2x32xf32>
    %235 = tpu.matmul %234, %167, %cst_202 {dimension_numbers = #tpu.dot_dimension_numbers<[1], [0], [0], [1], [0, 0, 1, 1], [], []>} : vector<2x32xbf16>, vector<32x32xbf16>, vector<2x32xf32> -> vector<2x32xf32>
    %236 = arith.truncf %235 : vector<2x32xf32> to vector<2x32xbf16>
    %c8_203 = arith.constant 8 : index
    %c0_204 = arith.constant 0 : index
    %c0_205 = arith.constant 0 : index
    %237 = vector.load %arg9[%c8_203, %c0_204, %c0_205] : memref<16x32x32xbf16, #tpu.memory_space<vmem>>, vector<1x32x32xbf16>
    %238 = vector.shape_cast %237 : vector<1x32x32xbf16> to vector<32x32xbf16>
    %cst_206 = arith.constant dense<0.000000e+00> : vector<2x32xf32>
    %239 = tpu.matmul %236, %238, %cst_206 {dimension_numbers = #tpu.dot_dimension_numbers<[1], [0], [0], [1], [0, 0, 1, 1], [], []>} : vector<2x32xbf16>, vector<32x32xbf16>, vector<2x32xf32> -> vector<2x32xf32>
    %240 = arith.addf %232, %239 : vector<2x32xf32>
    %c9_207 = arith.constant 9 : index
    %c0_208 = arith.constant 0 : index
    %c0_209 = arith.constant 0 : index
    %241 = vector.load %arg8[%c9_207, %c0_208, %c0_209] : memref<16x2x32xbf16, #tpu.memory_space<vmem>>, vector<1x2x32xbf16>
    %242 = vector.shape_cast %241 : vector<1x2x32xbf16> to vector<2x32xbf16>
    %cst_210 = arith.constant dense<0.000000e+00> : vector<2x32xf32>
    %243 = tpu.matmul %242, %167, %cst_210 {dimension_numbers = #tpu.dot_dimension_numbers<[1], [0], [0], [1], [0, 0, 1, 1], [], []>} : vector<2x32xbf16>, vector<32x32xbf16>, vector<2x32xf32> -> vector<2x32xf32>
    %244 = arith.truncf %243 : vector<2x32xf32> to vector<2x32xbf16>
    %c9_211 = arith.constant 9 : index
    %c0_212 = arith.constant 0 : index
    %c0_213 = arith.constant 0 : index
    %245 = vector.load %arg9[%c9_211, %c0_212, %c0_213] : memref<16x32x32xbf16, #tpu.memory_space<vmem>>, vector<1x32x32xbf16>
    %246 = vector.shape_cast %245 : vector<1x32x32xbf16> to vector<32x32xbf16>
    %cst_214 = arith.constant dense<0.000000e+00> : vector<2x32xf32>
    %247 = tpu.matmul %244, %246, %cst_214 {dimension_numbers = #tpu.dot_dimension_numbers<[1], [0], [0], [1], [0, 0, 1, 1], [], []>} : vector<2x32xbf16>, vector<32x32xbf16>, vector<2x32xf32> -> vector<2x32xf32>
    %248 = arith.addf %240, %247 : vector<2x32xf32>
    %c10_215 = arith.constant 10 : index
    %c0_216 = arith.constant 0 : index
    %c0_217 = arith.constant 0 : index
    %249 = vector.load %arg8[%c10_215, %c0_216, %c0_217] : memref<16x2x32xbf16, #tpu.memory_space<vmem>>, vector<1x2x32xbf16>
    %250 = vector.shape_cast %249 : vector<1x2x32xbf16> to vector<2x32xbf16>
    %cst_218 = arith.constant dense<0.000000e+00> : vector<2x32xf32>
    %251 = tpu.matmul %250, %167, %cst_218 {dimension_numbers = #tpu.dot_dimension_numbers<[1], [0], [0], [1], [0, 0, 1, 1], [], []>} : vector<2x32xbf16>, vector<32x32xbf16>, vector<2x32xf32> -> vector<2x32xf32>
    %252 = arith.truncf %251 : vector<2x32xf32> to vector<2x32xbf16>
    %c10_219 = arith.constant 10 : index
    %c0_220 = arith.constant 0 : index
    %c0_221 = arith.constant 0 : index
    %253 = vector.load %arg9[%c10_219, %c0_220, %c0_221] : memref<16x32x32xbf16, #tpu.memory_space<vmem>>, vector<1x32x32xbf16>
    %254 = vector.shape_cast %253 : vector<1x32x32xbf16> to vector<32x32xbf16>
    %cst_222 = arith.constant dense<0.000000e+00> : vector<2x32xf32>
    %255 = tpu.matmul %252, %254, %cst_222 {dimension_numbers = #tpu.dot_dimension_numbers<[1], [0], [0], [1], [0, 0, 1, 1], [], []>} : vector<2x32xbf16>, vector<32x32xbf16>, vector<2x32xf32> -> vector<2x32xf32>
    %256 = arith.addf %248, %255 : vector<2x32xf32>
    %c11_223 = arith.constant 11 : index
    %c0_224 = arith.constant 0 : index
    %c0_225 = arith.constant 0 : index
    %257 = vector.load %arg8[%c11_223, %c0_224, %c0_225] : memref<16x2x32xbf16, #tpu.memory_space<vmem>>, vector<1x2x32xbf16>
    %258 = vector.shape_cast %257 : vector<1x2x32xbf16> to vector<2x32xbf16>
    %cst_226 = arith.constant dense<0.000000e+00> : vector<2x32xf32>
    %259 = tpu.matmul %258, %167, %cst_226 {dimension_numbers = #tpu.dot_dimension_numbers<[1], [0], [0], [1], [0, 0, 1, 1], [], []>} : vector<2x32xbf16>, vector<32x32xbf16>, vector<2x32xf32> -> vector<2x32xf32>
    %260 = arith.truncf %259 : vector<2x32xf32> to vector<2x32xbf16>
    %c11_227 = arith.constant 11 : index
    %c0_228 = arith.constant 0 : index
    %c0_229 = arith.constant 0 : index
    %261 = vector.load %arg9[%c11_227, %c0_228, %c0_229] : memref<16x32x32xbf16, #tpu.memory_space<vmem>>, vector<1x32x32xbf16>
    %262 = vector.shape_cast %261 : vector<1x32x32xbf16> to vector<32x32xbf16>
    %cst_230 = arith.constant dense<0.000000e+00> : vector<2x32xf32>
    %263 = tpu.matmul %260, %262, %cst_230 {dimension_numbers = #tpu.dot_dimension_numbers<[1], [0], [0], [1], [0, 0, 1, 1], [], []>} : vector<2x32xbf16>, vector<32x32xbf16>, vector<2x32xf32> -> vector<2x32xf32>
    %264 = arith.addf %256, %263 : vector<2x32xf32>
    %c12_231 = arith.constant 12 : index
    %c0_232 = arith.constant 0 : index
    %c0_233 = arith.constant 0 : index
    %265 = vector.load %arg8[%c12_231, %c0_232, %c0_233] : memref<16x2x32xbf16, #tpu.memory_space<vmem>>, vector<1x2x32xbf16>
    %266 = vector.shape_cast %265 : vector<1x2x32xbf16> to vector<2x32xbf16>
    %cst_234 = arith.constant dense<0.000000e+00> : vector<2x32xf32>
    %267 = tpu.matmul %266, %167, %cst_234 {dimension_numbers = #tpu.dot_dimension_numbers<[1], [0], [0], [1], [0, 0, 1, 1], [], []>} : vector<2x32xbf16>, vector<32x32xbf16>, vector<2x32xf32> -> vector<2x32xf32>
    %268 = arith.truncf %267 : vector<2x32xf32> to vector<2x32xbf16>
    %c12_235 = arith.constant 12 : index
    %c0_236 = arith.constant 0 : index
    %c0_237 = arith.constant 0 : index
    %269 = vector.load %arg9[%c12_235, %c0_236, %c0_237] : memref<16x32x32xbf16, #tpu.memory_space<vmem>>, vector<1x32x32xbf16>
    %270 = vector.shape_cast %269 : vector<1x32x32xbf16> to vector<32x32xbf16>
    %cst_238 = arith.constant dense<0.000000e+00> : vector<2x32xf32>
    %271 = tpu.matmul %268, %270, %cst_238 {dimension_numbers = #tpu.dot_dimension_numbers<[1], [0], [0], [1], [0, 0, 1, 1], [], []>} : vector<2x32xbf16>, vector<32x32xbf16>, vector<2x32xf32> -> vector<2x32xf32>
    %272 = arith.addf %264, %271 : vector<2x32xf32>
    %c13_239 = arith.constant 13 : index
    %c0_240 = arith.constant 0 : index
    %c0_241 = arith.constant 0 : index
    %273 = vector.load %arg8[%c13_239, %c0_240, %c0_241] : memref<16x2x32xbf16, #tpu.memory_space<vmem>>, vector<1x2x32xbf16>
    %274 = vector.shape_cast %273 : vector<1x2x32xbf16> to vector<2x32xbf16>
    %cst_242 = arith.constant dense<0.000000e+00> : vector<2x32xf32>
    %275 = tpu.matmul %274, %167, %cst_242 {dimension_numbers = #tpu.dot_dimension_numbers<[1], [0], [0], [1], [0, 0, 1, 1], [], []>} : vector<2x32xbf16>, vector<32x32xbf16>, vector<2x32xf32> -> vector<2x32xf32>
    %276 = arith.truncf %275 : vector<2x32xf32> to vector<2x32xbf16>
    %c13_243 = arith.constant 13 : index
    %c0_244 = arith.constant 0 : index
    %c0_245 = arith.constant 0 : index
    %277 = vector.load %arg9[%c13_243, %c0_244, %c0_245] : memref<16x32x32xbf16, #tpu.memory_space<vmem>>, vector<1x32x32xbf16>
    %278 = vector.shape_cast %277 : vector<1x32x32xbf16> to vector<32x32xbf16>
    %cst_246 = arith.constant dense<0.000000e+00> : vector<2x32xf32>
    %279 = tpu.matmul %276, %278, %cst_246 {dimension_numbers = #tpu.dot_dimension_numbers<[1], [0], [0], [1], [0, 0, 1, 1], [], []>} : vector<2x32xbf16>, vector<32x32xbf16>, vector<2x32xf32> -> vector<2x32xf32>
    %280 = arith.addf %272, %279 : vector<2x32xf32>
    %c14_247 = arith.constant 14 : index
    %c0_248 = arith.constant 0 : index
    %c0_249 = arith.constant 0 : index
    %281 = vector.load %arg8[%c14_247, %c0_248, %c0_249] : memref<16x2x32xbf16, #tpu.memory_space<vmem>>, vector<1x2x32xbf16>
    %282 = vector.shape_cast %281 : vector<1x2x32xbf16> to vector<2x32xbf16>
    %cst_250 = arith.constant dense<0.000000e+00> : vector<2x32xf32>
    %283 = tpu.matmul %282, %167, %cst_250 {dimension_numbers = #tpu.dot_dimension_numbers<[1], [0], [0], [1], [0, 0, 1, 1], [], []>} : vector<2x32xbf16>, vector<32x32xbf16>, vector<2x32xf32> -> vector<2x32xf32>
    %284 = arith.truncf %283 : vector<2x32xf32> to vector<2x32xbf16>
    %c14_251 = arith.constant 14 : index
    %c0_252 = arith.constant 0 : index
    %c0_253 = arith.constant 0 : index
    %285 = vector.load %arg9[%c14_251, %c0_252, %c0_253] : memref<16x32x32xbf16, #tpu.memory_space<vmem>>, vector<1x32x32xbf16>
    %286 = vector.shape_cast %285 : vector<1x32x32xbf16> to vector<32x32xbf16>
    %cst_254 = arith.constant dense<0.000000e+00> : vector<2x32xf32>
    %287 = tpu.matmul %284, %286, %cst_254 {dimension_numbers = #tpu.dot_dimension_numbers<[1], [0], [0], [1], [0, 0, 1, 1], [], []>} : vector<2x32xbf16>, vector<32x32xbf16>, vector<2x32xf32> -> vector<2x32xf32>
    %288 = arith.addf %280, %287 : vector<2x32xf32>
    %c15_255 = arith.constant 15 : index
    %c0_256 = arith.constant 0 : index
    %c0_257 = arith.constant 0 : index
    %289 = vector.load %arg8[%c15_255, %c0_256, %c0_257] : memref<16x2x32xbf16, #tpu.memory_space<vmem>>, vector<1x2x32xbf16>
    %290 = vector.shape_cast %289 : vector<1x2x32xbf16> to vector<2x32xbf16>
    %cst_258 = arith.constant dense<0.000000e+00> : vector<2x32xf32>
    %291 = tpu.matmul %290, %167, %cst_258 {dimension_numbers = #tpu.dot_dimension_numbers<[1], [0], [0], [1], [0, 0, 1, 1], [], []>} : vector<2x32xbf16>, vector<32x32xbf16>, vector<2x32xf32> -> vector<2x32xf32>
    %292 = arith.truncf %291 : vector<2x32xf32> to vector<2x32xbf16>
    %c15_259 = arith.constant 15 : index
    %c0_260 = arith.constant 0 : index
    %c0_261 = arith.constant 0 : index
    %293 = vector.load %arg9[%c15_259, %c0_260, %c0_261] : memref<16x32x32xbf16, #tpu.memory_space<vmem>>, vector<1x32x32xbf16>
    %294 = vector.shape_cast %293 : vector<1x32x32xbf16> to vector<32x32xbf16>
    %cst_262 = arith.constant dense<0.000000e+00> : vector<2x32xf32>
    %295 = tpu.matmul %292, %294, %cst_262 {dimension_numbers = #tpu.dot_dimension_numbers<[1], [0], [0], [1], [0, 0, 1, 1], [], []>} : vector<2x32xbf16>, vector<32x32xbf16>, vector<2x32xf32> -> vector<2x32xf32>
    %296 = arith.addf %288, %295 : vector<2x32xf32>
    %c0_263 = arith.constant 0 : index
    %c0_264 = arith.constant 0 : index
    %297 = vector.load %arg10[%c0_263, %c0_264] : memref<1x32xf32, #tpu.memory_space<vmem>>, vector<1x32xf32>
    %298 = vector.broadcast %297 : vector<1x32xf32> to vector<2x32xf32>
    %299 = arith.addf %296, %298 : vector<2x32xf32>
    %c0_265 = arith.constant 0 : index
    %c0_266 = arith.constant 0 : index
    %300 = vector.load %arg11[%c0_265, %c0_266] : memref<2x32xf32, #tpu.memory_space<vmem>>, vector<2x32xf32>
    tpu.vector_store %arg11[%c0_265, %c0_266], %299 {strides = array<i32>} : memref<2x32xf32, #tpu.memory_space<vmem>>, vector<2x32xf32>,
    return
  }
}

</mosaic_0001>

<llo_original>
// kernel: encoder_forward.1
$region0: #{encoder_forward.1}
  #allocation0 [shape = 'u32[]', space=smem, size = 0x4, offset = 0x4, fixed_abs, tag = 'smem constant byte address 0x4 - core index']
  #allocation1 [shape = 'u32[144,128]{1,0:T(1,128)}', space=vmem, size = 0x12000, scoped, tag = 'internal scratch']
  %s0 = inlined_call_operand.vmem [shape: bf16[128,64], index: 0, kind: input, shape index: {}]
  %s1 = inlined_call_operand.vmem [shape: bf16[64,16], index: 1, kind: input, shape index: {}]
  %s2 = inlined_call_operand.vmem [shape: f32[1,16], index: 2, kind: input, shape index: {}]
  %s3 = inlined_call_operand.vmem [shape: bf16[16,32,128], index: 3, kind: input, shape index: {}]
  %s4 = inlined_call_operand.vmem [shape: bf16[16,16,32], index: 4, kind: input, shape index: {}]
  %s5 = inlined_call_operand.vmem [shape: f32[1,32], index: 5, kind: input, shape index: {}]
  %s6 = inlined_call_operand.vmem [shape: f32[1,32], index: 6, kind: input, shape index: {}]
  %s7 = inlined_call_operand.vmem [shape: f32[1,32], index: 7, kind: input, shape index: {}]
  %s8 = inlined_call_operand.vmem [shape: bf16[16,2,32], index: 8, kind: input, shape index: {}]
  %s9 = inlined_call_operand.vmem [shape: bf16[16,32,32], index: 9, kind: input, shape index: {}]
  %s10 = inlined_call_operand.vmem [shape: f32[1,32], index: 10, kind: input, shape index: {}]
  %s11 = inlined_call_operand.hbm [shape: f32[2,32], index: 11, kind: output, shape index: {}]
  %s12 = sld [smem:[#allocation0]]
  $region54: #{encoder_forward.1} parent=0
    _
  %s14 = ssub.s32 1, %s12
  %s15 = scalar_select 0, %s14, %s12
  $region1: #{encoder_forward.1} parent=0
    #allocation2 [shape = 'u8[1024]{0}', space=vmem, size = 0x400, scoped, tag = 'output window, operand 0, single buffered']
    #allocation3 [shape = 's32[1]{0}', space=sflag, size = 0x4, scoped, tag = 'scoped memory for encoder_forward.1']
    %16 = vsyncpa [#allocation3], 0
    // Predicated region
    $region2: #{encoder_forward.1} parent=1 // pred_check
      _
    $region3: #{encoder_forward.1} parent=1 // pred_check_branch
      %18 = sbr.rel (0) target = $region5
    $region4: #{encoder_forward.1} parent=1 // pred_region
      _
    $region5: #{encoder_forward.1} parent=1 // pred_fallthru
      _
    // Predicated region
    $region6: #{encoder_forward.1} parent=1 // pred_check
      _
    $region7: #{encoder_forward.1} parent=1 // pred_check_branch
      %20 = sbr.rel (0) target = $region9
    $region8: #{encoder_forward.1} parent=1 // pred_region
      _
    $region9: #{encoder_forward.1} parent=1 // pred_fallthru
      _
    // Predicated region
    $region10: #{encoder_forward.1} parent=1 // pred_check
      _
    $region11: #{encoder_forward.1} parent=1 // pred_check_branch
      %22 = sbr.rel (0) target = $region13
    $region12: #{encoder_forward.1} parent=1 // pred_region
      _
    $region13: #{encoder_forward.1} parent=1 // pred_fallthru
      _
    // Predicated region
    $region14: #{encoder_forward.1} parent=1 // pred_check
      _
    $region15: #{encoder_forward.1} parent=1 // pred_check_branch
      %24 = sbr.rel (0) target = $region17
    $region16: #{encoder_forward.1} parent=1 // pred_region
      _
    $region17: #{encoder_forward.1} parent=1 // pred_fallthru
      _
    // Predicated region
    $region18: #{encoder_forward.1} parent=1 // pred_check
      _
    $region19: #{encoder_forward.1} parent=1 // pred_check_branch
      %26 = sbr.rel (0) target = $region21
    $region20: #{encoder_forward.1} parent=1 // pred_region
      _
    $region21: #{encoder_forward.1} parent=1 // pred_fallthru
      _
    // Predicated region
    $region22: #{encoder_forward.1} parent=1 // pred_check
      _
    $region23: #{encoder_forward.1} parent=1 // pred_check_branch
      %28 = sbr.rel (0) target = $region25
    $region24: #{encoder_forward.1} parent=1 // pred_region
      _
    $region25: #{encoder_forward.1} parent=1 // pred_fallthru
      _
    // Predicated region
    $region26: #{encoder_forward.1} parent=1 // pred_check
      _
    $region27: #{encoder_forward.1} parent=1 // pred_check_branch
      %30 = sbr.rel (0) target = $region29
    $region28: #{encoder_forward.1} parent=1 // pred_region
      _
    $region29: #{encoder_forward.1} parent=1 // pred_fallthru
      _
    // Predicated region
    $region30: #{encoder_forward.1} parent=1 // pred_check
      _
    $region31: #{encoder_forward.1} parent=1 // pred_check_branch
      %32 = sbr.rel (0) target = $region33
    $region32: #{encoder_forward.1} parent=1 // pred_region
      _
    $region33: #{encoder_forward.1} parent=1 // pred_fallthru
      _
    // Predicated region
    $region34: #{encoder_forward.1} parent=1 // pred_check
      _
    $region35: #{encoder_forward.1} parent=1 // pred_check_branch
      %34 = sbr.rel (0) target = $region37
    $region36: #{encoder_forward.1} parent=1 // pred_region
      _
    $region37: #{encoder_forward.1} parent=1 // pred_fallthru
      _
    // Predicated region
    $region38: #{encoder_forward.1} parent=1 // pred_check
      _
    $region39: #{encoder_forward.1} parent=1 // pred_check_branch
      %36 = sbr.rel (0) target = $region41
    $region40: #{encoder_forward.1} parent=1 // pred_region
      _
    $region41: #{encoder_forward.1} parent=1 // pred_fallthru
      _
    // Predicated region
    $region42: #{encoder_forward.1} parent=1 // pred_check
      _
    $region43: #{encoder_forward.1} parent=1 // pred_check_branch
      %38 = sbr.rel (0) target = $region45
    $region44: #{encoder_forward.1} parent=1 // pred_region
      _
    $region45: #{encoder_forward.1} parent=1 // pred_fallthru
      _
    %v40 = vld [vmem:[%s0] sm:$0xf]
    %v41 = vld [vmem:[%s0 + $0x4] sm:$0xf]
    %v42 = vld [vmem:[%s0 + $0x8] sm:$0xf]
    %v43 = vld [vmem:[%s0 + $0xc] sm:$0xf]
    %v44 = vld [vmem:[%s0 + $0x10] sm:$0xf]
    %v45 = vld [vmem:[%s0 + $0x14] sm:$0xf]
    %v46 = vld [vmem:[%s0 + $0x18] sm:$0xf]
    %v47 = vld [vmem:[%s0 + $0x1c] sm:$0xf]
    %v48 = vld [vmem:[%s0 + $0x20] sm:$0xf]
    %v49 = vld [vmem:[%s0 + $0x24] sm:$0xf]
    %v50 = vld [vmem:[%s0 + $0x28] sm:$0xf]
    %v51 = vld [vmem:[%s0 + $0x2c] sm:$0xf]
    %v52 = vld [vmem:[%s0 + $0x30] sm:$0xf]
    %v53 = vld [vmem:[%s0 + $0x34] sm:$0xf]
    %v54 = vld [vmem:[%s0 + $0x38] sm:$0xf]
    %v55 = vld [vmem:[%s0 + $0x3c] sm:$0xf]
    %v56 = vld [vmem:[%s1] sm:$0xf]
    %v57 = vld [vmem:[%s1 + $0x4] sm:$0xf]
    %v58 = vld [vmem:[%s1 + $0x8] sm:$0xf]
    %v59 = vld [vmem:[%s1 + $0xc] sm:$0xf]
    %v60 = vld [vmem:[%s1 + $0x10] sm:$0xf]
    %v61 = vld [vmem:[%s1 + $0x14] sm:$0xf]
    %v62 = vld [vmem:[%s1 + $0x18] sm:$0xf]
    %v63 = vld [vmem:[%s1 + $0x1c] sm:$0xf]
    %v64 = vld [vmem:[%s2] sm:$0x1]
    %v66 = vlaneseq
    %v67 = vshrl.u32 %v66, 7
    %v68 = vsub.s32 0, %v67
    %v69 = vrot.slane %v64, %v68
    %v87 = vunpack.c.l.b16 %v40
    %v88 = vunpack.c.l.b16 %v41
    %v89 = vunpack.c.l.b16 %v42
    %v90 = vunpack.c.l.b16 %v43
    %v91 = vunpack.c.l.b16 %v44
    %v92 = vunpack.c.l.b16 %v45
    %v93 = vunpack.c.l.b16 %v46
    %v94 = vunpack.c.l.b16 %v47
    %v95 = vunpack.c.l.b16 %v48
    %v96 = vunpack.c.l.b16 %v49
    %v97 = vunpack.c.l.b16 %v50
    %v98 = vunpack.c.l.b16 %v51
    %v99 = vunpack.c.l.b16 %v52
    %v100 = vunpack.c.l.b16 %v53
    %v101 = vunpack.c.l.b16 %v54
    %v102 = vunpack.c.l.b16 %v55
    %v103 = vpack.c.b16 %v88, %v87
    %v104 = vpack.c.b16 %v90, %v89
    %v105 = vpack.c.b16 %v92, %v91
    %v106 = vpack.c.b16 %v94, %v93
    %v107 = vpack.c.b16 %v96, %v95
    %v108 = vpack.c.b16 %v98, %v97
    %v109 = vpack.c.b16 %v100, %v99
    %v110 = vpack.c.b16 %v102, %v101
    %v119 = vunpack.c.l.b16 %v56
    %v120 = vunpack.c.l.b16 %v57
    %v121 = vunpack.c.l.b16 %v58
    %v122 = vunpack.c.l.b16 %v59
    %v123 = vunpack.c.l.b16 %v60
    %v124 = vunpack.c.l.b16 %v61
    %v125 = vunpack.c.l.b16 %v62
    %v126 = vunpack.c.l.b16 %v63
    %v127 = vpack.c.b16 %v120, %v119
    %v128 = vpack.c.b16 %v122, %v121
    %v129 = vpack.c.b16 %v124, %v123
    %v130 = vpack.c.b16 %v126, %v125
    %vm135 = vcmask 523264
    %v137 = vsel %vm135, %v103, 0
    %v140 = vsel %vm135, %v104, 0
    %v143 = vsel %vm135, %v105, 0
    %v146 = vsel %vm135, %v106, 0
    %v149 = vsel %vm135, %v107, 0
    %v152 = vsel %vm135, %v108, 0
    %v155 = vsel %vm135, %v109, 0
    %v158 = vsel %vm135, %v110, 0
    %160 = vmatprep.subr.bf16.mxu0 0
    %161 = vmatpush1.bf16.msra.mxu0 0
    %162 = vmatprep.subr.bf16.mxu0 0
    %163 = vmatpush1.bf16.msra.mxu0 0
    %164 = vmatprep.subr.bf16.mxu0 0
    %165 = vmatpush1.bf16.msra.mxu0 0
    %166 = vmatprep.subr.bf16.mxu0 0
    %167 = vmatpush1.bf16.msra.mxu0 0
    %168 = vmatprep.subr.bf16.mxu0 0
    %169 = vmatpush1.bf16.msra.mxu0 %v130
    %170 = vmatprep.subr.bf16.mxu0 0
    %171 = vmatpush1.bf16.msra.mxu0 %v129
    %172 = vmatprep.subr.bf16.mxu0 0
    %173 = vmatpush1.bf16.msra.mxu0 %v128
    %174 = vmatprep.subr.bf16.mxu0 0
    %175 = vmatpush1.bf16.msra.mxu0 %v127
    %176 = vmatprep.subr.bf16.mxu0 0
    %177 = vmatpush2.bf16.msra.mxu0 0
    %178 = vmatprep.subr.bf16.mxu0 0
    %179 = vmatpush2.bf16.msra.mxu0 0
    %180 = vmatprep.subr.bf16.mxu0 0
    %181 = vmatpush2.bf16.msra.mxu0 0
    %182 = vmatprep.subr.bf16.mxu0 0
    %183 = vmatpush2.bf16.msra.mxu0 0
    %184 = vmatprep.subr.bf16.mxu0 0
    %185 = vmatpush2.bf16.msra.mxu0 0
    %186 = vmatprep.subr.bf16.mxu0 0
    %187 = vmatpush2.bf16.msra.mxu0 0
    %188 = vmatprep.subr.bf16.mxu0 0
    %189 = vmatpush2.bf16.msra.mxu0 0
    %190 = vmatprep.subr.bf16.mxu0 0
    %191 = vmatpush2.bf16.msra.mxu0 0
    %192 = vmatprep.mubr.bf16.mxu0 0
    %193 = vmatmul.mubr.bf16.gmra.mxu0 %v137
    %v194 = vpop.f32.mrf.mxu0
    %v195 = vadd.f32 %v69, %v194
    %v196 = vpop.f32.mrf.mxu0
    %v197 = vpop.f32.mrf.mxu0
    %v198 = vadd.f32 %v69, %v197
    %v199 = vpop.f32.mrf.mxu0
    %200 = vmatprep.mubr.bf16.mxu0 0
    %201 = vmatmul.mubr.bf16.gmra.mxu0 %v140
    %v202 = vpop.f32.mrf.mxu0
    %v203 = vadd.f32 %v69, %v202
    %v204 = vpop.f32.mrf.mxu0
    %v205 = vpop.f32.mrf.mxu0
    %v206 = vadd.f32 %v69, %v205
    %v207 = vpop.f32.mrf.mxu0
    %208 = vmatprep.mubr.bf16.mxu0 0
    %209 = vmatmul.mubr.bf16.gmra.mxu0 %v143
    %v210 = vpop.f32.mrf.mxu0
    %v211 = vadd.f32 %v69, %v210
    %v212 = vpop.f32.mrf.mxu0
    %v213 = vpop.f32.mrf.mxu0
    %v214 = vadd.f32 %v69, %v213
    %v215 = vpop.f32.mrf.mxu0
    %216 = vmatprep.mubr.bf16.mxu0 0
    %217 = vmatmul.mubr.bf16.gmra.mxu0 %v146
    %v218 = vpop.f32.mrf.mxu0
    %v219 = vadd.f32 %v69, %v218
    %v220 = vpop.f32.mrf.mxu0
    %v221 = vpop.f32.mrf.mxu0
    %v222 = vadd.f32 %v69, %v221
    %v223 = vpop.f32.mrf.mxu0
    %224 = vmatprep.mubr.bf16.mxu0 0
    %225 = vmatmul.mubr.bf16.gmra.mxu0 %v149
    %v226 = vpop.f32.mrf.mxu0
    %v227 = vadd.f32 %v69, %v226
    %v228 = vpop.f32.mrf.mxu0
    %v229 = vpop.f32.mrf.mxu0
    %v230 = vadd.f32 %v69, %v229
    %v231 = vpop.f32.mrf.mxu0
    %232 = vmatprep.mubr.bf16.mxu0 0
    %233 = vmatmul.mubr.bf16.gmra.mxu0 %v152
    %v234 = vpop.f32.mrf.mxu0
    %v235 = vadd.f32 %v69, %v234
    %v236 = vpop.f32.mrf.mxu0
    %v237 = vpop.f32.mrf.mxu0
    %v238 = vadd.f32 %v69, %v237
    %v239 = vpop.f32.mrf.mxu0
    %240 = vmatprep.mubr.bf16.mxu0 0
    %241 = vmatmul.mubr.bf16.gmra.mxu0 %v155
    %v242 = vpop.f32.mrf.mxu0
    %v243 = vadd.f32 %v69, %v242
    %v244 = vpop.f32.mrf.mxu0
    %v245 = vpop.f32.mrf.mxu0
    %v246 = vadd.f32 %v69, %v245
    %v247 = vpop.f32.mrf.mxu0
    %248 = vmatprep.mubr.bf16.mxu0 0
    %249 = vmatmul.mubr.bf16.gmra.mxu0 %v158
    %v250 = vpop.f32.mrf.mxu0
    %v251 = vadd.f32 %v69, %v250
    %v252 = vpop.f32.mrf.mxu0
    %v253 = vpop.f32.mrf.mxu0
    %v254 = vadd.f32 %v69, %v253
    %v255 = vpop.f32.mrf.mxu0
    %256 = vdwg.mxu0
    %vm257 = vcmp.gt.f32.partialorder %v195, 0.0
    %vm258 = vcmp.gt.f32.partialorder %v198, 0.0
    %vm259 = vcmp.gt.f32.partialorder %v203, 0.0
    %vm260 = vcmp.gt.f32.partialorder %v206, 0.0
    %vm261 = vcmp.gt.f32.partialorder %v211, 0.0
    %vm262 = vcmp.gt.f32.partialorder %v214, 0.0
    %vm263 = vcmp.gt.f32.partialorder %v219, 0.0
    %vm264 = vcmp.gt.f32.partialorder %v222, 0.0
    %vm265 = vcmp.gt.f32.partialorder %v227, 0.0
    %vm266 = vcmp.gt.f32.partialorder %v230, 0.0
    %vm267 = vcmp.gt.f32.partialorder %v235, 0.0
    %vm268 = vcmp.gt.f32.partialorder %v238, 0.0
    %vm269 = vcmp.gt.f32.partialorder %v243, 0.0
    %vm270 = vcmp.gt.f32.partialorder %v246, 0.0
    %vm271 = vcmp.gt.f32.partialorder %v251, 0.0
    %vm272 = vcmp.gt.f32.partialorder %v254, 0.0
    %v273 = vmul.f32 %v195, 0.2
    %v274 = vmul.f32 %v198, 0.2
    %v275 = vmul.f32 %v203, 0.2
    %v276 = vmul.f32 %v206, 0.2
    %v277 = vmul.f32 %v211, 0.2
    %v278 = vmul.f32 %v214, 0.2
    %v279 = vmul.f32 %v219, 0.2
    %v280 = vmul.f32 %v222, 0.2
    %v281 = vmul.f32 %v227, 0.2
    %v282 = vmul.f32 %v230, 0.2
    %v283 = vmul.f32 %v235, 0.2
    %v284 = vmul.f32 %v238, 0.2
    %v285 = vmul.f32 %v243, 0.2
    %v286 = vmul.f32 %v246, 0.2
    %v287 = vmul.f32 %v251, 0.2
    %v288 = vmul.f32 %v254, 0.2
    %v289 = vsel %vm257, %v195, %v273
    %v290 = vsel %vm258, %v198, %v274
    %v291 = vsel %vm259, %v203, %v275
    %v292 = vsel %vm260, %v206, %v276
    %v293 = vsel %vm261, %v211, %v277
    %v294 = vsel %vm262, %v214, %v278
    %v295 = vsel %vm263, %v219, %v279
    %v296 = vsel %vm264, %v222, %v280
    %v297 = vsel %vm265, %v227, %v281
    %v298 = vsel %vm266, %v230, %v282
    %v299 = vsel %vm267, %v235, %v283
    %v300 = vsel %vm268, %v238, %v284
    %v301 = vsel %vm269, %v243, %v285
    %v302 = vsel %vm270, %v246, %v286
    %v303 = vsel %vm271, %v251, %v287
    %v304 = vsel %vm272, %v254, %v288
    %v305 = vpack.c.bf16 %v290, %v289
    %v306 = vpack.c.bf16 %v292, %v291
    %v307 = vpack.c.bf16 %v294, %v293
    %v308 = vpack.c.bf16 %v296, %v295
    %v309 = vpack.c.bf16 %v298, %v297
    %v310 = vpack.c.bf16 %v300, %v299
    %v311 = vpack.c.bf16 %v302, %v301
    %v312 = vpack.c.bf16 %v304, %v303
    %v313 = vld [vmem:[%s3] sm:$0xf]
    %v314 = vld [vmem:[%s3 + $0x4] sm:$0xf]
    %v315 = vld [vmem:[%s3 + $0x8] sm:$0xf]
    %v316 = vld [vmem:[%s3 + $0xc] sm:$0xf]
    %v321 = vunpack.c.l.b16 %v313
    %v322 = vunpack.c.l.b16 %v314
    %v323 = vunpack.c.l.b16 %v315
    %v324 = vunpack.c.l.b16 %v316
    %v325 = vpack.c.b16 %v322, %v321
    %v326 = vpack.c.b16 %v324, %v323
    %329 = vmatprep.subr.bf16.mxu0 0
    %330 = vmatpush1.bf16.msra.mxu0 %v312
    %331 = vmatprep.subr.bf16.mxu0 0
    %332 = vmatpush1.bf16.msra.mxu0 %v311
    %333 = vmatprep.subr.bf16.mxu0 0
    %334 = vmatpush1.bf16.msra.mxu0 %v310
    %335 = vmatprep.subr.bf16.mxu0 0
    %336 = vmatpush1.bf16.msra.mxu0 %v309
    %337 = vmatprep.subr.bf16.mxu0 0
    %338 = vmatpush1.bf16.msra.mxu0 %v308
    %339 = vmatprep.subr.bf16.mxu0 0
    %340 = vmatpush1.bf16.msra.mxu0 %v307
    %341 = vmatprep.subr.bf16.mxu0 0
    %342 = vmatpush1.bf16.msra.mxu0 %v306
    %343 = vmatprep.subr.bf16.mxu0 0
    %344 = vmatpush1.bf16.msra.mxu0 %v305
    %345 = vmatprep.subr.bf16.mxu0 0
    %346 = vmatpush2.bf16.msra.mxu0 0
    %347 = vmatprep.subr.bf16.mxu0 0
    %348 = vmatpush2.bf16.msra.mxu0 0
    %349 = vmatprep.subr.bf16.mxu0 0
    %350 = vmatpush2.bf16.msra.mxu0 0
    %351 = vmatprep.subr.bf16.mxu0 0
    %352 = vmatpush2.bf16.msra.mxu0 0
    %353 = vmatprep.subr.bf16.mxu0 0
    %354 = vmatpush2.bf16.msra.mxu0 0
    %355 = vmatprep.subr.bf16.mxu0 0
    %356 = vmatpush2.bf16.msra.mxu0 0
    %357 = vmatprep.subr.bf16.mxu0 0
    %358 = vmatpush2.bf16.msra.mxu0 0
    %359 = vmatprep.subr.bf16.mxu0 0
    %360 = vmatpush2.bf16.msra.mxu0 0
    %361 = vmatprep.mubr.bf16.mxu0 0
    %362 = vmatmul.mubr.bf16.gmra.mxu0 %v325
    %v363 = vpop.f32.mrf.mxu0
    %v364 = vadd.f32 0.0, %v363
    %v365 = vpop.f32.mrf.mxu0
    %v366 = vpop.f32.mrf.mxu0
    %v367 = vadd.f32 0.0, %v366
    %v368 = vpop.f32.mrf.mxu0
    %369 = vmatprep.mubr.bf16.mxu0 0
    %370 = vmatmul.mubr.bf16.gmra.mxu0 %v326
    %v371 = vpop.f32.mrf.mxu0
    %v372 = vadd.f32 0.0, %v371
    %v373 = vpop.f32.mrf.mxu0
    %v374 = vpop.f32.mrf.mxu0
    %v375 = vadd.f32 0.0, %v374
    %v376 = vpop.f32.mrf.mxu0
    %377 = vdwg.mxu0
    %v378 = vpack.c.bf16 %v367, %v364
    %v379 = vpack.c.bf16 %v375, %v372
    %v380 = vld [vmem:[%s4] sm:$0xf]
    %v381 = vld [vmem:[%s4 + $0x4] sm:$0xf]
    %s382 = scalar_lea.vmem %s3, 16
    %v383 = vld [vmem:[%s382] sm:$0xf]
    %v384 = vld [vmem:[%s382 + $0x4] sm:$0xf]
    %v385 = vld [vmem:[%s382 + $0x8] sm:$0xf]
    %v386 = vld [vmem:[%s382 + $0xc] sm:$0xf]
    %v391 = vunpack.c.l.b16 %v383
    %v392 = vunpack.c.l.b16 %v384
    %v393 = vunpack.c.l.b16 %v385
    %v394 = vunpack.c.l.b16 %v386
    %v395 = vpack.c.b16 %v392, %v391
    %v396 = vpack.c.b16 %v394, %v393
    %399 = vmatprep.subr.bf16.mxu0 0
    %400 = vmatpush1.bf16.msra.mxu0 %v312
    %401 = vmatprep.subr.bf16.mxu0 0
    %402 = vmatpush1.bf16.msra.mxu0 %v311
    %403 = vmatprep.subr.bf16.mxu0 0
    %404 = vmatpush1.bf16.msra.mxu0 %v310
    %405 = vmatprep.subr.bf16.mxu0 0
    %406 = vmatpush1.bf16.msra.mxu0 %v309
    %407 = vmatprep.subr.bf16.mxu0 0
    %408 = vmatpush1.bf16.msra.mxu0 %v308
    %409 = vmatprep.subr.bf16.mxu0 0
    %410 = vmatpush1.bf16.msra.mxu0 %v307
    %411 = vmatprep.subr.bf16.mxu0 0
    %412 = vmatpush1.bf16.msra.mxu0 %v306
    %413 = vmatprep.subr.bf16.mxu0 0
    %414 = vmatpush1.bf16.msra.mxu0 %v305
    %415 = vmatprep.subr.bf16.mxu0 0
    %416 = vmatpush2.bf16.msra.mxu0 0
    %417 = vmatprep.subr.bf16.mxu0 0
    %418 = vmatpush2.bf16.msra.mxu0 0
    %419 = vmatprep.subr.bf16.mxu0 0
    %420 = vmatpush2.bf16.msra.mxu0 0
    %421 = vmatprep.subr.bf16.mxu0 0
    %422 = vmatpush2.bf16.msra.mxu0 0
    %423 = vmatprep.subr.bf16.mxu0 0
    %424 = vmatpush2.bf16.msra.mxu0 0
    %425 = vmatprep.subr.bf16.mxu0 0
    %426 = vmatpush2.bf16.msra.mxu0 0
    %427 = vmatprep.subr.bf16.mxu0 0
    %428 = vmatpush2.bf16.msra.mxu0 0
    %429 = vmatprep.subr.bf16.mxu0 0
    %430 = vmatpush2.bf16.msra.mxu0 0
    %431 = vmatprep.mubr.bf16.mxu0 0
    %432 = vmatmul.mubr.bf16.gmra.mxu0 %v395
    %v433 = vpop.f32.mrf.mxu0
    %v434 = vadd.f32 0.0, %v433
    %v435 = vpop.f32.mrf.mxu0
    %v436 = vpop.f32.mrf.mxu0
    %v437 = vadd.f32 0.0, %v436
    %v438 = vpop.f32.mrf.mxu0
    %439 = vmatprep.mubr.bf16.mxu0 0
    %440 = vmatmul.mubr.bf16.gmra.mxu0 %v396
    %v441 = vpop.f32.mrf.mxu0
    %v442 = vadd.f32 0.0, %v441
    %v443 = vpop.f32.mrf.mxu0
    %v444 = vpop.f32.mrf.mxu0
    %v445 = vadd.f32 0.0, %v444
    %v446 = vpop.f32.mrf.mxu0
    %447 = vdwg.mxu0
    %v448 = vpack.c.bf16 %v437, %v434
    %v449 = vpack.c.bf16 %v445, %v442
    %s450 = scalar_lea.vmem %s4, 8
    %v451 = vld [vmem:[%s450] sm:$0xf]
    %v452 = vld [vmem:[%s450 + $0x4] sm:$0xf]
    %v455 = vunpack.c.l.b16 %v451
    %v456 = vunpack.c.l.b16 %v452
    %v457 = vpack.c.b16 %v456, %v455
    %vm459 = vcmask 130048
    %v461 = vsel %vm459, %v448, 0
    %v464 = vsel %vm459, %v449, 0
    %466 = vmatprep.subr.bf16.mxu0 0
    %467 = vmatpush1.bf16.msra.mxu0 0
    %468 = vmatprep.subr.bf16.mxu0 0
    %469 = vmatpush1.bf16.msra.mxu0 0
    %470 = vmatprep.subr.bf16.mxu0 0
    %471 = vmatpush1.bf16.msra.mxu0 0
    %472 = vmatprep.subr.bf16.mxu0 0
    %473 = vmatpush1.bf16.msra.mxu0 0
    %474 = vmatprep.subr.bf16.mxu0 0
    %475 = vmatpush1.bf16.msra.mxu0 0
    %476 = vmatprep.subr.bf16.mxu0 0
    %477 = vmatpush1.bf16.msra.mxu0 0
    %478 = vmatprep.subr.bf16.mxu0 0
    %479 = vmatpush1.bf16.msra.mxu0 0
    %480 = vmatprep.subr.bf16.mxu0 0
    %481 = vmatpush1.bf16.msra.mxu0 %v457
    %482 = vmatprep.subr.bf16.mxu0 0
    %483 = vmatpush2.bf16.msra.mxu0 0
    %484 = vmatprep.subr.bf16.mxu0 0
    %485 = vmatpush2.bf16.msra.mxu0 0
    %486 = vmatprep.subr.bf16.mxu0 0
    %487 = vmatpush2.bf16.msra.mxu0 0
    %488 = vmatprep.subr.bf16.mxu0 0
    %489 = vmatpush2.bf16.msra.mxu0 0
    %490 = vmatprep.subr.bf16.mxu0 0
    %491 = vmatpush2.bf16.msra.mxu0 0
    %492 = vmatprep.subr.bf16.mxu0 0
    %493 = vmatpush2.bf16.msra.mxu0 0
    %494 = vmatprep.subr.bf16.mxu0 0
    %495 = vmatpush2.bf16.msra.mxu0 0
    %496 = vmatprep.subr.bf16.mxu0 0
    %497 = vmatpush2.bf16.msra.mxu0 0
    %498 = vmatprep.mubr.bf16.mxu0 0
    %499 = vmatmul.mubr.bf16.gmra.mxu0 %v461
    %v500 = vpop.f32.mrf.mxu0
    %v501 = vadd.f32 0.0, %v500
    %v502 = vpop.f32.mrf.mxu0
    %v503 = vpop.f32.mrf.mxu0
    %v504 = vadd.f32 0.0, %v503
    %v505 = vpop.f32.mrf.mxu0
    %506 = vmatprep.mubr.bf16.mxu0 0
    %507 = vmatmul.mubr.bf16.gmra.mxu0 %v464
    %v508 = vpop.f32.mrf.mxu0
    %v509 = vadd.f32 0.0, %v508
    %v510 = vpop.f32.mrf.mxu0
    %v511 = vpop.f32.mrf.mxu0
    %v512 = vadd.f32 0.0, %v511
    %v513 = vpop.f32.mrf.mxu0
    %514 = vdwg.mxu0
    %v517 = vunpack.c.l.b16 %v380
    %v518 = vunpack.c.l.b16 %v381
    %v519 = vpack.c.b16 %v518, %v517
    %v522 = vsel %vm459, %v378, 0
    %v525 = vsel %vm459, %v379, 0
    %527 = vmatprep.subr.bf16.mxu0 0
    %528 = vmatpush1.bf16.msra.mxu0 0
    %529 = vmatprep.subr.bf16.mxu0 0
    %530 = vmatpush1.bf16.msra.mxu0 0
    %531 = vmatprep.subr.bf16.mxu0 0
    %532 = vmatpush1.bf16.msra.mxu0 0
    %533 = vmatprep.subr.bf16.mxu0 0
    %534 = vmatpush1.bf16.msra.mxu0 0
    %535 = vmatprep.subr.bf16.mxu0 0
    %536 = vmatpush1.bf16.msra.mxu0 0
    %537 = vmatprep.subr.bf16.mxu0 0
    %538 = vmatpush1.bf16.msra.mxu0 0
    %539 = vmatprep.subr.bf16.mxu0 0
    %540 = vmatpush1.bf16.msra.mxu0 0
    %541 = vmatprep.subr.bf16.mxu0 0
    %542 = vmatpush1.bf16.msra.mxu0 %v519
    %543 = vmatprep.subr.bf16.mxu0 0
    %544 = vmatpush2.bf16.msra.mxu0 0
    %545 = vmatprep.subr.bf16.mxu0 0
    %546 = vmatpush2.bf16.msra.mxu0 0
    %547 = vmatprep.subr.bf16.mxu0 0
    %548 = vmatpush2.bf16.msra.mxu0 0
    %549 = vmatprep.subr.bf16.mxu0 0
    %550 = vmatpush2.bf16.msra.mxu0 0
    %551 = vmatprep.subr.bf16.mxu0 0
    %552 = vmatpush2.bf16.msra.mxu0 0
    %553 = vmatprep.subr.bf16.mxu0 0
    %554 = vmatpush2.bf16.msra.mxu0 0
    %555 = vmatprep.subr.bf16.mxu0 0
    %556 = vmatpush2.bf16.msra.mxu0 0
    %557 = vmatprep.subr.bf16.mxu0 0
    %558 = vmatpush2.bf16.msra.mxu0 0
    %559 = vmatprep.mubr.bf16.mxu0 0
    %560 = vmatmul.mubr.bf16.gmra.mxu0 %v522
    %v561 = vpop.f32.mrf.mxu0
    %v562 = vadd.f32 %v501, %v561
    %v563 = vpop.f32.mrf.mxu0
    %v564 = vpop.f32.mrf.mxu0
    %v565 = vadd.f32 %v504, %v564
    %v566 = vpop.f32.mrf.mxu0
    %567 = vmatprep.mubr.bf16.mxu0 0
    %568 = vmatmul.mubr.bf16.gmra.mxu0 %v525
    %v569 = vpop.f32.mrf.mxu0
    %v570 = vadd.f32 %v509, %v569
    %v571 = vpop.f32.mrf.mxu0
    %v572 = vpop.f32.mrf.mxu0
    %v573 = vadd.f32 %v512, %v572
    %v574 = vpop.f32.mrf.mxu0
    %575 = vdwg.mxu0
    %s576 = scalar_lea.vmem %s3, 32
    %v577 = vld [vmem:[%s576] sm:$0xf]
    %v578 = vld [vmem:[%s576 + $0x4] sm:$0xf]
    %v579 = vld [vmem:[%s576 + $0x8] sm:$0xf]
    %v580 = vld [vmem:[%s576 + $0xc] sm:$0xf]
    %v585 = vunpack.c.l.b16 %v577
    %v586 = vunpack.c.l.b16 %v578
    %v587 = vunpack.c.l.b16 %v579
    %v588 = vunpack.c.l.b16 %v580
    %v589 = vpack.c.b16 %v586, %v585
    %v590 = vpack.c.b16 %v588, %v587
    %593 = vmatprep.subr.bf16.mxu0 0
    %594 = vmatpush1.bf16.msra.mxu0 %v312
    %595 = vmatprep.subr.bf16.mxu0 0
    %596 = vmatpush1.bf16.msra.mxu0 %v311
    %597 = vmatprep.subr.bf16.mxu0 0
    %598 = vmatpush1.bf16.msra.mxu0 %v310
    %599 = vmatprep.subr.bf16.mxu0 0
    %600 = vmatpush1.bf16.msra.mxu0 %v309
    %601 = vmatprep.subr.bf16.mxu0 0
    %602 = vmatpush1.bf16.msra.mxu0 %v308
    %603 = vmatprep.subr.bf16.mxu0 0
    %604 = vmatpush1.bf16.msra.mxu0 %v307
    %605 = vmatprep.subr.bf16.mxu0 0
    %606 = vmatpush1.bf16.msra.mxu0 %v306
    %607 = vmatprep.subr.bf16.mxu0 0
    %608 = vmatpush1.bf16.msra.mxu0 %v305
    %609 = vmatprep.subr.bf16.mxu0 0
    %610 = vmatpush2.bf16.msra.mxu0 0
    %611 = vmatprep.subr.bf16.mxu0 0
    %612 = vmatpush2.bf16.msra.mxu0 0
    %613 = vmatprep.subr.bf16.mxu0 0
    %614 = vmatpush2.bf16.msra.mxu0 0
    %615 = vmatprep.subr.bf16.mxu0 0
    %616 = vmatpush2.bf16.msra.mxu0 0
    %617 = vmatprep.subr.bf16.mxu0 0
    %618 = vmatpush2.bf16.msra.mxu0 0
    %619 = vmatprep.subr.bf16.mxu0 0
    %620 = vmatpush2.bf16.msra.mxu0 0
    %621 = vmatprep.subr.bf16.mxu0 0
    %622 = vmatpush2.bf16.msra.mxu0 0
    %623 = vmatprep.subr.bf16.mxu0 0
    %624 = vmatpush2.bf16.msra.mxu0 0
    %625 = vmatprep.mubr.bf16.mxu0 0
    %626 = vmatmul.mubr.bf16.gmra.mxu0 %v589
    %v627 = vpop.f32.mrf.mxu0
    %v628 = vadd.f32 0.0, %v627
    %v629 = vpop.f32.mrf.mxu0
    %v630 = vpop.f32.mrf.mxu0
    %v631 = vadd.f32 0.0, %v630
    %v632 = vpop.f32.mrf.mxu0
    %633 = vmatprep.mubr.bf16.mxu0 0
    %634 = vmatmul.mubr.bf16.gmra.mxu0 %v590
    %v635 = vpop.f32.mrf.mxu0
    %v636 = vadd.f32 0.0, %v635
    %v637 = vpop.f32.mrf.mxu0
    %v638 = vpop.f32.mrf.mxu0
    %v639 = vadd.f32 0.0, %v638
    %v640 = vpop.f32.mrf.mxu0
    %641 = vdwg.mxu0
    %v642 = vpack.c.bf16 %v631, %v628
    %v643 = vpack.c.bf16 %v639, %v636
    %s644 = scalar_lea.vmem %s4, 16
    %v645 = vld [vmem:[%s644] sm:$0xf]
    %v646 = vld [vmem:[%s644 + $0x4] sm:$0xf]
    %v649 = vunpack.c.l.b16 %v645
    %v650 = vunpack.c.l.b16 %v646
    %v651 = vpack.c.b16 %v650, %v649
    %v654 = vsel %vm459, %v642, 0
    %v657 = vsel %vm459, %v643, 0
    %659 = vmatprep.subr.bf16.mxu0 0
    %660 = vmatpush1.bf16.msra.mxu0 0
    %661 = vmatprep.subr.bf16.mxu0 0
    %662 = vmatpush1.bf16.msra.mxu0 0
    %663 = vmatprep.subr.bf16.mxu0 0
    %664 = vmatpush1.bf16.msra.mxu0 0
    %665 = vmatprep.subr.bf16.mxu0 0
    %666 = vmatpush1.bf16.msra.mxu0 0
    %667 = vmatprep.subr.bf16.mxu0 0
    %668 = vmatpush1.bf16.msra.mxu0 0
    %669 = vmatprep.subr.bf16.mxu0 0
    %670 = vmatpush1.bf16.msra.mxu0 0
    %671 = vmatprep.subr.bf16.mxu0 0
    %672 = vmatpush1.bf16.msra.mxu0 0
    %673 = vmatprep.subr.bf16.mxu0 0
    %674 = vmatpush1.bf16.msra.mxu0 %v651
    %675 = vmatprep.subr.bf16.mxu0 0
    %676 = vmatpush2.bf16.msra.mxu0 0
    %677 = vmatprep.subr.bf16.mxu0 0
    %678 = vmatpush2.bf16.msra.mxu0 0
    %679 = vmatprep.subr.bf16.mxu0 0
    %680 = vmatpush2.bf16.msra.mxu0 0
    %681 = vmatprep.subr.bf16.mxu0 0
    %682 = vmatpush2.bf16.msra.mxu0 0
    %683 = vmatprep.subr.bf16.mxu0 0
    %684 = vmatpush2.bf16.msra.mxu0 0
    %685 = vmatprep.subr.bf16.mxu0 0
    %686 = vmatpush2.bf16.msra.mxu0 0
    %687 = vmatprep.subr.bf16.mxu0 0
    %688 = vmatpush2.bf16.msra.mxu0 0
    %689 = vmatprep.subr.bf16.mxu0 0
    %690 = vmatpush2.bf16.msra.mxu0 0
    %691 = vmatprep.mubr.bf16.mxu0 0
    %692 = vmatmul.mubr.bf16.gmra.mxu0 %v654
    %v693 = vpop.f32.mrf.mxu0
    %v694 = vadd.f32 0.0, %v693
    %v695 = vpop.f32.mrf.mxu0
    %v696 = vpop.f32.mrf.mxu0
    %v697 = vadd.f32 0.0, %v696
    %v698 = vpop.f32.mrf.mxu0
    %699 = vmatprep.mubr.bf16.mxu0 0
    %700 = vmatmul.mubr.bf16.gmra.mxu0 %v657
    %v701 = vpop.f32.mrf.mxu0
    %v702 = vadd.f32 0.0, %v701
    %v703 = vpop.f32.mrf.mxu0
    %v704 = vpop.f32.mrf.mxu0
    %v705 = vadd.f32 0.0, %v704
    %v706 = vpop.f32.mrf.mxu0
    %707 = vdwg.mxu0
    %v708 = vadd.f32 %v562, %v694
    %v709 = vadd.f32 %v565, %v697
    %v710 = vadd.f32 %v570, %v702
    %v711 = vadd.f32 %v573, %v705
    %s712 = scalar_lea.vmem %s3, 48
    %v713 = vld [vmem:[%s712] sm:$0xf]
    %v714 = vld [vmem:[%s712 + $0x4] sm:$0xf]
    %v715 = vld [vmem:[%s712 + $0x8] sm:$0xf]
    %v716 = vld [vmem:[%s712 + $0xc] sm:$0xf]
    %v721 = vunpack.c.l.b16 %v713
    %v722 = vunpack.c.l.b16 %v714
    %v723 = vunpack.c.l.b16 %v715
    %v724 = vunpack.c.l.b16 %v716
    %v725 = vpack.c.b16 %v722, %v721
    %v726 = vpack.c.b16 %v724, %v723
    %729 = vmatprep.subr.bf16.mxu0 0
    %730 = vmatpush1.bf16.msra.mxu0 %v312
    %731 = vmatprep.subr.bf16.mxu0 0
    %732 = vmatpush1.bf16.msra.mxu0 %v311
    %733 = vmatprep.subr.bf16.mxu0 0
    %734 = vmatpush1.bf16.msra.mxu0 %v310
    %735 = vmatprep.subr.bf16.mxu0 0
    %736 = vmatpush1.bf16.msra.mxu0 %v309
    %737 = vmatprep.subr.bf16.mxu0 0
    %738 = vmatpush1.bf16.msra.mxu0 %v308
    %739 = vmatprep.subr.bf16.mxu0 0
    %740 = vmatpush1.bf16.msra.mxu0 %v307
    %741 = vmatprep.subr.bf16.mxu0 0
    %742 = vmatpush1.bf16.msra.mxu0 %v306
    %743 = vmatprep.subr.bf16.mxu0 0
    %744 = vmatpush1.bf16.msra.mxu0 %v305
    %745 = vmatprep.subr.bf16.mxu0 0
    %746 = vmatpush2.bf16.msra.mxu0 0
    %747 = vmatprep.subr.bf16.mxu0 0
    %748 = vmatpush2.bf16.msra.mxu0 0
    %749 = vmatprep.subr.bf16.mxu0 0
    %750 = vmatpush2.bf16.msra.mxu0 0
    %751 = vmatprep.subr.bf16.mxu0 0
    %752 = vmatpush2.bf16.msra.mxu0 0
    %753 = vmatprep.subr.bf16.mxu0 0
    %754 = vmatpush2.bf16.msra.mxu0 0
    %755 = vmatprep.subr.bf16.mxu0 0
    %756 = vmatpush2.bf16.msra.mxu0 0
    %757 = vmatprep.subr.bf16.mxu0 0
    %758 = vmatpush2.bf16.msra.mxu0 0
    %759 = vmatprep.subr.bf16.mxu0 0
    %760 = vmatpush2.bf16.msra.mxu0 0
    %761 = vmatprep.mubr.bf16.mxu0 0
    %762 = vmatmul.mubr.bf16.gmra.mxu0 %v725
    %v763 = vpop.f32.mrf.mxu0
    %v764 = vadd.f32 0.0, %v763
    %v765 = vpop.f32.mrf.mxu0
    %v766 = vpop.f32.mrf.mxu0
    %v767 = vadd.f32 0.0, %v766
    %v768 = vpop.f32.mrf.mxu0
    %769 = vmatprep.mubr.bf16.mxu0 0
    %770 = vmatmul.mubr.bf16.gmra.mxu0 %v726
    %v771 = vpop.f32.mrf.mxu0
    %v772 = vadd.f32 0.0, %v771
    %v773 = vpop.f32.mrf.mxu0
    %v774 = vpop.f32.mrf.mxu0
    %v775 = vadd.f32 0.0, %v774
    %v776 = vpop.f32.mrf.mxu0
    %777 = vdwg.mxu0
    %v778 = vpack.c.bf16 %v767, %v764
    %v779 = vpack.c.bf16 %v775, %v772
    %s780 = scalar_lea.vmem %s4, 24
    %v781 = vld [vmem:[%s780] sm:$0xf]
    %v782 = vld [vmem:[%s780 + $0x4] sm:$0xf]
    %v785 = vunpack.c.l.b16 %v781
    %v786 = vunpack.c.l.b16 %v782
    %v787 = vpack.c.b16 %v786, %v785
    %v790 = vsel %vm459, %v778, 0
    %v793 = vsel %vm459, %v779, 0
    %795 = vmatprep.subr.bf16.mxu0 0
    %796 = vmatpush1.bf16.msra.mxu0 0
    %797 = vmatprep.subr.bf16.mxu0 0
    %798 = vmatpush1.bf16.msra.mxu0 0
    %799 = vmatprep.subr.bf16.mxu0 0
    %800 = vmatpush1.bf16.msra.mxu0 0
    %801 = vmatprep.subr.bf16.mxu0 0
    %802 = vmatpush1.bf16.msra.mxu0 0
    %803 = vmatprep.subr.bf16.mxu0 0
    %804 = vmatpush1.bf16.msra.mxu0 0
    %805 = vmatprep.subr.bf16.mxu0 0
    %806 = vmatpush1.bf16.msra.mxu0 0
    %807 = vmatprep.subr.bf16.mxu0 0
    %808 = vmatpush1.bf16.msra.mxu0 0
    %809 = vmatprep.subr.bf16.mxu0 0
    %810 = vmatpush1.bf16.msra.mxu0 %v787
    %811 = vmatprep.subr.bf16.mxu0 0
    %812 = vmatpush2.bf16.msra.mxu0 0
    %813 = vmatprep.subr.bf16.mxu0 0
    %814 = vmatpush2.bf16.msra.mxu0 0
    %815 = vmatprep.subr.bf16.mxu0 0
    %816 = vmatpush2.bf16.msra.mxu0 0
    %817 = vmatprep.subr.bf16.mxu0 0
    %818 = vmatpush2.bf16.msra.mxu0 0
    %819 = vmatprep.subr.bf16.mxu0 0
    %820 = vmatpush2.bf16.msra.mxu0 0
    %821 = vmatprep.subr.bf16.mxu0 0
    %822 = vmatpush2.bf16.msra.mxu0 0
    %823 = vmatprep.subr.bf16.mxu0 0
    %824 = vmatpush2.bf16.msra.mxu0 0
    %825 = vmatprep.subr.bf16.mxu0 0
    %826 = vmatpush2.bf16.msra.mxu0 0
    %827 = vmatprep.mubr.bf16.mxu0 0
    %828 = vmatmul.mubr.bf16.gmra.mxu0 %v790
    %v829 = vpop.f32.mrf.mxu0
    %v830 = vadd.f32 0.0, %v829
    %v831 = vpop.f32.mrf.mxu0
    %v832 = vpop.f32.mrf.mxu0
    %v833 = vadd.f32 0.0, %v832
    %v834 = vpop.f32.mrf.mxu0
    %835 = vmatprep.mubr.bf16.mxu0 0
    %836 = vmatmul.mubr.bf16.gmra.mxu0 %v793
    %v837 = vpop.f32.mrf.mxu0
    %v838 = vadd.f32 0.0, %v837
    %v839 = vpop.f32.mrf.mxu0
    %v840 = vpop.f32.mrf.mxu0
    %v841 = vadd.f32 0.0, %v840
    %v842 = vpop.f32.mrf.mxu0
    %843 = vdwg.mxu0
    %v844 = vadd.f32 %v708, %v830
    %v845 = vadd.f32 %v709, %v833
    %v846 = vadd.f32 %v710, %v838
    %v847 = vadd.f32 %v711, %v841
    %s848 = scalar_lea.vmem %s3, 64
    %v849 = vld [vmem:[%s848] sm:$0xf]
    %v850 = vld [vmem:[%s848 + $0x4] sm:$0xf]
    %v851 = vld [vmem:[%s848 + $0x8] sm:$0xf]
    %v852 = vld [vmem:[%s848 + $0xc] sm:$0xf]
    %v857 = vunpack.c.l.b16 %v849
    %v858 = vunpack.c.l.b16 %v850
    %v859 = vunpack.c.l.b16 %v851
    %v860 = vunpack.c.l.b16 %v852
    %v861 = vpack.c.b16 %v858, %v857
    %v862 = vpack.c.b16 %v860, %v859
    %865 = vmatprep.subr.bf16.mxu0 0
    %866 = vmatpush1.bf16.msra.mxu0 %v312
    %867 = vmatprep.subr.bf16.mxu0 0
    %868 = vmatpush1.bf16.msra.mxu0 %v311
    %869 = vmatprep.subr.bf16.mxu0 0
    %870 = vmatpush1.bf16.msra.mxu0 %v310
    %871 = vmatprep.subr.bf16.mxu0 0
    %872 = vmatpush1.bf16.msra.mxu0 %v309
    %873 = vmatprep.subr.bf16.mxu0 0
    %874 = vmatpush1.bf16.msra.mxu0 %v308
    %875 = vmatprep.subr.bf16.mxu0 0
    %876 = vmatpush1.bf16.msra.mxu0 %v307
    %877 = vmatprep.subr.bf16.mxu0 0
    %878 = vmatpush1.bf16.msra.mxu0 %v306
    %879 = vmatprep.subr.bf16.mxu0 0
    %880 = vmatpush1.bf16.msra.mxu0 %v305
    %881 = vmatprep.subr.bf16.mxu0 0
    %882 = vmatpush2.bf16.msra.mxu0 0
    %883 = vmatprep.subr.bf16.mxu0 0
    %884 = vmatpush2.bf16.msra.mxu0 0
    %885 = vmatprep.subr.bf16.mxu0 0
    %886 = vmatpush2.bf16.msra.mxu0 0
    %887 = vmatprep.subr.bf16.mxu0 0
    %888 = vmatpush2.bf16.msra.mxu0 0
    %889 = vmatprep.subr.bf16.mxu0 0
    %890 = vmatpush2.bf16.msra.mxu0 0
    %891 = vmatprep.subr.bf16.mxu0 0
    %892 = vmatpush2.bf16.msra.mxu0 0
    %893 = vmatprep.subr.bf16.mxu0 0
    %894 = vmatpush2.bf16.msra.mxu0 0
    %895 = vmatprep.subr.bf16.mxu0 0
    %896 = vmatpush2.bf16.msra.mxu0 0
    %897 = vmatprep.mubr.bf16.mxu0 0
    %898 = vmatmul.mubr.bf16.gmra.mxu0 %v861
    %v899 = vpop.f32.mrf.mxu0
    %v900 = vadd.f32 0.0, %v899
    %v901 = vpop.f32.mrf.mxu0
    %v902 = vpop.f32.mrf.mxu0
    %v903 = vadd.f32 0.0, %v902
    %v904 = vpop.f32.mrf.mxu0
    %905 = vmatprep.mubr.bf16.mxu0 0
    %906 = vmatmul.mubr.bf16.gmra.mxu0 %v862
    %v907 = vpop.f32.mrf.mxu0
    %v908 = vadd.f32 0.0, %v907
    %v909 = vpop.f32.mrf.mxu0
    %v910 = vpop.f32.mrf.mxu0
    %v911 = vadd.f32 0.0, %v910
    %v912 = vpop.f32.mrf.mxu0
    %913 = vdwg.mxu0
    %v914 = vpack.c.bf16 %v903, %v900
    %v915 = vpack.c.bf16 %v911, %v908
    %s916 = scalar_lea.vmem %s4, 32
    %v917 = vld [vmem:[%s916] sm:$0xf]
    %v918 = vld [vmem:[%s916 + $0x4] sm:$0xf]
    %v921 = vunpack.c.l.b16 %v917
    %v922 = vunpack.c.l.b16 %v918
    %v923 = vpack.c.b16 %v922, %v921
    %v926 = vsel %vm459, %v914, 0
    %v929 = vsel %vm459, %v915, 0
    %931 = vmatprep.subr.bf16.mxu0 0
    %932 = vmatpush1.bf16.msra.mxu0 0
    %933 = vmatprep.subr.bf16.mxu0 0
    %934 = vmatpush1.bf16.msra.mxu0 0
    %935 = vmatprep.subr.bf16.mxu0 0
    %936 = vmatpush1.bf16.msra.mxu0 0
    %937 = vmatprep.subr.bf16.mxu0 0
    %938 = vmatpush1.bf16.msra.mxu0 0
    %939 = vmatprep.subr.bf16.mxu0 0
    %940 = vmatpush1.bf16.msra.mxu0 0
    %941 = vmatprep.subr.bf16.mxu0 0
    %942 = vmatpush1.bf16.msra.mxu0 0
    %943 = vmatprep.subr.bf16.mxu0 0
    %944 = vmatpush1.bf16.msra.mxu0 0
    %945 = vmatprep.subr.bf16.mxu0 0
    %946 = vmatpush1.bf16.msra.mxu0 %v923
    %947 = vmatprep.subr.bf16.mxu0 0
    %948 = vmatpush2.bf16.msra.mxu0 0
    %949 = vmatprep.subr.bf16.mxu0 0
    %950 = vmatpush2.bf16.msra.mxu0 0
    %951 = vmatprep.subr.bf16.mxu0 0
    %952 = vmatpush2.bf16.msra.mxu0 0
    %953 = vmatprep.subr.bf16.mxu0 0
    %954 = vmatpush2.bf16.msra.mxu0 0
    %955 = vmatprep.subr.bf16.mxu0 0
    %956 = vmatpush2.bf16.msra.mxu0 0
    %957 = vmatprep.subr.bf16.mxu0 0
    %958 = vmatpush2.bf16.msra.mxu0 0
    %959 = vmatprep.subr.bf16.mxu0 0
    %960 = vmatpush2.bf16.msra.mxu0 0
    %961 = vmatprep.subr.bf16.mxu0 0
    %962 = vmatpush2.bf16.msra.mxu0 0
    %963 = vmatprep.mubr.bf16.mxu0 0
    %964 = vmatmul.mubr.bf16.gmra.mxu0 %v926
    %v965 = vpop.f32.mrf.mxu0
    %v966 = vadd.f32 0.0, %v965
    %v967 = vpop.f32.mrf.mxu0
    %v968 = vpop.f32.mrf.mxu0
    %v969 = vadd.f32 0.0, %v968
    %v970 = vpop.f32.mrf.mxu0
    %971 = vmatprep.mubr.bf16.mxu0 0
    %972 = vmatmul.mubr.bf16.gmra.mxu0 %v929
    %v973 = vpop.f32.mrf.mxu0
    %v974 = vadd.f32 0.0, %v973
    %v975 = vpop.f32.mrf.mxu0
    %v976 = vpop.f32.mrf.mxu0
    %v977 = vadd.f32 0.0, %v976
    %v978 = vpop.f32.mrf.mxu0
    %979 = vdwg.mxu0
    %v980 = vadd.f32 %v844, %v966
    %v981 = vadd.f32 %v845, %v969
    %v982 = vadd.f32 %v846, %v974
    %v983 = vadd.f32 %v847, %v977
    %s984 = scalar_lea.vmem %s3, 80
    %v985 = vld [vmem:[%s984] sm:$0xf]
    %v986 = vld [vmem:[%s984 + $0x4] sm:$0xf]
    %v987 = vld [vmem:[%s984 + $0x8] sm:$0xf]
    %v988 = vld [vmem:[%s984 + $0xc] sm:$0xf]
    %v993 = vunpack.c.l.b16 %v985
    %v994 = vunpack.c.l.b16 %v986
    %v995 = vunpack.c.l.b16 %v987
    %v996 = vunpack.c.l.b16 %v988
    %v997 = vpack.c.b16 %v994, %v993
    %v998 = vpack.c.b16 %v996, %v995
    %1001 = vmatprep.subr.bf16.mxu0 0
    %1002 = vmatpush1.bf16.msra.mxu0 %v312
    %1003 = vmatprep.subr.bf16.mxu0 0
    %1004 = vmatpush1.bf16.msra.mxu0 %v311
    %1005 = vmatprep.subr.bf16.mxu0 0
    %1006 = vmatpush1.bf16.msra.mxu0 %v310
    %1007 = vmatprep.subr.bf16.mxu0 0
    %1008 = vmatpush1.bf16.msra.mxu0 %v309
    %1009 = vmatprep.subr.bf16.mxu0 0
    %1010 = vmatpush1.bf16.msra.mxu0 %v308
    %1011 = vmatprep.subr.bf16.mxu0 0
    %1012 = vmatpush1.bf16.msra.mxu0 %v307
    %1013 = vmatprep.subr.bf16.mxu0 0
    %1014 = vmatpush1.bf16.msra.mxu0 %v306
    %1015 = vmatprep.subr.bf16.mxu0 0
    %1016 = vmatpush1.bf16.msra.mxu0 %v305
    %1017 = vmatprep.subr.bf16.mxu0 0
    %1018 = vmatpush2.bf16.msra.mxu0 0
    %1019 = vmatprep.subr.bf16.mxu0 0
    %1020 = vmatpush2.bf16.msra.mxu0 0
    %1021 = vmatprep.subr.bf16.mxu0 0
    %1022 = vmatpush2.bf16.msra.mxu0 0
    %1023 = vmatprep.subr.bf16.mxu0 0
    %1024 = vmatpush2.bf16.msra.mxu0 0
    %1025 = vmatprep.subr.bf16.mxu0 0
    %1026 = vmatpush2.bf16.msra.mxu0 0
    %1027 = vmatprep.subr.bf16.mxu0 0
    %1028 = vmatpush2.bf16.msra.mxu0 0
    %1029 = vmatprep.subr.bf16.mxu0 0
    %1030 = vmatpush2.bf16.msra.mxu0 0
    %1031 = vmatprep.subr.bf16.mxu0 0
    %1032 = vmatpush2.bf16.msra.mxu0 0
    %1033 = vmatprep.mubr.bf16.mxu0 0
    %1034 = vmatmul.mubr.bf16.gmra.mxu0 %v997
    %v1035 = vpop.f32.mrf.mxu0
    %v1036 = vadd.f32 0.0, %v1035
    %v1037 = vpop.f32.mrf.mxu0
    %v1038 = vpop.f32.mrf.mxu0
    %v1039 = vadd.f32 0.0, %v1038
    %v1040 = vpop.f32.mrf.mxu0
    %1041 = vmatprep.mubr.bf16.mxu0 0
    %1042 = vmatmul.mubr.bf16.gmra.mxu0 %v998
    %v1043 = vpop.f32.mrf.mxu0
    %v1044 = vadd.f32 0.0, %v1043
    %v1045 = vpop.f32.mrf.mxu0
    %v1046 = vpop.f32.mrf.mxu0
    %v1047 = vadd.f32 0.0, %v1046
    %v1048 = vpop.f32.mrf.mxu0
    %1049 = vdwg.mxu0
    %v1050 = vpack.c.bf16 %v1039, %v1036
    %v1051 = vpack.c.bf16 %v1047, %v1044
    %s1052 = scalar_lea.vmem %s4, 40
    %v1053 = vld [vmem:[%s1052] sm:$0xf]
    %v1054 = vld [vmem:[%s1052 + $0x4] sm:$0xf]
    %v1057 = vunpack.c.l.b16 %v1053
    %v1058 = vunpack.c.l.b16 %v1054
    %v1059 = vpack.c.b16 %v1058, %v1057
    %v1062 = vsel %vm459, %v1050, 0
    %v1065 = vsel %vm459, %v1051, 0
    %1067 = vmatprep.subr.bf16.mxu0 0
    %1068 = vmatpush1.bf16.msra.mxu0 0
    %1069 = vmatprep.subr.bf16.mxu0 0
    %1070 = vmatpush1.bf16.msra.mxu0 0
    %1071 = vmatprep.subr.bf16.mxu0 0
    %1072 = vmatpush1.bf16.msra.mxu0 0
    %1073 = vmatprep.subr.bf16.mxu0 0
    %1074 = vmatpush1.bf16.msra.mxu0 0
    %1075 = vmatprep.subr.bf16.mxu0 0
    %1076 = vmatpush1.bf16.msra.mxu0 0
    %1077 = vmatprep.subr.bf16.mxu0 0
    %1078 = vmatpush1.bf16.msra.mxu0 0
    %1079 = vmatprep.subr.bf16.mxu0 0
    %1080 = vmatpush1.bf16.msra.mxu0 0
    %1081 = vmatprep.subr.bf16.mxu0 0
    %1082 = vmatpush1.bf16.msra.mxu0 %v1059
    %1083 = vmatprep.subr.bf16.mxu0 0
    %1084 = vmatpush2.bf16.msra.mxu0 0
    %1085 = vmatprep.subr.bf16.mxu0 0
    %1086 = vmatpush2.bf16.msra.mxu0 0
    %1087 = vmatprep.subr.bf16.mxu0 0
    %1088 = vmatpush2.bf16.msra.mxu0 0
    %1089 = vmatprep.subr.bf16.mxu0 0
    %1090 = vmatpush2.bf16.msra.mxu0 0
    %1091 = vmatprep.subr.bf16.mxu0 0
    %1092 = vmatpush2.bf16.msra.mxu0 0
    %1093 = vmatprep.subr.bf16.mxu0 0
    %1094 = vmatpush2.bf16.msra.mxu0 0
    %1095 = vmatprep.subr.bf16.mxu0 0
    %1096 = vmatpush2.bf16.msra.mxu0 0
    %1097 = vmatprep.subr.bf16.mxu0 0
    %1098 = vmatpush2.bf16.msra.mxu0 0
    %1099 = vmatprep.mubr.bf16.mxu0 0
    %1100 = vmatmul.mubr.bf16.gmra.mxu0 %v1062
    %v1101 = vpop.f32.mrf.mxu0
    %v1102 = vadd.f32 0.0, %v1101
    %v1103 = vpop.f32.mrf.mxu0
    %v1104 = vpop.f32.mrf.mxu0
    %v1105 = vadd.f32 0.0, %v1104
    %v1106 = vpop.f32.mrf.mxu0
    %1107 = vmatprep.mubr.bf16.mxu0 0
    %1108 = vmatmul.mubr.bf16.gmra.mxu0 %v1065
    %v1109 = vpop.f32.mrf.mxu0
    %v1110 = vadd.f32 0.0, %v1109
    %v1111 = vpop.f32.mrf.mxu0
    %v1112 = vpop.f32.mrf.mxu0
    %v1113 = vadd.f32 0.0, %v1112
    %v1114 = vpop.f32.mrf.mxu0
    %1115 = vdwg.mxu0
    %v1116 = vadd.f32 %v980, %v1102
    %v1117 = vadd.f32 %v981, %v1105
    %v1118 = vadd.f32 %v982, %v1110
    %v1119 = vadd.f32 %v983, %v1113
    %s1120 = scalar_lea.vmem %s3, 96
    %v1121 = vld [vmem:[%s1120] sm:$0xf]
    %v1122 = vld [vmem:[%s1120 + $0x4] sm:$0xf]
    %v1123 = vld [vmem:[%s1120 + $0x8] sm:$0xf]
    %v1124 = vld [vmem:[%s1120 + $0xc] sm:$0xf]
    %v1129 = vunpack.c.l.b16 %v1121
    %v1130 = vunpack.c.l.b16 %v1122
    %v1131 = vunpack.c.l.b16 %v1123
    %v1132 = vunpack.c.l.b16 %v1124
    %v1133 = vpack.c.b16 %v1130, %v1129
    %v1134 = vpack.c.b16 %v1132, %v1131
    %1137 = vmatprep.subr.bf16.mxu0 0
    %1138 = vmatpush1.bf16.msra.mxu0 %v312
    %1139 = vmatprep.subr.bf16.mxu0 0
    %1140 = vmatpush1.bf16.msra.mxu0 %v311
    %1141 = vmatprep.subr.bf16.mxu0 0
    %1142 = vmatpush1.bf16.msra.mxu0 %v310
    %1143 = vmatprep.subr.bf16.mxu0 0
    %1144 = vmatpush1.bf16.msra.mxu0 %v309
    %1145 = vmatprep.subr.bf16.mxu0 0
    %1146 = vmatpush1.bf16.msra.mxu0 %v308
    %1147 = vmatprep.subr.bf16.mxu0 0
    %1148 = vmatpush1.bf16.msra.mxu0 %v307
    %1149 = vmatprep.subr.bf16.mxu0 0
    %1150 = vmatpush1.bf16.msra.mxu0 %v306
    %1151 = vmatprep.subr.bf16.mxu0 0
    %1152 = vmatpush1.bf16.msra.mxu0 %v305
    %1153 = vmatprep.subr.bf16.mxu0 0
    %1154 = vmatpush2.bf16.msra.mxu0 0
    %1155 = vmatprep.subr.bf16.mxu0 0
    %1156 = vmatpush2.bf16.msra.mxu0 0
    %1157 = vmatprep.subr.bf16.mxu0 0
    %1158 = vmatpush2.bf16.msra.mxu0 0
    %1159 = vmatprep.subr.bf16.mxu0 0
    %1160 = vmatpush2.bf16.msra.mxu0 0
    %1161 = vmatprep.subr.bf16.mxu0 0
    %1162 = vmatpush2.bf16.msra.mxu0 0
    %1163 = vmatprep.subr.bf16.mxu0 0
    %1164 = vmatpush2.bf16.msra.mxu0 0
    %1165 = vmatprep.subr.bf16.mxu0 0
    %1166 = vmatpush2.bf16.msra.mxu0 0
    %1167 = vmatprep.subr.bf16.mxu0 0
    %1168 = vmatpush2.bf16.msra.mxu0 0
    %1169 = vmatprep.mubr.bf16.mxu0 0
    %1170 = vmatmul.mubr.bf16.gmra.mxu0 %v1133
    %v1171 = vpop.f32.mrf.mxu0
    %v1172 = vadd.f32 0.0, %v1171
    %v1173 = vpop.f32.mrf.mxu0
    %v1174 = vpop.f32.mrf.mxu0
    %v1175 = vadd.f32 0.0, %v1174
    %v1176 = vpop.f32.mrf.mxu0
    %1177 = vmatprep.mubr.bf16.mxu0 0
    %1178 = vmatmul.mubr.bf16.gmra.mxu0 %v1134
    %v1179 = vpop.f32.mrf.mxu0
    %v1180 = vadd.f32 0.0, %v1179
    %v1181 = vpop.f32.mrf.mxu0
    %v1182 = vpop.f32.mrf.mxu0
    %v1183 = vadd.f32 0.0, %v1182
    %v1184 = vpop.f32.mrf.mxu0
    %1185 = vdwg.mxu0
    %v1186 = vpack.c.bf16 %v1175, %v1172
    %v1187 = vpack.c.bf16 %v1183, %v1180
    %s1188 = scalar_lea.vmem %s4, 48
    %v1189 = vld [vmem:[%s1188] sm:$0xf]
    %v1190 = vld [vmem:[%s1188 + $0x4] sm:$0xf]
    %v1193 = vunpack.c.l.b16 %v1189
    %v1194 = vunpack.c.l.b16 %v1190
    %v1195 = vpack.c.b16 %v1194, %v1193
    %v1198 = vsel %vm459, %v1186, 0
    %v1201 = vsel %vm459, %v1187, 0
    %1203 = vmatprep.subr.bf16.mxu0 0
    %1204 = vmatpush1.bf16.msra.mxu0 0
    %1205 = vmatprep.subr.bf16.mxu0 0
    %1206 = vmatpush1.bf16.msra.mxu0 0
    %1207 = vmatprep.subr.bf16.mxu0 0
    %1208 = vmatpush1.bf16.msra.mxu0 0
    %1209 = vmatprep.subr.bf16.mxu0 0
    %1210 = vmatpush1.bf16.msra.mxu0 0
    %1211 = vmatprep.subr.bf16.mxu0 0
    %1212 = vmatpush1.bf16.msra.mxu0 0
    %1213 = vmatprep.subr.bf16.mxu0 0
    %1214 = vmatpush1.bf16.msra.mxu0 0
    %1215 = vmatprep.subr.bf16.mxu0 0
    %1216 = vmatpush1.bf16.msra.mxu0 0
    %1217 = vmatprep.subr.bf16.mxu0 0
    %1218 = vmatpush1.bf16.msra.mxu0 %v1195
    %1219 = vmatprep.subr.bf16.mxu0 0
    %1220 = vmatpush2.bf16.msra.mxu0 0
    %1221 = vmatprep.subr.bf16.mxu0 0
    %1222 = vmatpush2.bf16.msra.mxu0 0
    %1223 = vmatprep.subr.bf16.mxu0 0
    %1224 = vmatpush2.bf16.msra.mxu0 0
    %1225 = vmatprep.subr.bf16.mxu0 0
    %1226 = vmatpush2.bf16.msra.mxu0 0
    %1227 = vmatprep.subr.bf16.mxu0 0
    %1228 = vmatpush2.bf16.msra.mxu0 0
    %1229 = vmatprep.subr.bf16.mxu0 0
    %1230 = vmatpush2.bf16.msra.mxu0 0
    %1231 = vmatprep.subr.bf16.mxu0 0
    %1232 = vmatpush2.bf16.msra.mxu0 0
    %1233 = vmatprep.subr.bf16.mxu0 0
    %1234 = vmatpush2.bf16.msra.mxu0 0
    %1235 = vmatprep.mubr.bf16.mxu0 0
    %1236 = vmatmul.mubr.bf16.gmra.mxu0 %v1198
    %v1237 = vpop.f32.mrf.mxu0
    %v1238 = vadd.f32 0.0, %v1237
    %v1239 = vpop.f32.mrf.mxu0
    %v1240 = vpop.f32.mrf.mxu0
    %v1241 = vadd.f32 0.0, %v1240
    %v1242 = vpop.f32.mrf.mxu0
    %1243 = vmatprep.mubr.bf16.mxu0 0
    %1244 = vmatmul.mubr.bf16.gmra.mxu0 %v1201
    %v1245 = vpop.f32.mrf.mxu0
    %v1246 = vadd.f32 0.0, %v1245
    %v1247 = vpop.f32.mrf.mxu0
    %v1248 = vpop.f32.mrf.mxu0
    %v1249 = vadd.f32 0.0, %v1248
    %v1250 = vpop.f32.mrf.mxu0
    %1251 = vdwg.mxu0
    %v1252 = vadd.f32 %v1116, %v1238
    %v1253 = vadd.f32 %v1117, %v1241
    %v1254 = vadd.f32 %v1118, %v1246
    %v1255 = vadd.f32 %v1119, %v1249
    %s1256 = scalar_lea.vmem %s3, 112
    %v1257 = vld [vmem:[%s1256] sm:$0xf]
    %v1258 = vld [vmem:[%s1256 + $0x4] sm:$0xf]
    %v1259 = vld [vmem:[%s1256 + $0x8] sm:$0xf]
    %v1260 = vld [vmem:[%s1256 + $0xc] sm:$0xf]
    %v1265 = vunpack.c.l.b16 %v1257
    %v1266 = vunpack.c.l.b16 %v1258
    %v1267 = vunpack.c.l.b16 %v1259
    %v1268 = vunpack.c.l.b16 %v1260
    %v1269 = vpack.c.b16 %v1266, %v1265
    %v1270 = vpack.c.b16 %v1268, %v1267
    %1273 = vmatprep.subr.bf16.mxu0 0
    %1274 = vmatpush1.bf16.msra.mxu0 %v312
    %1275 = vmatprep.subr.bf16.mxu0 0
    %1276 = vmatpush1.bf16.msra.mxu0 %v311
    %1277 = vmatprep.subr.bf16.mxu0 0
    %1278 = vmatpush1.bf16.msra.mxu0 %v310
    %1279 = vmatprep.subr.bf16.mxu0 0
    %1280 = vmatpush1.bf16.msra.mxu0 %v309
    %1281 = vmatprep.subr.bf16.mxu0 0
    %1282 = vmatpush1.bf16.msra.mxu0 %v308
    %1283 = vmatprep.subr.bf16.mxu0 0
    %1284 = vmatpush1.bf16.msra.mxu0 %v307
    %1285 = vmatprep.subr.bf16.mxu0 0
    %1286 = vmatpush1.bf16.msra.mxu0 %v306
    %1287 = vmatprep.subr.bf16.mxu0 0
    %1288 = vmatpush1.bf16.msra.mxu0 %v305
    %1289 = vmatprep.subr.bf16.mxu0 0
    %1290 = vmatpush2.bf16.msra.mxu0 0
    %1291 = vmatprep.subr.bf16.mxu0 0
    %1292 = vmatpush2.bf16.msra.mxu0 0
    %1293 = vmatprep.subr.bf16.mxu0 0
    %1294 = vmatpush2.bf16.msra.mxu0 0
    %1295 = vmatprep.subr.bf16.mxu0 0
    %1296 = vmatpush2.bf16.msra.mxu0 0
    %1297 = vmatprep.subr.bf16.mxu0 0
    %1298 = vmatpush2.bf16.msra.mxu0 0
    %1299 = vmatprep.subr.bf16.mxu0 0
    %1300 = vmatpush2.bf16.msra.mxu0 0
    %1301 = vmatprep.subr.bf16.mxu0 0
    %1302 = vmatpush2.bf16.msra.mxu0 0
    %1303 = vmatprep.subr.bf16.mxu0 0
    %1304 = vmatpush2.bf16.msra.mxu0 0
    %1305 = vmatprep.mubr.bf16.mxu0 0
    %1306 = vmatmul.mubr.bf16.gmra.mxu0 %v1269
    %v1307 = vpop.f32.mrf.mxu0
    %v1308 = vadd.f32 0.0, %v1307
    %v1309 = vpop.f32.mrf.mxu0
    %v1310 = vpop.f32.mrf.mxu0
    %v1311 = vadd.f32 0.0, %v1310
    %v1312 = vpop.f32.mrf.mxu0
    %1313 = vmatprep.mubr.bf16.mxu0 0
    %1314 = vmatmul.mubr.bf16.gmra.mxu0 %v1270
    %v1315 = vpop.f32.mrf.mxu0
    %v1316 = vadd.f32 0.0, %v1315
    %v1317 = vpop.f32.mrf.mxu0
    %v1318 = vpop.f32.mrf.mxu0
    %v1319 = vadd.f32 0.0, %v1318
    %v1320 = vpop.f32.mrf.mxu0
    %1321 = vdwg.mxu0
    %v1322 = vpack.c.bf16 %v1311, %v1308
    %v1323 = vpack.c.bf16 %v1319, %v1316
    %s1324 = scalar_lea.vmem %s4, 56
    %v1325 = vld [vmem:[%s1324] sm:$0xf]
    %v1326 = vld [vmem:[%s1324 + $0x4] sm:$0xf]
    %v1329 = vunpack.c.l.b16 %v1325
    %v1330 = vunpack.c.l.b16 %v1326
    %v1331 = vpack.c.b16 %v1330, %v1329
    %v1334 = vsel %vm459, %v1322, 0
    %v1337 = vsel %vm459, %v1323, 0
    %1339 = vmatprep.subr.bf16.mxu0 0
    %1340 = vmatpush1.bf16.msra.mxu0 0
    %1341 = vmatprep.subr.bf16.mxu0 0
    %1342 = vmatpush1.bf16.msra.mxu0 0
    %1343 = vmatprep.subr.bf16.mxu0 0
    %1344 = vmatpush1.bf16.msra.mxu0 0
    %1345 = vmatprep.subr.bf16.mxu0 0
    %1346 = vmatpush1.bf16.msra.mxu0 0
    %1347 = vmatprep.subr.bf16.mxu0 0
    %1348 = vmatpush1.bf16.msra.mxu0 0
    %1349 = vmatprep.subr.bf16.mxu0 0
    %1350 = vmatpush1.bf16.msra.mxu0 0
    %1351 = vmatprep.subr.bf16.mxu0 0
    %1352 = vmatpush1.bf16.msra.mxu0 0
    %1353 = vmatprep.subr.bf16.mxu0 0
    %1354 = vmatpush1.bf16.msra.mxu0 %v1331
    %1355 = vmatprep.subr.bf16.mxu0 0
    %1356 = vmatpush2.bf16.msra.mxu0 0
    %1357 = vmatprep.subr.bf16.mxu0 0
    %1358 = vmatpush2.bf16.msra.mxu0 0
    %1359 = vmatprep.subr.bf16.mxu0 0
    %1360 = vmatpush2.bf16.msra.mxu0 0
    %1361 = vmatprep.subr.bf16.mxu0 0
    %1362 = vmatpush2.bf16.msra.mxu0 0
    %1363 = vmatprep.subr.bf16.mxu0 0
    %1364 = vmatpush2.bf16.msra.mxu0 0
    %1365 = vmatprep.subr.bf16.mxu0 0
    %1366 = vmatpush2.bf16.msra.mxu0 0
    %1367 = vmatprep.subr.bf16.mxu0 0
    %1368 = vmatpush2.bf16.msra.mxu0 0
    %1369 = vmatprep.subr.bf16.mxu0 0
    %1370 = vmatpush2.bf16.msra.mxu0 0
    %1371 = vmatprep.mubr.bf16.mxu0 0
    %1372 = vmatmul.mubr.bf16.gmra.mxu0 %v1334
    %v1373 = vpop.f32.mrf.mxu0
    %v1374 = vadd.f32 0.0, %v1373
    %v1375 = vpop.f32.mrf.mxu0
    %v1376 = vpop.f32.mrf.mxu0
    %v1377 = vadd.f32 0.0, %v1376
    %v1378 = vpop.f32.mrf.mxu0
    %1379 = vmatprep.mubr.bf16.mxu0 0
    %1380 = vmatmul.mubr.bf16.gmra.mxu0 %v1337
    %v1381 = vpop.f32.mrf.mxu0
    %v1382 = vadd.f32 0.0, %v1381
    %v1383 = vpop.f32.mrf.mxu0
    %v1384 = vpop.f32.mrf.mxu0
    %v1385 = vadd.f32 0.0, %v1384
    %v1386 = vpop.f32.mrf.mxu0
    %1387 = vdwg.mxu0
    %v1388 = vadd.f32 %v1252, %v1374
    %v1389 = vadd.f32 %v1253, %v1377
    %v1390 = vadd.f32 %v1254, %v1382
    %v1391 = vadd.f32 %v1255, %v1385
    %s1392 = scalar_lea.vmem %s3, 128
    %v1393 = vld [vmem:[%s1392] sm:$0xf]
    %v1394 = vld [vmem:[%s1392 + $0x4] sm:$0xf]
    %v1395 = vld [vmem:[%s1392 + $0x8] sm:$0xf]
    %v1396 = vld [vmem:[%s1392 + $0xc] sm:$0xf]
    %v1401 = vunpack.c.l.b16 %v1393
    %v1402 = vunpack.c.l.b16 %v1394
    %v1403 = vunpack.c.l.b16 %v1395
    %v1404 = vunpack.c.l.b16 %v1396
    %v1405 = vpack.c.b16 %v1402, %v1401
    %v1406 = vpack.c.b16 %v1404, %v1403
    %1409 = vmatprep.subr.bf16.mxu0 0
    %1410 = vmatpush1.bf16.msra.mxu0 %v312
    %1411 = vmatprep.subr.bf16.mxu0 0
    %1412 = vmatpush1.bf16.msra.mxu0 %v311
    %1413 = vmatprep.subr.bf16.mxu0 0
    %1414 = vmatpush1.bf16.msra.mxu0 %v310
    %1415 = vmatprep.subr.bf16.mxu0 0
    %1416 = vmatpush1.bf16.msra.mxu0 %v309
    %1417 = vmatprep.subr.bf16.mxu0 0
    %1418 = vmatpush1.bf16.msra.mxu0 %v308
    %1419 = vmatprep.subr.bf16.mxu0 0
    %1420 = vmatpush1.bf16.msra.mxu0 %v307
    %1421 = vmatprep.subr.bf16.mxu0 0
    %1422 = vmatpush1.bf16.msra.mxu0 %v306
    %1423 = vmatprep.subr.bf16.mxu0 0
    %1424 = vmatpush1.bf16.msra.mxu0 %v305
    %1425 = vmatprep.subr.bf16.mxu0 0
    %1426 = vmatpush2.bf16.msra.mxu0 0
    %1427 = vmatprep.subr.bf16.mxu0 0
    %1428 = vmatpush2.bf16.msra.mxu0 0
    %1429 = vmatprep.subr.bf16.mxu0 0
    %1430 = vmatpush2.bf16.msra.mxu0 0
    %1431 = vmatprep.subr.bf16.mxu0 0
    %1432 = vmatpush2.bf16.msra.mxu0 0
    %1433 = vmatprep.subr.bf16.mxu0 0
    %1434 = vmatpush2.bf16.msra.mxu0 0
    %1435 = vmatprep.subr.bf16.mxu0 0
    %1436 = vmatpush2.bf16.msra.mxu0 0
    %1437 = vmatprep.subr.bf16.mxu0 0
    %1438 = vmatpush2.bf16.msra.mxu0 0
    %1439 = vmatprep.subr.bf16.mxu0 0
    %1440 = vmatpush2.bf16.msra.mxu0 0
    %1441 = vmatprep.mubr.bf16.mxu0 0
    %1442 = vmatmul.mubr.bf16.gmra.mxu0 %v1405
    %v1443 = vpop.f32.mrf.mxu0
    %v1444 = vadd.f32 0.0, %v1443
    %v1445 = vpop.f32.mrf.mxu0
    %v1446 = vpop.f32.mrf.mxu0
    %v1447 = vadd.f32 0.0, %v1446
    %v1448 = vpop.f32.mrf.mxu0
    %1449 = vmatprep.mubr.bf16.mxu0 0
    %1450 = vmatmul.mubr.bf16.gmra.mxu0 %v1406
    %v1451 = vpop.f32.mrf.mxu0
    %v1452 = vadd.f32 0.0, %v1451
    %v1453 = vpop.f32.mrf.mxu0
    %v1454 = vpop.f32.mrf.mxu0
    %v1455 = vadd.f32 0.0, %v1454
    %v1456 = vpop.f32.mrf.mxu0
    %1457 = vdwg.mxu0
    %v1458 = vpack.c.bf16 %v1447, %v1444
    %v1459 = vpack.c.bf16 %v1455, %v1452
    %s1460 = scalar_lea.vmem %s4, 64
    %v1461 = vld [vmem:[%s1460] sm:$0xf]
    %v1462 = vld [vmem:[%s1460 + $0x4] sm:$0xf]
    %v1465 = vunpack.c.l.b16 %v1461
    %v1466 = vunpack.c.l.b16 %v1462
    %v1467 = vpack.c.b16 %v1466, %v1465
    %v1470 = vsel %vm459, %v1458, 0
    %v1473 = vsel %vm459, %v1459, 0
    %1475 = vmatprep.subr.bf16.mxu0 0
    %1476 = vmatpush1.bf16.msra.mxu0 0
    %1477 = vmatprep.subr.bf16.mxu0 0
    %1478 = vmatpush1.bf16.msra.mxu0 0
    %1479 = vmatprep.subr.bf16.mxu0 0
    %1480 = vmatpush1.bf16.msra.mxu0 0
    %1481 = vmatprep.subr.bf16.mxu0 0
    %1482 = vmatpush1.bf16.msra.mxu0 0
    %1483 = vmatprep.subr.bf16.mxu0 0
    %1484 = vmatpush1.bf16.msra.mxu0 0
    %1485 = vmatprep.subr.bf16.mxu0 0
    %1486 = vmatpush1.bf16.msra.mxu0 0
    %1487 = vmatprep.subr.bf16.mxu0 0
    %1488 = vmatpush1.bf16.msra.mxu0 0
    %1489 = vmatprep.subr.bf16.mxu0 0
    %1490 = vmatpush1.bf16.msra.mxu0 %v1467
    %1491 = vmatprep.subr.bf16.mxu0 0
    %1492 = vmatpush2.bf16.msra.mxu0 0
    %1493 = vmatprep.subr.bf16.mxu0 0
    %1494 = vmatpush2.bf16.msra.mxu0 0
    %1495 = vmatprep.subr.bf16.mxu0 0
    %1496 = vmatpush2.bf16.msra.mxu0 0
    %1497 = vmatprep.subr.bf16.mxu0 0
    %1498 = vmatpush2.bf16.msra.mxu0 0
    %1499 = vmatprep.subr.bf16.mxu0 0
    %1500 = vmatpush2.bf16.msra.mxu0 0
    %1501 = vmatprep.subr.bf16.mxu0 0
    %1502 = vmatpush2.bf16.msra.mxu0 0
    %1503 = vmatprep.subr.bf16.mxu0 0
    %1504 = vmatpush2.bf16.msra.mxu0 0
    %1505 = vmatprep.subr.bf16.mxu0 0
    %1506 = vmatpush2.bf16.msra.mxu0 0
    %1507 = vmatprep.mubr.bf16.mxu0 0
    %1508 = vmatmul.mubr.bf16.gmra.mxu0 %v1470
    %v1509 = vpop.f32.mrf.mxu0
    %v1510 = vadd.f32 0.0, %v1509
    %v1511 = vpop.f32.mrf.mxu0
    %v1512 = vpop.f32.mrf.mxu0
    %v1513 = vadd.f32 0.0, %v1512
    %v1514 = vpop.f32.mrf.mxu0
    %1515 = vmatprep.mubr.bf16.mxu0 0
    %1516 = vmatmul.mubr.bf16.gmra.mxu0 %v1473
    %v1517 = vpop.f32.mrf.mxu0
    %v1518 = vadd.f32 0.0, %v1517
    %v1519 = vpop.f32.mrf.mxu0
    %v1520 = vpop.f32.mrf.mxu0
    %v1521 = vadd.f32 0.0, %v1520
    %v1522 = vpop.f32.mrf.mxu0
    %1523 = vdwg.mxu0
    %v1524 = vadd.f32 %v1388, %v1510
    %v1525 = vadd.f32 %v1389, %v1513
    %v1526 = vadd.f32 %v1390, %v1518
    %v1527 = vadd.f32 %v1391, %v1521
    %s1528 = scalar_lea.vmem %s3, 144
    %v1529 = vld [vmem:[%s1528] sm:$0xf]
    %v1530 = vld [vmem:[%s1528 + $0x4] sm:$0xf]
    %v1531 = vld [vmem:[%s1528 + $0x8] sm:$0xf]
    %v1532 = vld [vmem:[%s1528 + $0xc] sm:$0xf]
    %v1537 = vunpack.c.l.b16 %v1529
    %v1538 = vunpack.c.l.b16 %v1530
    %v1539 = vunpack.c.l.b16 %v1531
    %v1540 = vunpack.c.l.b16 %v1532
    %v1541 = vpack.c.b16 %v1538, %v1537
    %v1542 = vpack.c.b16 %v1540, %v1539
    %1545 = vmatprep.subr.bf16.mxu0 0
    %1546 = vmatpush1.bf16.msra.mxu0 %v312
    %1547 = vmatprep.subr.bf16.mxu0 0
    %1548 = vmatpush1.bf16.msra.mxu0 %v311
    %1549 = vmatprep.subr.bf16.mxu0 0
    %1550 = vmatpush1.bf16.msra.mxu0 %v310
    %1551 = vmatprep.subr.bf16.mxu0 0
    %1552 = vmatpush1.bf16.msra.mxu0 %v309
    %1553 = vmatprep.subr.bf16.mxu0 0
    %1554 = vmatpush1.bf16.msra.mxu0 %v308
    %1555 = vmatprep.subr.bf16.mxu0 0
    %1556 = vmatpush1.bf16.msra.mxu0 %v307
    %1557 = vmatprep.subr.bf16.mxu0 0
    %1558 = vmatpush1.bf16.msra.mxu0 %v306
    %1559 = vmatprep.subr.bf16.mxu0 0
    %1560 = vmatpush1.bf16.msra.mxu0 %v305
    %1561 = vmatprep.subr.bf16.mxu0 0
    %1562 = vmatpush2.bf16.msra.mxu0 0
    %1563 = vmatprep.subr.bf16.mxu0 0
    %1564 = vmatpush2.bf16.msra.mxu0 0
    %1565 = vmatprep.subr.bf16.mxu0 0
    %1566 = vmatpush2.bf16.msra.mxu0 0
    %1567 = vmatprep.subr.bf16.mxu0 0
    %1568 = vmatpush2.bf16.msra.mxu0 0
    %1569 = vmatprep.subr.bf16.mxu0 0
    %1570 = vmatpush2.bf16.msra.mxu0 0
    %1571 = vmatprep.subr.bf16.mxu0 0
    %1572 = vmatpush2.bf16.msra.mxu0 0
    %1573 = vmatprep.subr.bf16.mxu0 0
    %1574 = vmatpush2.bf16.msra.mxu0 0
    %1575 = vmatprep.subr.bf16.mxu0 0
    %1576 = vmatpush2.bf16.msra.mxu0 0
    %1577 = vmatprep.mubr.bf16.mxu0 0
    %1578 = vmatmul.mubr.bf16.gmra.mxu0 %v1541
    %v1579 = vpop.f32.mrf.mxu0
    %v1580 = vadd.f32 0.0, %v1579
    %v1581 = vpop.f32.mrf.mxu0
    %v1582 = vpop.f32.mrf.mxu0
    %v1583 = vadd.f32 0.0, %v1582
    %v1584 = vpop.f32.mrf.mxu0
    %1585 = vmatprep.mubr.bf16.mxu0 0
    %1586 = vmatmul.mubr.bf16.gmra.mxu0 %v1542
    %v1587 = vpop.f32.mrf.mxu0
    %v1588 = vadd.f32 0.0, %v1587
    %v1589 = vpop.f32.mrf.mxu0
    %v1590 = vpop.f32.mrf.mxu0
    %v1591 = vadd.f32 0.0, %v1590
    %v1592 = vpop.f32.mrf.mxu0
    %1593 = vdwg.mxu0
    %v1594 = vpack.c.bf16 %v1583, %v1580
    %v1595 = vpack.c.bf16 %v1591, %v1588
    %s1596 = scalar_lea.vmem %s4, 72
    %v1597 = vld [vmem:[%s1596] sm:$0xf]
    %v1598 = vld [vmem:[%s1596 + $0x4] sm:$0xf]
    %v1601 = vunpack.c.l.b16 %v1597
    %v1602 = vunpack.c.l.b16 %v1598
    %v1603 = vpack.c.b16 %v1602, %v1601
    %v1606 = vsel %vm459, %v1594, 0
    %v1609 = vsel %vm459, %v1595, 0
    %1611 = vmatprep.subr.bf16.mxu0 0
    %1612 = vmatpush1.bf16.msra.mxu0 0
    %1613 = vmatprep.subr.bf16.mxu0 0
    %1614 = vmatpush1.bf16.msra.mxu0 0
    %1615 = vmatprep.subr.bf16.mxu0 0
    %1616 = vmatpush1.bf16.msra.mxu0 0
    %1617 = vmatprep.subr.bf16.mxu0 0
    %1618 = vmatpush1.bf16.msra.mxu0 0
    %1619 = vmatprep.subr.bf16.mxu0 0
    %1620 = vmatpush1.bf16.msra.mxu0 0
    %1621 = vmatprep.subr.bf16.mxu0 0
    %1622 = vmatpush1.bf16.msra.mxu0 0
    %1623 = vmatprep.subr.bf16.mxu0 0
    %1624 = vmatpush1.bf16.msra.mxu0 0
    %1625 = vmatprep.subr.bf16.mxu0 0
    %1626 = vmatpush1.bf16.msra.mxu0 %v1603
    %1627 = vmatprep.subr.bf16.mxu0 0
    %1628 = vmatpush2.bf16.msra.mxu0 0
    %1629 = vmatprep.subr.bf16.mxu0 0
    %1630 = vmatpush2.bf16.msra.mxu0 0
    %1631 = vmatprep.subr.bf16.mxu0 0
    %1632 = vmatpush2.bf16.msra.mxu0 0
    %1633 = vmatprep.subr.bf16.mxu0 0
    %1634 = vmatpush2.bf16.msra.mxu0 0
    %1635 = vmatprep.subr.bf16.mxu0 0
    %1636 = vmatpush2.bf16.msra.mxu0 0
    %1637 = vmatprep.subr.bf16.mxu0 0
    %1638 = vmatpush2.bf16.msra.mxu0 0
    %1639 = vmatprep.subr.bf16.mxu0 0
    %1640 = vmatpush2.bf16.msra.mxu0 0
    %1641 = vmatprep.subr.bf16.mxu0 0
    %1642 = vmatpush2.bf16.msra.mxu0 0
    %1643 = vmatprep.mubr.bf16.mxu0 0
    %1644 = vmatmul.mubr.bf16.gmra.mxu0 %v1606
    %v1645 = vpop.f32.mrf.mxu0
    %v1646 = vadd.f32 0.0, %v1645
    %v1647 = vpop.f32.mrf.mxu0
    %v1648 = vpop.f32.mrf.mxu0
    %v1649 = vadd.f32 0.0, %v1648
    %v1650 = vpop.f32.mrf.mxu0
    %1651 = vmatprep.mubr.bf16.mxu0 0
    %1652 = vmatmul.mubr.bf16.gmra.mxu0 %v1609
    %v1653 = vpop.f32.mrf.mxu0
    %v1654 = vadd.f32 0.0, %v1653
    %v1655 = vpop.f32.mrf.mxu0
    %v1656 = vpop.f32.mrf.mxu0
    %v1657 = vadd.f32 0.0, %v1656
    %v1658 = vpop.f32.mrf.mxu0
    %1659 = vdwg.mxu0
    %v1660 = vadd.f32 %v1524, %v1646
    %v1661 = vadd.f32 %v1525, %v1649
    %v1662 = vadd.f32 %v1526, %v1654
    %v1663 = vadd.f32 %v1527, %v1657
    %s1664 = scalar_lea.vmem %s3, 160
    %v1665 = vld [vmem:[%s1664] sm:$0xf]
    %v1666 = vld [vmem:[%s1664 + $0x4] sm:$0xf]
    %v1667 = vld [vmem:[%s1664 + $0x8] sm:$0xf]
    %v1668 = vld [vmem:[%s1664 + $0xc] sm:$0xf]
    %v1673 = vunpack.c.l.b16 %v1665
    %v1674 = vunpack.c.l.b16 %v1666
    %v1675 = vunpack.c.l.b16 %v1667
    %v1676 = vunpack.c.l.b16 %v1668
    %v1677 = vpack.c.b16 %v1674, %v1673
    %v1678 = vpack.c.b16 %v1676, %v1675
    %1681 = vmatprep.subr.bf16.mxu0 0
    %1682 = vmatpush1.bf16.msra.mxu0 %v312
    %1683 = vmatprep.subr.bf16.mxu0 0
    %1684 = vmatpush1.bf16.msra.mxu0 %v311
    %1685 = vmatprep.subr.bf16.mxu0 0
    %1686 = vmatpush1.bf16.msra.mxu0 %v310
    %1687 = vmatprep.subr.bf16.mxu0 0
    %1688 = vmatpush1.bf16.msra.mxu0 %v309
    %1689 = vmatprep.subr.bf16.mxu0 0
    %1690 = vmatpush1.bf16.msra.mxu0 %v308
    %1691 = vmatprep.subr.bf16.mxu0 0
    %1692 = vmatpush1.bf16.msra.mxu0 %v307
    %1693 = vmatprep.subr.bf16.mxu0 0
    %1694 = vmatpush1.bf16.msra.mxu0 %v306
    %1695 = vmatprep.subr.bf16.mxu0 0
    %1696 = vmatpush1.bf16.msra.mxu0 %v305
    %1697 = vmatprep.subr.bf16.mxu0 0
    %1698 = vmatpush2.bf16.msra.mxu0 0
    %1699 = vmatprep.subr.bf16.mxu0 0
    %1700 = vmatpush2.bf16.msra.mxu0 0
    %1701 = vmatprep.subr.bf16.mxu0 0
    %1702 = vmatpush2.bf16.msra.mxu0 0
    %1703 = vmatprep.subr.bf16.mxu0 0
    %1704 = vmatpush2.bf16.msra.mxu0 0
    %1705 = vmatprep.subr.bf16.mxu0 0
    %1706 = vmatpush2.bf16.msra.mxu0 0
    %1707 = vmatprep.subr.bf16.mxu0 0
    %1708 = vmatpush2.bf16.msra.mxu0 0
    %1709 = vmatprep.subr.bf16.mxu0 0
    %1710 = vmatpush2.bf16.msra.mxu0 0
    %1711 = vmatprep.subr.bf16.mxu0 0
    %1712 = vmatpush2.bf16.msra.mxu0 0
    %1713 = vmatprep.mubr.bf16.mxu0 0
    %1714 = vmatmul.mubr.bf16.gmra.mxu0 %v1677
    %v1715 = vpop.f32.mrf.mxu0
    %v1716 = vadd.f32 0.0, %v1715
    %v1717 = vpop.f32.mrf.mxu0
    %v1718 = vpop.f32.mrf.mxu0
    %v1719 = vadd.f32 0.0, %v1718
    %v1720 = vpop.f32.mrf.mxu0
    %1721 = vmatprep.mubr.bf16.mxu0 0
    %1722 = vmatmul.mubr.bf16.gmra.mxu0 %v1678
    %v1723 = vpop.f32.mrf.mxu0
    %v1724 = vadd.f32 0.0, %v1723
    %v1725 = vpop.f32.mrf.mxu0
    %v1726 = vpop.f32.mrf.mxu0
    %v1727 = vadd.f32 0.0, %v1726
    %v1728 = vpop.f32.mrf.mxu0
    %1729 = vdwg.mxu0
    %v1730 = vpack.c.bf16 %v1719, %v1716
    %v1731 = vpack.c.bf16 %v1727, %v1724
    %s1732 = scalar_lea.vmem %s4, 80
    %v1733 = vld [vmem:[%s1732] sm:$0xf]
    %v1734 = vld [vmem:[%s1732 + $0x4] sm:$0xf]
    %v1737 = vunpack.c.l.b16 %v1733
    %v1738 = vunpack.c.l.b16 %v1734
    %v1739 = vpack.c.b16 %v1738, %v1737
    %v1742 = vsel %vm459, %v1730, 0
    %v1745 = vsel %vm459, %v1731, 0
    %1747 = vmatprep.subr.bf16.mxu0 0
    %1748 = vmatpush1.bf16.msra.mxu0 0
    %1749 = vmatprep.subr.bf16.mxu0 0
    %1750 = vmatpush1.bf16.msra.mxu0 0
    %1751 = vmatprep.subr.bf16.mxu0 0
    %1752 = vmatpush1.bf16.msra.mxu0 0
    %1753 = vmatprep.subr.bf16.mxu0 0
    %1754 = vmatpush1.bf16.msra.mxu0 0
    %1755 = vmatprep.subr.bf16.mxu0 0
    %1756 = vmatpush1.bf16.msra.mxu0 0
    %1757 = vmatprep.subr.bf16.mxu0 0
    %1758 = vmatpush1.bf16.msra.mxu0 0
    %1759 = vmatprep.subr.bf16.mxu0 0
    %1760 = vmatpush1.bf16.msra.mxu0 0
    %1761 = vmatprep.subr.bf16.mxu0 0
    %1762 = vmatpush1.bf16.msra.mxu0 %v1739
    %1763 = vmatprep.subr.bf16.mxu0 0
    %1764 = vmatpush2.bf16.msra.mxu0 0
    %1765 = vmatprep.subr.bf16.mxu0 0
    %1766 = vmatpush2.bf16.msra.mxu0 0
    %1767 = vmatprep.subr.bf16.mxu0 0
    %1768 = vmatpush2.bf16.msra.mxu0 0
    %1769 = vmatprep.subr.bf16.mxu0 0
    %1770 = vmatpush2.bf16.msra.mxu0 0
    %1771 = vmatprep.subr.bf16.mxu0 0
    %1772 = vmatpush2.bf16.msra.mxu0 0
    %1773 = vmatprep.subr.bf16.mxu0 0
    %1774 = vmatpush2.bf16.msra.mxu0 0
    %1775 = vmatprep.subr.bf16.mxu0 0
    %1776 = vmatpush2.bf16.msra.mxu0 0
    %1777 = vmatprep.subr.bf16.mxu0 0
    %1778 = vmatpush2.bf16.msra.mxu0 0
    %1779 = vmatprep.mubr.bf16.mxu0 0
    %1780 = vmatmul.mubr.bf16.gmra.mxu0 %v1742
    %v1781 = vpop.f32.mrf.mxu0
    %v1782 = vadd.f32 0.0, %v1781
    %v1783 = vpop.f32.mrf.mxu0
    %v1784 = vpop.f32.mrf.mxu0
    %v1785 = vadd.f32 0.0, %v1784
    %v1786 = vpop.f32.mrf.mxu0
    %1787 = vmatprep.mubr.bf16.mxu0 0
    %1788 = vmatmul.mubr.bf16.gmra.mxu0 %v1745
    %v1789 = vpop.f32.mrf.mxu0
    %v1790 = vadd.f32 0.0, %v1789
    %v1791 = vpop.f32.mrf.mxu0
    %v1792 = vpop.f32.mrf.mxu0
    %v1793 = vadd.f32 0.0, %v1792
    %v1794 = vpop.f32.mrf.mxu0
    %1795 = vdwg.mxu0
    %v1796 = vadd.f32 %v1660, %v1782
    %v1797 = vadd.f32 %v1661, %v1785
    %v1798 = vadd.f32 %v1662, %v1790
    %v1799 = vadd.f32 %v1663, %v1793
    %s1800 = scalar_lea.vmem %s3, 176
    %v1801 = vld [vmem:[%s1800] sm:$0xf]
    %v1802 = vld [vmem:[%s1800 + $0x4] sm:$0xf]
    %v1803 = vld [vmem:[%s1800 + $0x8] sm:$0xf]
    %v1804 = vld [vmem:[%s1800 + $0xc] sm:$0xf]
    %v1809 = vunpack.c.l.b16 %v1801
    %v1810 = vunpack.c.l.b16 %v1802
    %v1811 = vunpack.c.l.b16 %v1803
    %v1812 = vunpack.c.l.b16 %v1804
    %v1813 = vpack.c.b16 %v1810, %v1809
    %v1814 = vpack.c.b16 %v1812, %v1811
    %1817 = vmatprep.subr.bf16.mxu0 0
    %1818 = vmatpush1.bf16.msra.mxu0 %v312
    %1819 = vmatprep.subr.bf16.mxu0 0
    %1820 = vmatpush1.bf16.msra.mxu0 %v311
    %1821 = vmatprep.subr.bf16.mxu0 0
    %1822 = vmatpush1.bf16.msra.mxu0 %v310
    %1823 = vmatprep.subr.bf16.mxu0 0
    %1824 = vmatpush1.bf16.msra.mxu0 %v309
    %1825 = vmatprep.subr.bf16.mxu0 0
    %1826 = vmatpush1.bf16.msra.mxu0 %v308
    %1827 = vmatprep.subr.bf16.mxu0 0
    %1828 = vmatpush1.bf16.msra.mxu0 %v307
    %1829 = vmatprep.subr.bf16.mxu0 0
    %1830 = vmatpush1.bf16.msra.mxu0 %v306
    %1831 = vmatprep.subr.bf16.mxu0 0
    %1832 = vmatpush1.bf16.msra.mxu0 %v305
    %1833 = vmatprep.subr.bf16.mxu0 0
    %1834 = vmatpush2.bf16.msra.mxu0 0
    %1835 = vmatprep.subr.bf16.mxu0 0
    %1836 = vmatpush2.bf16.msra.mxu0 0
    %1837 = vmatprep.subr.bf16.mxu0 0
    %1838 = vmatpush2.bf16.msra.mxu0 0
    %1839 = vmatprep.subr.bf16.mxu0 0
    %1840 = vmatpush2.bf16.msra.mxu0 0
    %1841 = vmatprep.subr.bf16.mxu0 0
    %1842 = vmatpush2.bf16.msra.mxu0 0
    %1843 = vmatprep.subr.bf16.mxu0 0
    %1844 = vmatpush2.bf16.msra.mxu0 0
    %1845 = vmatprep.subr.bf16.mxu0 0
    %1846 = vmatpush2.bf16.msra.mxu0 0
    %1847 = vmatprep.subr.bf16.mxu0 0
    %1848 = vmatpush2.bf16.msra.mxu0 0
    %1849 = vmatprep.mubr.bf16.mxu0 0
    %1850 = vmatmul.mubr.bf16.gmra.mxu0 %v1813
    %v1851 = vpop.f32.mrf.mxu0
    %v1852 = vadd.f32 0.0, %v1851
    %v1853 = vpop.f32.mrf.mxu0
    %v1854 = vpop.f32.mrf.mxu0
    %v1855 = vadd.f32 0.0, %v1854
    %v1856 = vpop.f32.mrf.mxu0
    %1857 = vmatprep.mubr.bf16.mxu0 0
    %1858 = vmatmul.mubr.bf16.gmra.mxu0 %v1814
    %v1859 = vpop.f32.mrf.mxu0
    %v1860 = vadd.f32 0.0, %v1859
    %v1861 = vpop.f32.mrf.mxu0
    %v1862 = vpop.f32.mrf.mxu0
    %v1863 = vadd.f32 0.0, %v1862
    %v1864 = vpop.f32.mrf.mxu0
    %1865 = vdwg.mxu0
    %v1866 = vpack.c.bf16 %v1855, %v1852
    %v1867 = vpack.c.bf16 %v1863, %v1860
    %s1868 = scalar_lea.vmem %s4, 88
    %v1869 = vld [vmem:[%s1868] sm:$0xf]
    %v1870 = vld [vmem:[%s1868 + $0x4] sm:$0xf]
    %v1873 = vunpack.c.l.b16 %v1869
    %v1874 = vunpack.c.l.b16 %v1870
    %v1875 = vpack.c.b16 %v1874, %v1873
    %v1878 = vsel %vm459, %v1866, 0
    %v1881 = vsel %vm459, %v1867, 0
    %1883 = vmatprep.subr.bf16.mxu0 0
    %1884 = vmatpush1.bf16.msra.mxu0 0
    %1885 = vmatprep.subr.bf16.mxu0 0
    %1886 = vmatpush1.bf16.msra.mxu0 0
    %1887 = vmatprep.subr.bf16.mxu0 0
    %1888 = vmatpush1.bf16.msra.mxu0 0
    %1889 = vmatprep.subr.bf16.mxu0 0
    %1890 = vmatpush1.bf16.msra.mxu0 0
    %1891 = vmatprep.subr.bf16.mxu0 0
    %1892 = vmatpush1.bf16.msra.mxu0 0
    %1893 = vmatprep.subr.bf16.mxu0 0
    %1894 = vmatpush1.bf16.msra.mxu0 0
    %1895 = vmatprep.subr.bf16.mxu0 0
    %1896 = vmatpush1.bf16.msra.mxu0 0
    %1897 = vmatprep.subr.bf16.mxu0 0
    %1898 = vmatpush1.bf16.msra.mxu0 %v1875
    %1899 = vmatprep.subr.bf16.mxu0 0
    %1900 = vmatpush2.bf16.msra.mxu0 0
    %1901 = vmatprep.subr.bf16.mxu0 0
    %1902 = vmatpush2.bf16.msra.mxu0 0
    %1903 = vmatprep.subr.bf16.mxu0 0
    %1904 = vmatpush2.bf16.msra.mxu0 0
    %1905 = vmatprep.subr.bf16.mxu0 0
    %1906 = vmatpush2.bf16.msra.mxu0 0
    %1907 = vmatprep.subr.bf16.mxu0 0
    %1908 = vmatpush2.bf16.msra.mxu0 0
    %1909 = vmatprep.subr.bf16.mxu0 0
    %1910 = vmatpush2.bf16.msra.mxu0 0
    %1911 = vmatprep.subr.bf16.mxu0 0
    %1912 = vmatpush2.bf16.msra.mxu0 0
    %1913 = vmatprep.subr.bf16.mxu0 0
    %1914 = vmatpush2.bf16.msra.mxu0 0
    %1915 = vmatprep.mubr.bf16.mxu0 0
    %1916 = vmatmul.mubr.bf16.gmra.mxu0 %v1878
    %v1917 = vpop.f32.mrf.mxu0
    %v1918 = vadd.f32 0.0, %v1917
    %v1919 = vpop.f32.mrf.mxu0
    %v1920 = vpop.f32.mrf.mxu0
    %v1921 = vadd.f32 0.0, %v1920
    %v1922 = vpop.f32.mrf.mxu0
    %1923 = vmatprep.mubr.bf16.mxu0 0
    %1924 = vmatmul.mubr.bf16.gmra.mxu0 %v1881
    %v1925 = vpop.f32.mrf.mxu0
    %v1926 = vadd.f32 0.0, %v1925
    %v1927 = vpop.f32.mrf.mxu0
    %v1928 = vpop.f32.mrf.mxu0
    %v1929 = vadd.f32 0.0, %v1928
    %v1930 = vpop.f32.mrf.mxu0
    %1931 = vdwg.mxu0
    %v1932 = vadd.f32 %v1796, %v1918
    %v1933 = vadd.f32 %v1797, %v1921
    %v1934 = vadd.f32 %v1798, %v1926
    %v1935 = vadd.f32 %v1799, %v1929
    %s1936 = scalar_lea.vmem %s3, 192
    %v1937 = vld [vmem:[%s1936] sm:$0xf]
    %v1938 = vld [vmem:[%s1936 + $0x4] sm:$0xf]
    %v1939 = vld [vmem:[%s1936 + $0x8] sm:$0xf]
    %v1940 = vld [vmem:[%s1936 + $0xc] sm:$0xf]
    %v1945 = vunpack.c.l.b16 %v1937
    %v1946 = vunpack.c.l.b16 %v1938
    %v1947 = vunpack.c.l.b16 %v1939
    %v1948 = vunpack.c.l.b16 %v1940
    %v1949 = vpack.c.b16 %v1946, %v1945
    %v1950 = vpack.c.b16 %v1948, %v1947
    %1953 = vmatprep.subr.bf16.mxu0 0
    %1954 = vmatpush1.bf16.msra.mxu0 %v312
    %1955 = vmatprep.subr.bf16.mxu0 0
    %1956 = vmatpush1.bf16.msra.mxu0 %v311
    %1957 = vmatprep.subr.bf16.mxu0 0
    %1958 = vmatpush1.bf16.msra.mxu0 %v310
    %1959 = vmatprep.subr.bf16.mxu0 0
    %1960 = vmatpush1.bf16.msra.mxu0 %v309
    %1961 = vmatprep.subr.bf16.mxu0 0
    %1962 = vmatpush1.bf16.msra.mxu0 %v308
    %1963 = vmatprep.subr.bf16.mxu0 0
    %1964 = vmatpush1.bf16.msra.mxu0 %v307
    %1965 = vmatprep.subr.bf16.mxu0 0
    %1966 = vmatpush1.bf16.msra.mxu0 %v306
    %1967 = vmatprep.subr.bf16.mxu0 0
    %1968 = vmatpush1.bf16.msra.mxu0 %v305
    %1969 = vmatprep.subr.bf16.mxu0 0
    %1970 = vmatpush2.bf16.msra.mxu0 0
    %1971 = vmatprep.subr.bf16.mxu0 0
    %1972 = vmatpush2.bf16.msra.mxu0 0
    %1973 = vmatprep.subr.bf16.mxu0 0
    %1974 = vmatpush2.bf16.msra.mxu0 0
    %1975 = vmatprep.subr.bf16.mxu0 0
    %1976 = vmatpush2.bf16.msra.mxu0 0
    %1977 = vmatprep.subr.bf16.mxu0 0
    %1978 = vmatpush2.bf16.msra.mxu0 0
    %1979 = vmatprep.subr.bf16.mxu0 0
    %1980 = vmatpush2.bf16.msra.mxu0 0
    %1981 = vmatprep.subr.bf16.mxu0 0
    %1982 = vmatpush2.bf16.msra.mxu0 0
    %1983 = vmatprep.subr.bf16.mxu0 0
    %1984 = vmatpush2.bf16.msra.mxu0 0
    %1985 = vmatprep.mubr.bf16.mxu0 0
    %1986 = vmatmul.mubr.bf16.gmra.mxu0 %v1949
    %v1987 = vpop.f32.mrf.mxu0
    %v1988 = vadd.f32 0.0, %v1987
    %v1989 = vpop.f32.mrf.mxu0
    %v1990 = vpop.f32.mrf.mxu0
    %v1991 = vadd.f32 0.0, %v1990
    %v1992 = vpop.f32.mrf.mxu0
    %1993 = vmatprep.mubr.bf16.mxu0 0
    %1994 = vmatmul.mubr.bf16.gmra.mxu0 %v1950
    %v1995 = vpop.f32.mrf.mxu0
    %v1996 = vadd.f32 0.0, %v1995
    %v1997 = vpop.f32.mrf.mxu0
    %v1998 = vpop.f32.mrf.mxu0
    %v1999 = vadd.f32 0.0, %v1998
    %v2000 = vpop.f32.mrf.mxu0
    %2001 = vdwg.mxu0
    %v2002 = vpack.c.bf16 %v1991, %v1988
    %v2003 = vpack.c.bf16 %v1999, %v1996
    %s2004 = scalar_lea.vmem %s4, 96
    %v2005 = vld [vmem:[%s2004] sm:$0xf]
    %v2006 = vld [vmem:[%s2004 + $0x4] sm:$0xf]
    %v2009 = vunpack.c.l.b16 %v2005
    %v2010 = vunpack.c.l.b16 %v2006
    %v2011 = vpack.c.b16 %v2010, %v2009
    %v2014 = vsel %vm459, %v2002, 0
    %v2017 = vsel %vm459, %v2003, 0
    %2019 = vmatprep.subr.bf16.mxu0 0
    %2020 = vmatpush1.bf16.msra.mxu0 0
    %2021 = vmatprep.subr.bf16.mxu0 0
    %2022 = vmatpush1.bf16.msra.mxu0 0
    %2023 = vmatprep.subr.bf16.mxu0 0
    %2024 = vmatpush1.bf16.msra.mxu0 0
    %2025 = vmatprep.subr.bf16.mxu0 0
    %2026 = vmatpush1.bf16.msra.mxu0 0
    %2027 = vmatprep.subr.bf16.mxu0 0
    %2028 = vmatpush1.bf16.msra.mxu0 0
    %2029 = vmatprep.subr.bf16.mxu0 0
    %2030 = vmatpush1.bf16.msra.mxu0 0
    %2031 = vmatprep.subr.bf16.mxu0 0
    %2032 = vmatpush1.bf16.msra.mxu0 0
    %2033 = vmatprep.subr.bf16.mxu0 0
    %2034 = vmatpush1.bf16.msra.mxu0 %v2011
    %2035 = vmatprep.subr.bf16.mxu0 0
    %2036 = vmatpush2.bf16.msra.mxu0 0
    %2037 = vmatprep.subr.bf16.mxu0 0
    %2038 = vmatpush2.bf16.msra.mxu0 0
    %2039 = vmatprep.subr.bf16.mxu0 0
    %2040 = vmatpush2.bf16.msra.mxu0 0
    %2041 = vmatprep.subr.bf16.mxu0 0
    %2042 = vmatpush2.bf16.msra.mxu0 0
    %2043 = vmatprep.subr.bf16.mxu0 0
    %2044 = vmatpush2.bf16.msra.mxu0 0
    %2045 = vmatprep.subr.bf16.mxu0 0
    %2046 = vmatpush2.bf16.msra.mxu0 0
    %2047 = vmatprep.subr.bf16.mxu0 0
    %2048 = vmatpush2.bf16.msra.mxu0 0
    %2049 = vmatprep.subr.bf16.mxu0 0
    %2050 = vmatpush2.bf16.msra.mxu0 0
    %2051 = vmatprep.mubr.bf16.mxu0 0
    %2052 = vmatmul.mubr.bf16.gmra.mxu0 %v2014
    %v2053 = vpop.f32.mrf.mxu0
    %v2054 = vadd.f32 0.0, %v2053
    %v2055 = vpop.f32.mrf.mxu0
    %v2056 = vpop.f32.mrf.mxu0
    %v2057 = vadd.f32 0.0, %v2056
    %v2058 = vpop.f32.mrf.mxu0
    %2059 = vmatprep.mubr.bf16.mxu0 0
    %2060 = vmatmul.mubr.bf16.gmra.mxu0 %v2017
    %v2061 = vpop.f32.mrf.mxu0
    %v2062 = vadd.f32 0.0, %v2061
    %v2063 = vpop.f32.mrf.mxu0
    %v2064 = vpop.f32.mrf.mxu0
    %v2065 = vadd.f32 0.0, %v2064
    %v2066 = vpop.f32.mrf.mxu0
    %2067 = vdwg.mxu0
    %v2068 = vadd.f32 %v1932, %v2054
    %v2069 = vadd.f32 %v1933, %v2057
    %v2070 = vadd.f32 %v1934, %v2062
    %v2071 = vadd.f32 %v1935, %v2065
    %s2072 = scalar_lea.vmem %s3, 208
    %v2073 = vld [vmem:[%s2072] sm:$0xf]
    %v2074 = vld [vmem:[%s2072 + $0x4] sm:$0xf]
    %v2075 = vld [vmem:[%s2072 + $0x8] sm:$0xf]
    %v2076 = vld [vmem:[%s2072 + $0xc] sm:$0xf]
    %v2081 = vunpack.c.l.b16 %v2073
    %v2082 = vunpack.c.l.b16 %v2074
    %v2083 = vunpack.c.l.b16 %v2075
    %v2084 = vunpack.c.l.b16 %v2076
    %v2085 = vpack.c.b16 %v2082, %v2081
    %v2086 = vpack.c.b16 %v2084, %v2083
    %2089 = vmatprep.subr.bf16.mxu0 0
    %2090 = vmatpush1.bf16.msra.mxu0 %v312
    %2091 = vmatprep.subr.bf16.mxu0 0
    %2092 = vmatpush1.bf16.msra.mxu0 %v311
    %2093 = vmatprep.subr.bf16.mxu0 0
    %2094 = vmatpush1.bf16.msra.mxu0 %v310
    %2095 = vmatprep.subr.bf16.mxu0 0
    %2096 = vmatpush1.bf16.msra.mxu0 %v309
    %2097 = vmatprep.subr.bf16.mxu0 0
    %2098 = vmatpush1.bf16.msra.mxu0 %v308
    %2099 = vmatprep.subr.bf16.mxu0 0
    %2100 = vmatpush1.bf16.msra.mxu0 %v307
    %2101 = vmatprep.subr.bf16.mxu0 0
    %2102 = vmatpush1.bf16.msra.mxu0 %v306
    %2103 = vmatprep.subr.bf16.mxu0 0
    %2104 = vmatpush1.bf16.msra.mxu0 %v305
    %2105 = vmatprep.subr.bf16.mxu0 0
    %2106 = vmatpush2.bf16.msra.mxu0 0
    %2107 = vmatprep.subr.bf16.mxu0 0
    %2108 = vmatpush2.bf16.msra.mxu0 0
    %2109 = vmatprep.subr.bf16.mxu0 0
    %2110 = vmatpush2.bf16.msra.mxu0 0
    %2111 = vmatprep.subr.bf16.mxu0 0
    %2112 = vmatpush2.bf16.msra.mxu0 0
    %2113 = vmatprep.subr.bf16.mxu0 0
    %2114 = vmatpush2.bf16.msra.mxu0 0
    %2115 = vmatprep.subr.bf16.mxu0 0
    %2116 = vmatpush2.bf16.msra.mxu0 0
    %2117 = vmatprep.subr.bf16.mxu0 0
    %2118 = vmatpush2.bf16.msra.mxu0 0
    %2119 = vmatprep.subr.bf16.mxu0 0
    %2120 = vmatpush2.bf16.msra.mxu0 0
    %2121 = vmatprep.mubr.bf16.mxu0 0
    %2122 = vmatmul.mubr.bf16.gmra.mxu0 %v2085
    %v2123 = vpop.f32.mrf.mxu0
    %v2124 = vadd.f32 0.0, %v2123
    %v2125 = vpop.f32.mrf.mxu0
    %v2126 = vpop.f32.mrf.mxu0
    %v2127 = vadd.f32 0.0, %v2126
    %v2128 = vpop.f32.mrf.mxu0
    %2129 = vmatprep.mubr.bf16.mxu0 0
    %2130 = vmatmul.mubr.bf16.gmra.mxu0 %v2086
    %v2131 = vpop.f32.mrf.mxu0
    %v2132 = vadd.f32 0.0, %v2131
    %v2133 = vpop.f32.mrf.mxu0
    %v2134 = vpop.f32.mrf.mxu0
    %v2135 = vadd.f32 0.0, %v2134
    %v2136 = vpop.f32.mrf.mxu0
    %2137 = vdwg.mxu0
    %v2138 = vpack.c.bf16 %v2127, %v2124
    %v2139 = vpack.c.bf16 %v2135, %v2132
    %s2140 = scalar_lea.vmem %s4, 104
    %v2141 = vld [vmem:[%s2140] sm:$0xf]
    %v2142 = vld [vmem:[%s2140 + $0x4] sm:$0xf]
    %v2145 = vunpack.c.l.b16 %v2141
    %v2146 = vunpack.c.l.b16 %v2142
    %v2147 = vpack.c.b16 %v2146, %v2145
    %v2150 = vsel %vm459, %v2138, 0
    %v2153 = vsel %vm459, %v2139, 0
    %2155 = vmatprep.subr.bf16.mxu0 0
    %2156 = vmatpush1.bf16.msra.mxu0 0
    %2157 = vmatprep.subr.bf16.mxu0 0
    %2158 = vmatpush1.bf16.msra.mxu0 0
    %2159 = vmatprep.subr.bf16.mxu0 0
    %2160 = vmatpush1.bf16.msra.mxu0 0
    %2161 = vmatprep.subr.bf16.mxu0 0
    %2162 = vmatpush1.bf16.msra.mxu0 0
    %2163 = vmatprep.subr.bf16.mxu0 0
    %2164 = vmatpush1.bf16.msra.mxu0 0
    %2165 = vmatprep.subr.bf16.mxu0 0
    %2166 = vmatpush1.bf16.msra.mxu0 0
    %2167 = vmatprep.subr.bf16.mxu0 0
    %2168 = vmatpush1.bf16.msra.mxu0 0
    %2169 = vmatprep.subr.bf16.mxu0 0
    %2170 = vmatpush1.bf16.msra.mxu0 %v2147
    %2171 = vmatprep.subr.bf16.mxu0 0
    %2172 = vmatpush2.bf16.msra.mxu0 0
    %2173 = vmatprep.subr.bf16.mxu0 0
    %2174 = vmatpush2.bf16.msra.mxu0 0
    %2175 = vmatprep.subr.bf16.mxu0 0
    %2176 = vmatpush2.bf16.msra.mxu0 0
    %2177 = vmatprep.subr.bf16.mxu0 0
    %2178 = vmatpush2.bf16.msra.mxu0 0
    %2179 = vmatprep.subr.bf16.mxu0 0
    %2180 = vmatpush2.bf16.msra.mxu0 0
    %2181 = vmatprep.subr.bf16.mxu0 0
    %2182 = vmatpush2.bf16.msra.mxu0 0
    %2183 = vmatprep.subr.bf16.mxu0 0
    %2184 = vmatpush2.bf16.msra.mxu0 0
    %2185 = vmatprep.subr.bf16.mxu0 0
    %2186 = vmatpush2.bf16.msra.mxu0 0
    %2187 = vmatprep.mubr.bf16.mxu0 0
    %2188 = vmatmul.mubr.bf16.gmra.mxu0 %v2150
    %v2189 = vpop.f32.mrf.mxu0
    %v2190 = vadd.f32 0.0, %v2189
    %v2191 = vpop.f32.mrf.mxu0
    %v2192 = vpop.f32.mrf.mxu0
    %v2193 = vadd.f32 0.0, %v2192
    %v2194 = vpop.f32.mrf.mxu0
    %2195 = vmatprep.mubr.bf16.mxu0 0
    %2196 = vmatmul.mubr.bf16.gmra.mxu0 %v2153
    %v2197 = vpop.f32.mrf.mxu0
    %v2198 = vadd.f32 0.0, %v2197
    %v2199 = vpop.f32.mrf.mxu0
    %v2200 = vpop.f32.mrf.mxu0
    %v2201 = vadd.f32 0.0, %v2200
    %v2202 = vpop.f32.mrf.mxu0
    %2203 = vdwg.mxu0
    %v2204 = vadd.f32 %v2068, %v2190
    %v2205 = vadd.f32 %v2069, %v2193
    %v2206 = vadd.f32 %v2070, %v2198
    %v2207 = vadd.f32 %v2071, %v2201
    %s2208 = scalar_lea.vmem %s3, 224
    %v2209 = vld [vmem:[%s2208] sm:$0xf]
    %v2210 = vld [vmem:[%s2208 + $0x4] sm:$0xf]
    %v2211 = vld [vmem:[%s2208 + $0x8] sm:$0xf]
    %v2212 = vld [vmem:[%s2208 + $0xc] sm:$0xf]
    %v2217 = vunpack.c.l.b16 %v2209
    %v2218 = vunpack.c.l.b16 %v2210
    %v2219 = vunpack.c.l.b16 %v2211
    %v2220 = vunpack.c.l.b16 %v2212
    %v2221 = vpack.c.b16 %v2218, %v2217
    %v2222 = vpack.c.b16 %v2220, %v2219
    %2225 = vmatprep.subr.bf16.mxu0 0
    %2226 = vmatpush1.bf16.msra.mxu0 %v312
    %2227 = vmatprep.subr.bf16.mxu0 0
    %2228 = vmatpush1.bf16.msra.mxu0 %v311
    %2229 = vmatprep.subr.bf16.mxu0 0
    %2230 = vmatpush1.bf16.msra.mxu0 %v310
    %2231 = vmatprep.subr.bf16.mxu0 0
    %2232 = vmatpush1.bf16.msra.mxu0 %v309
    %2233 = vmatprep.subr.bf16.mxu0 0
    %2234 = vmatpush1.bf16.msra.mxu0 %v308
    %2235 = vmatprep.subr.bf16.mxu0 0
    %2236 = vmatpush1.bf16.msra.mxu0 %v307
    %2237 = vmatprep.subr.bf16.mxu0 0
    %2238 = vmatpush1.bf16.msra.mxu0 %v306
    %2239 = vmatprep.subr.bf16.mxu0 0
    %2240 = vmatpush1.bf16.msra.mxu0 %v305
    %2241 = vmatprep.subr.bf16.mxu0 0
    %2242 = vmatpush2.bf16.msra.mxu0 0
    %2243 = vmatprep.subr.bf16.mxu0 0
    %2244 = vmatpush2.bf16.msra.mxu0 0
    %2245 = vmatprep.subr.bf16.mxu0 0
    %2246 = vmatpush2.bf16.msra.mxu0 0
    %2247 = vmatprep.subr.bf16.mxu0 0
    %2248 = vmatpush2.bf16.msra.mxu0 0
    %2249 = vmatprep.subr.bf16.mxu0 0
    %2250 = vmatpush2.bf16.msra.mxu0 0
    %2251 = vmatprep.subr.bf16.mxu0 0
    %2252 = vmatpush2.bf16.msra.mxu0 0
    %2253 = vmatprep.subr.bf16.mxu0 0
    %2254 = vmatpush2.bf16.msra.mxu0 0
    %2255 = vmatprep.subr.bf16.mxu0 0
    %2256 = vmatpush2.bf16.msra.mxu0 0
    %2257 = vmatprep.mubr.bf16.mxu0 0
    %2258 = vmatmul.mubr.bf16.gmra.mxu0 %v2221
    %v2259 = vpop.f32.mrf.mxu0
    %v2260 = vadd.f32 0.0, %v2259
    %v2261 = vpop.f32.mrf.mxu0
    %v2262 = vpop.f32.mrf.mxu0
    %v2263 = vadd.f32 0.0, %v2262
    %v2264 = vpop.f32.mrf.mxu0
    %2265 = vmatprep.mubr.bf16.mxu0 0
    %2266 = vmatmul.mubr.bf16.gmra.mxu0 %v2222
    %v2267 = vpop.f32.mrf.mxu0
    %v2268 = vadd.f32 0.0, %v2267
    %v2269 = vpop.f32.mrf.mxu0
    %v2270 = vpop.f32.mrf.mxu0
    %v2271 = vadd.f32 0.0, %v2270
    %v2272 = vpop.f32.mrf.mxu0
    %2273 = vdwg.mxu0
    %v2274 = vpack.c.bf16 %v2263, %v2260
    %v2275 = vpack.c.bf16 %v2271, %v2268
    %s2276 = scalar_lea.vmem %s4, 112
    %v2277 = vld [vmem:[%s2276] sm:$0xf]
    %v2278 = vld [vmem:[%s2276 + $0x4] sm:$0xf]
    %v2281 = vunpack.c.l.b16 %v2277
    %v2282 = vunpack.c.l.b16 %v2278
    %v2283 = vpack.c.b16 %v2282, %v2281
    %v2286 = vsel %vm459, %v2274, 0
    %v2289 = vsel %vm459, %v2275, 0
    %2291 = vmatprep.subr.bf16.mxu0 0
    %2292 = vmatpush1.bf16.msra.mxu0 0
    %2293 = vmatprep.subr.bf16.mxu0 0
    %2294 = vmatpush1.bf16.msra.mxu0 0
    %2295 = vmatprep.subr.bf16.mxu0 0
    %2296 = vmatpush1.bf16.msra.mxu0 0
    %2297 = vmatprep.subr.bf16.mxu0 0
    %2298 = vmatpush1.bf16.msra.mxu0 0
    %2299 = vmatprep.subr.bf16.mxu0 0
    %2300 = vmatpush1.bf16.msra.mxu0 0
    %2301 = vmatprep.subr.bf16.mxu0 0
    %2302 = vmatpush1.bf16.msra.mxu0 0
    %2303 = vmatprep.subr.bf16.mxu0 0
    %2304 = vmatpush1.bf16.msra.mxu0 0
    %2305 = vmatprep.subr.bf16.mxu0 0
    %2306 = vmatpush1.bf16.msra.mxu0 %v2283
    %2307 = vmatprep.subr.bf16.mxu0 0
    %2308 = vmatpush2.bf16.msra.mxu0 0
    %2309 = vmatprep.subr.bf16.mxu0 0
    %2310 = vmatpush2.bf16.msra.mxu0 0
    %2311 = vmatprep.subr.bf16.mxu0 0
    %2312 = vmatpush2.bf16.msra.mxu0 0
    %2313 = vmatprep.subr.bf16.mxu0 0
    %2314 = vmatpush2.bf16.msra.mxu0 0
    %2315 = vmatprep.subr.bf16.mxu0 0
    %2316 = vmatpush2.bf16.msra.mxu0 0
    %2317 = vmatprep.subr.bf16.mxu0 0
    %2318 = vmatpush2.bf16.msra.mxu0 0
    %2319 = vmatprep.subr.bf16.mxu0 0
    %2320 = vmatpush2.bf16.msra.mxu0 0
    %2321 = vmatprep.subr.bf16.mxu0 0
    %2322 = vmatpush2.bf16.msra.mxu0 0
    %2323 = vmatprep.mubr.bf16.mxu0 0
    %2324 = vmatmul.mubr.bf16.gmra.mxu0 %v2286
    %v2325 = vpop.f32.mrf.mxu0
    %v2326 = vadd.f32 0.0, %v2325
    %v2327 = vpop.f32.mrf.mxu0
    %v2328 = vpop.f32.mrf.mxu0
    %v2329 = vadd.f32 0.0, %v2328
    %v2330 = vpop.f32.mrf.mxu0
    %2331 = vmatprep.mubr.bf16.mxu0 0
    %2332 = vmatmul.mubr.bf16.gmra.mxu0 %v2289
    %v2333 = vpop.f32.mrf.mxu0
    %v2334 = vadd.f32 0.0, %v2333
    %v2335 = vpop.f32.mrf.mxu0
    %v2336 = vpop.f32.mrf.mxu0
    %v2337 = vadd.f32 0.0, %v2336
    %v2338 = vpop.f32.mrf.mxu0
    %2339 = vdwg.mxu0
    %v2340 = vadd.f32 %v2204, %v2326
    %v2341 = vadd.f32 %v2205, %v2329
    %v2342 = vadd.f32 %v2206, %v2334
    %v2343 = vadd.f32 %v2207, %v2337
    %s2344 = scalar_lea.vmem %s3, 240
    %v2345 = vld [vmem:[%s2344] sm:$0xf]
    %v2346 = vld [vmem:[%s2344 + $0x4] sm:$0xf]
    %v2347 = vld [vmem:[%s2344 + $0x8] sm:$0xf]
    %v2348 = vld [vmem:[%s2344 + $0xc] sm:$0xf]
    %v2353 = vunpack.c.l.b16 %v2345
    %v2354 = vunpack.c.l.b16 %v2346
    %v2355 = vunpack.c.l.b16 %v2347
    %v2356 = vunpack.c.l.b16 %v2348
    %v2357 = vpack.c.b16 %v2354, %v2353
    %v2358 = vpack.c.b16 %v2356, %v2355
    %2361 = vmatprep.subr.bf16.mxu0 0
    %2362 = vmatpush1.bf16.msra.mxu0 %v312
    %2363 = vmatprep.subr.bf16.mxu0 0
    %2364 = vmatpush1.bf16.msra.mxu0 %v311
    %2365 = vmatprep.subr.bf16.mxu0 0
    %2366 = vmatpush1.bf16.msra.mxu0 %v310
    %2367 = vmatprep.subr.bf16.mxu0 0
    %2368 = vmatpush1.bf16.msra.mxu0 %v309
    %2369 = vmatprep.subr.bf16.mxu0 0
    %2370 = vmatpush1.bf16.msra.mxu0 %v308
    %2371 = vmatprep.subr.bf16.mxu0 0
    %2372 = vmatpush1.bf16.msra.mxu0 %v307
    %2373 = vmatprep.subr.bf16.mxu0 0
    %2374 = vmatpush1.bf16.msra.mxu0 %v306
    %2375 = vmatprep.subr.bf16.mxu0 0
    %2376 = vmatpush1.bf16.msra.mxu0 %v305
    %2377 = vmatprep.subr.bf16.mxu0 0
    %2378 = vmatpush2.bf16.msra.mxu0 0
    %2379 = vmatprep.subr.bf16.mxu0 0
    %2380 = vmatpush2.bf16.msra.mxu0 0
    %2381 = vmatprep.subr.bf16.mxu0 0
    %2382 = vmatpush2.bf16.msra.mxu0 0
    %2383 = vmatprep.subr.bf16.mxu0 0
    %2384 = vmatpush2.bf16.msra.mxu0 0
    %2385 = vmatprep.subr.bf16.mxu0 0
    %2386 = vmatpush2.bf16.msra.mxu0 0
    %2387 = vmatprep.subr.bf16.mxu0 0
    %2388 = vmatpush2.bf16.msra.mxu0 0
    %2389 = vmatprep.subr.bf16.mxu0 0
    %2390 = vmatpush2.bf16.msra.mxu0 0
    %2391 = vmatprep.subr.bf16.mxu0 0
    %2392 = vmatpush2.bf16.msra.mxu0 0
    %2393 = vmatprep.mubr.bf16.mxu0 0
    %2394 = vmatmul.mubr.bf16.gmra.mxu0 %v2357
    %v2395 = vpop.f32.mrf.mxu0
    %v2396 = vadd.f32 0.0, %v2395
    %v2397 = vpop.f32.mrf.mxu0
    %v2398 = vpop.f32.mrf.mxu0
    %v2399 = vadd.f32 0.0, %v2398
    %v2400 = vpop.f32.mrf.mxu0
    %2401 = vmatprep.mubr.bf16.mxu0 0
    %2402 = vmatmul.mubr.bf16.gmra.mxu0 %v2358
    %v2403 = vpop.f32.mrf.mxu0
    %v2404 = vadd.f32 0.0, %v2403
    %v2405 = vpop.f32.mrf.mxu0
    %v2406 = vpop.f32.mrf.mxu0
    %v2407 = vadd.f32 0.0, %v2406
    %v2408 = vpop.f32.mrf.mxu0
    %2409 = vdwg.mxu0
    %v2410 = vpack.c.bf16 %v2399, %v2396
    %v2411 = vpack.c.bf16 %v2407, %v2404
    %s2412 = scalar_lea.vmem %s4, 120
    %v2413 = vld [vmem:[%s2412] sm:$0xf]
    %v2414 = vld [vmem:[%s2412 + $0x4] sm:$0xf]
    %v2417 = vunpack.c.l.b16 %v2413
    %v2418 = vunpack.c.l.b16 %v2414
    %v2419 = vpack.c.b16 %v2418, %v2417
    %v2422 = vsel %vm459, %v2410, 0
    %v2425 = vsel %vm459, %v2411, 0
    %2427 = vmatprep.subr.bf16.mxu0 0
    %2428 = vmatpush1.bf16.msra.mxu0 0
    %2429 = vmatprep.subr.bf16.mxu0 0
    %2430 = vmatpush1.bf16.msra.mxu0 0
    %2431 = vmatprep.subr.bf16.mxu0 0
    %2432 = vmatpush1.bf16.msra.mxu0 0
    %2433 = vmatprep.subr.bf16.mxu0 0
    %2434 = vmatpush1.bf16.msra.mxu0 0
    %2435 = vmatprep.subr.bf16.mxu0 0
    %2436 = vmatpush1.bf16.msra.mxu0 0
    %2437 = vmatprep.subr.bf16.mxu0 0
    %2438 = vmatpush1.bf16.msra.mxu0 0
    %2439 = vmatprep.subr.bf16.mxu0 0
    %2440 = vmatpush1.bf16.msra.mxu0 0
    %2441 = vmatprep.subr.bf16.mxu0 0
    %2442 = vmatpush1.bf16.msra.mxu0 %v2419
    %2443 = vmatprep.subr.bf16.mxu0 0
    %2444 = vmatpush2.bf16.msra.mxu0 0
    %2445 = vmatprep.subr.bf16.mxu0 0
    %2446 = vmatpush2.bf16.msra.mxu0 0
    %2447 = vmatprep.subr.bf16.mxu0 0
    %2448 = vmatpush2.bf16.msra.mxu0 0
    %2449 = vmatprep.subr.bf16.mxu0 0
    %2450 = vmatpush2.bf16.msra.mxu0 0
    %2451 = vmatprep.subr.bf16.mxu0 0
    %2452 = vmatpush2.bf16.msra.mxu0 0
    %2453 = vmatprep.subr.bf16.mxu0 0
    %2454 = vmatpush2.bf16.msra.mxu0 0
    %2455 = vmatprep.subr.bf16.mxu0 0
    %2456 = vmatpush2.bf16.msra.mxu0 0
    %2457 = vmatprep.subr.bf16.mxu0 0
    %2458 = vmatpush2.bf16.msra.mxu0 0
    %2459 = vmatprep.mubr.bf16.mxu0 0
    %2460 = vmatmul.mubr.bf16.gmra.mxu0 %v2422
    %v2461 = vpop.f32.mrf.mxu0
    %v2462 = vadd.f32 0.0, %v2461
    %v2463 = vpop.f32.mrf.mxu0
    %v2464 = vpop.f32.mrf.mxu0
    %v2465 = vadd.f32 0.0, %v2464
    %v2466 = vpop.f32.mrf.mxu0
    %2467 = vmatprep.mubr.bf16.mxu0 0
    %2468 = vmatmul.mubr.bf16.gmra.mxu0 %v2425
    %v2469 = vpop.f32.mrf.mxu0
    %v2470 = vadd.f32 0.0, %v2469
    %v2471 = vpop.f32.mrf.mxu0
    %v2472 = vpop.f32.mrf.mxu0
    %v2473 = vadd.f32 0.0, %v2472
    %v2474 = vpop.f32.mrf.mxu0
    %2475 = vdwg.mxu0
    %v2476 = vadd.f32 %v2340, %v2462
    %v2477 = vadd.f32 %v2341, %v2465
    %v2478 = vadd.f32 %v2342, %v2470
    %v2479 = vadd.f32 %v2343, %v2473
    %v2480 = vld [vmem:[%s5] sm:$0x1]
    %v2482 = vlaneseq
    %v2483 = vshrl.u32 %v2482, 7
    %v2484 = vsub.s32 0, %v2483
    %v2485 = vrot.slane %v2480, %v2484
    %v2487 = vadd.f32 %v2476, %v2485
    %v2488 = vadd.f32 %v2477, %v2485
    %v2489 = vadd.f32 %v2478, %v2485
    %v2490 = vadd.f32 %v2479, %v2485
    %vm2491 = vcmask 261120
    %v2493 = vsel %vm2491, 0.03125, 0
    %2495 = vmatprep.subr.mxu0 0.0
    %2496 = vmatpush1.msra.mxu0 0.0
    %2497 = vmatprep.subr.mxu0 0.0
    %2498 = vmatpush1.msra.mxu0 0.0
    %2499 = vmatprep.subr.mxu0 0.0
    %2500 = vmatpush1.msra.mxu0 0.0
    %2501 = vmatprep.subr.mxu0 0.0
    %2502 = vmatpush1.msra.mxu0 0.0
    %2503 = vmatprep.subr.mxu0 0.0
    %2504 = vmatpush1.msra.mxu0 0.0
    %2505 = vmatprep.subr.mxu0 0.0
    %2506 = vmatpush1.msra.mxu0 0.0
    %2507 = vmatprep.subr.mxu0 0.0
    %2508 = vmatpush1.msra.mxu0 0.0
    %2509 = vmatprep.subr.mxu0 0.0
    %2510 = vmatpush1.msra.mxu0 0.0
    %2511 = vmatprep.subr.mxu0 0.0
    %2512 = vmatpush1.msra.mxu0 0.0
    %2513 = vmatprep.subr.mxu0 0.0
    %2514 = vmatpush1.msra.mxu0 0.0
    %2515 = vmatprep.subr.mxu0 0.0
    %2516 = vmatpush1.msra.mxu0 0.0
    %2517 = vmatprep.subr.mxu0 0.0
    %2518 = vmatpush1.msra.mxu0 0.0
    %2519 = vmatprep.subr.mxu0 0.0
    %2520 = vmatpush1.msra.mxu0 %v2490
    %2521 = vmatprep.subr.mxu0 0.0
    %2522 = vmatpush1.msra.mxu0 %v2489
    %2523 = vmatprep.subr.mxu0 0.0
    %2524 = vmatpush1.msra.mxu0 %v2488
    %2525 = vmatprep.subr.mxu0 0.0
    %2526 = vmatpush1.msra.mxu0 %v2487
    %2527 = vmatprep.subr.mxu0 0.0
    %2528 = vmatpush2.msra.mxu0 0.0
    %2529 = vmatprep.subr.mxu0 0.0
    %2530 = vmatpush2.msra.mxu0 0.0
    %2531 = vmatprep.subr.mxu0 0.0
    %2532 = vmatpush2.msra.mxu0 0.0
    %2533 = vmatprep.subr.mxu0 0.0
    %2534 = vmatpush2.msra.mxu0 0.0
    %2535 = vmatprep.subr.mxu0 0.0
    %2536 = vmatpush2.msra.mxu0 0.0
    %2537 = vmatprep.subr.mxu0 0.0
    %2538 = vmatpush2.msra.mxu0 0.0
    %2539 = vmatprep.subr.mxu0 0.0
    %2540 = vmatpush2.msra.mxu0 0.0
    %2541 = vmatprep.subr.mxu0 0.0
    %2542 = vmatpush2.msra.mxu0 0.0
    %2543 = vmatprep.subr.mxu0 0.0
    %2544 = vmatpush2.msra.mxu0 0.0
    %2545 = vmatprep.subr.mxu0 0.0
    %2546 = vmatpush2.msra.mxu0 0.0
    %2547 = vmatprep.subr.mxu0 0.0
    %2548 = vmatpush2.msra.mxu0 0.0
    %2549 = vmatprep.subr.mxu0 0.0
    %2550 = vmatpush2.msra.mxu0 0.0
    %2551 = vmatprep.subr.mxu0 0.0
    %2552 = vmatpush2.msra.mxu0 0.0
    %2553 = vmatprep.subr.mxu0 0.0
    %2554 = vmatpush2.msra.mxu0 0.0
    %2555 = vmatprep.subr.mxu0 0.0
    %2556 = vmatpush2.msra.mxu0 0.0
    %2557 = vmatprep.subr.mxu0 0.0
    %2558 = vmatpush2.msra.mxu0 0.0
    %2559 = vmatprep.mubr.f32.mxu0 0.0
    %2560 = vmatmul.mubr.f32.gmra.mxu0 %v2493
    %v2561 = vpop.f32.mrf.mxu0
    %v2562 = vadd.f32 0.0, %v2561
    %v2563 = vpop.f32.mrf.mxu0
    %2564 = vdwg.mxu0
    %v2565 = vlaneseq
    %v2566 = vshrl.u32 %v2565, 7
    %v2567 = vsub.s32 0, %v2566
    %v2568 = vrot.slane %v2562, %v2567
    %v2569 = vsub.f32 %v2487, %v2568
    %v2570 = vsub.f32 %v2488, %v2568
    %v2571 = vsub.f32 %v2489, %v2568
    %v2572 = vsub.f32 %v2490, %v2568
    %v2573 = vmul.f32 %v2569, %v2569
    %v2574 = vmul.f32 %v2570, %v2570
    %v2575 = vmul.f32 %v2571, %v2571
    %v2576 = vmul.f32 %v2572, %v2572
    %2577 = vmatprep.subr.mxu0 0.0
    %2578 = vmatpush1.msra.mxu0 0.0
    %2579 = vmatprep.subr.mxu0 0.0
    %2580 = vmatpush1.msra.mxu0 0.0
    %2581 = vmatprep.subr.mxu0 0.0
    %2582 = vmatpush1.msra.mxu0 0.0
    %2583 = vmatprep.subr.mxu0 0.0
    %2584 = vmatpush1.msra.mxu0 0.0
    %2585 = vmatprep.subr.mxu0 0.0
    %2586 = vmatpush1.msra.mxu0 0.0
    %2587 = vmatprep.subr.mxu0 0.0
    %2588 = vmatpush1.msra.mxu0 0.0
    %2589 = vmatprep.subr.mxu0 0.0
    %2590 = vmatpush1.msra.mxu0 0.0
    %2591 = vmatprep.subr.mxu0 0.0
    %2592 = vmatpush1.msra.mxu0 0.0
    %2593 = vmatprep.subr.mxu0 0.0
    %2594 = vmatpush1.msra.mxu0 0.0
    %2595 = vmatprep.subr.mxu0 0.0
    %2596 = vmatpush1.msra.mxu0 0.0
    %2597 = vmatprep.subr.mxu0 0.0
    %2598 = vmatpush1.msra.mxu0 0.0
    %2599 = vmatprep.subr.mxu0 0.0
    %2600 = vmatpush1.msra.mxu0 0.0
    %2601 = vmatprep.subr.mxu0 0.0
    %2602 = vmatpush1.msra.mxu0 %v2576
    %2603 = vmatprep.subr.mxu0 0.0
    %2604 = vmatpush1.msra.mxu0 %v2575
    %2605 = vmatprep.subr.mxu0 0.0
    %2606 = vmatpush1.msra.mxu0 %v2574
    %2607 = vmatprep.subr.mxu0 0.0
    %2608 = vmatpush1.msra.mxu0 %v2573
    %2609 = vmatprep.subr.mxu0 0.0
    %2610 = vmatpush2.msra.mxu0 0.0
    %2611 = vmatprep.subr.mxu0 0.0
    %2612 = vmatpush2.msra.mxu0 0.0
    %2613 = vmatprep.subr.mxu0 0.0
    %2614 = vmatpush2.msra.mxu0 0.0
    %2615 = vmatprep.subr.mxu0 0.0
    %2616 = vmatpush2.msra.mxu0 0.0
    %2617 = vmatprep.subr.mxu0 0.0
    %2618 = vmatpush2.msra.mxu0 0.0
    %2619 = vmatprep.subr.mxu0 0.0
    %2620 = vmatpush2.msra.mxu0 0.0
    %2621 = vmatprep.subr.mxu0 0.0
    %2622 = vmatpush2.msra.mxu0 0.0
    %2623 = vmatprep.subr.mxu0 0.0
    %2624 = vmatpush2.msra.mxu0 0.0
    %2625 = vmatprep.subr.mxu0 0.0
    %2626 = vmatpush2.msra.mxu0 0.0
    %2627 = vmatprep.subr.mxu0 0.0
    %2628 = vmatpush2.msra.mxu0 0.0
    %2629 = vmatprep.subr.mxu0 0.0
    %2630 = vmatpush2.msra.mxu0 0.0
    %2631 = vmatprep.subr.mxu0 0.0
    %2632 = vmatpush2.msra.mxu0 0.0
    %2633 = vmatprep.subr.mxu0 0.0
    %2634 = vmatpush2.msra.mxu0 0.0
    %2635 = vmatprep.subr.mxu0 0.0
    %2636 = vmatpush2.msra.mxu0 0.0
    %2637 = vmatprep.subr.mxu0 0.0
    %2638 = vmatpush2.msra.mxu0 0.0
    %2639 = vmatprep.subr.mxu0 0.0
    %2640 = vmatpush2.msra.mxu0 0.0
    %2641 = vmatprep.mubr.f32.mxu0 0.0
    %2642 = vmatmul.mubr.f32.gmra.mxu0 %v2493
    %v2643 = vpop.f32.mrf.mxu0
    %v2644 = vadd.f32 1e-05, %v2643
    %v2645 = vpop.f32.mrf.mxu0
    %2646 = vdwg.mxu0
    %v2647 = vrsqrt.pop %v2644
    %v2648 = vlaneseq
    %v2649 = vshrl.u32 %v2648, 7
    %v2650 = vsub.s32 0, %v2649
    %v2651 = vrot.slane %v2647, %v2650
    %v2652 = vmul.f32 %v2569, %v2651
    %v2653 = vmul.f32 %v2570, %v2651
    %v2654 = vmul.f32 %v2571, %v2651
    %v2655 = vmul.f32 %v2572, %v2651
    %v2656 = vld [vmem:[%s6] sm:$0x1]
    %v2658 = vlaneseq
    %v2659 = vshrl.u32 %v2658, 7
    %v2660 = vsub.s32 0, %v2659
    %v2661 = vrot.slane %v2656, %v2660
    %v2663 = vmul.f32 %v2652, %v2661
    %v2664 = vmul.f32 %v2653, %v2661
    %v2665 = vmul.f32 %v2654, %v2661
    %v2666 = vmul.f32 %v2655, %v2661
    %v2667 = vld [vmem:[%s7] sm:$0x1]
    %v2669 = vlaneseq
    %v2670 = vshrl.u32 %v2669, 7
    %v2671 = vsub.s32 0, %v2670
    %v2672 = vrot.slane %v2667, %v2671
    %v2674 = vadd.f32 %v2663, %v2672
    %v2675 = vadd.f32 %v2664, %v2672
    %v2676 = vadd.f32 %v2665, %v2672
    %v2677 = vadd.f32 %v2666, %v2672
    %vm2678 = vcmp.gt.f32.partialorder %v2674, 0.0
    %vm2679 = vcmp.gt.f32.partialorder %v2675, 0.0
    %vm2680 = vcmp.gt.f32.partialorder %v2676, 0.0
    %vm2681 = vcmp.gt.f32.partialorder %v2677, 0.0
    %v2682 = vmul.f32 %v2674, 0.2
    %v2683 = vmul.f32 %v2675, 0.2
    %v2684 = vmul.f32 %v2676, 0.2
    %v2685 = vmul.f32 %v2677, 0.2
    %v2686 = vsel %vm2678, %v2674, %v2682
    %v2687 = vsel %vm2679, %v2675, %v2683
    %v2688 = vsel %vm2680, %v2676, %v2684
    %v2689 = vsel %vm2681, %v2677, %v2685
    %v2690 = vpack.c.bf16 %v2687, %v2686
    %v2691 = vpack.c.bf16 %v2689, %v2688
    %v2692 = vld [vmem:[%s8] sm:$0x1]
    %v2694 = vsel %vm2491, %v2692, 0
    %2696 = vmatprep.subr.bf16.mxu0 0
    %2697 = vmatpush1.bf16.msra.mxu0 0
    %2698 = vmatprep.subr.bf16.mxu0 0
    %2699 = vmatpush1.bf16.msra.mxu0 0
    %2700 = vmatprep.subr.bf16.mxu0 0
    %2701 = vmatpush1.bf16.msra.mxu0 0
    %2702 = vmatprep.subr.bf16.mxu0 0
    %2703 = vmatpush1.bf16.msra.mxu0 0
    %2704 = vmatprep.subr.bf16.mxu0 0
    %2705 = vmatpush1.bf16.msra.mxu0 0
    %2706 = vmatprep.subr.bf16.mxu0 0
    %2707 = vmatpush1.bf16.msra.mxu0 0
    %2708 = vmatprep.subr.bf16.mxu0 0
    %2709 = vmatpush1.bf16.msra.mxu0 %v2691
    %2710 = vmatprep.subr.bf16.mxu0 0
    %2711 = vmatpush1.bf16.msra.mxu0 %v2690
    %2712 = vmatprep.subr.bf16.mxu0 0
    %2713 = vmatpush2.bf16.msra.mxu0 0
    %2714 = vmatprep.subr.bf16.mxu0 0
    %2715 = vmatpush2.bf16.msra.mxu0 0
    %2716 = vmatprep.subr.bf16.mxu0 0
    %2717 = vmatpush2.bf16.msra.mxu0 0
    %2718 = vmatprep.subr.bf16.mxu0 0
    %2719 = vmatpush2.bf16.msra.mxu0 0
    %2720 = vmatprep.subr.bf16.mxu0 0
    %2721 = vmatpush2.bf16.msra.mxu0 0
    %2722 = vmatprep.subr.bf16.mxu0 0
    %2723 = vmatpush2.bf16.msra.mxu0 0
    %2724 = vmatprep.subr.bf16.mxu0 0
    %2725 = vmatpush2.bf16.msra.mxu0 0
    %2726 = vmatprep.subr.bf16.mxu0 0
    %2727 = vmatpush2.bf16.msra.mxu0 0
    %2728 = vmatprep.mubr.bf16.mxu0 0
    %2729 = vmatmul.mubr.bf16.gmra.mxu0 %v2694
    %v2730 = vpop.f32.mrf.mxu0
    %v2731 = vadd.f32 0.0, %v2730
    %v2732 = vpop.f32.mrf.mxu0
    %v2733 = vpop.f32.mrf.mxu0
    %v2734 = vpop.f32.mrf.mxu0
    %2735 = vdwg.mxu0
    %v2736 = vpack.c.bf16 %v2731, %v2731
    %v2737 = vld [vmem:[%s9] sm:$0xf]
    %v2738 = vld [vmem:[%s9 + $0x4] sm:$0xf]
    %v2739 = vld [vmem:[%s9 + $0x8] sm:$0xf]
    %v2740 = vld [vmem:[%s9 + $0xc] sm:$0xf]
    %s2741 = scalar_lea.vmem %s8, 1
    %v2742 = vld [vmem:[%s2741] sm:$0x1]
    %v2744 = vsel %vm2491, %v2742, 0
    %2746 = vmatprep.subr.bf16.mxu0 0
    %2747 = vmatpush1.bf16.msra.mxu0 0
    %2748 = vmatprep.subr.bf16.mxu0 0
    %2749 = vmatpush1.bf16.msra.mxu0 0
    %2750 = vmatprep.subr.bf16.mxu0 0
    %2751 = vmatpush1.bf16.msra.mxu0 0
    %2752 = vmatprep.subr.bf16.mxu0 0
    %2753 = vmatpush1.bf16.msra.mxu0 0
    %2754 = vmatprep.subr.bf16.mxu0 0
    %2755 = vmatpush1.bf16.msra.mxu0 0
    %2756 = vmatprep.subr.bf16.mxu0 0
    %2757 = vmatpush1.bf16.msra.mxu0 0
    %2758 = vmatprep.subr.bf16.mxu0 0
    %2759 = vmatpush1.bf16.msra.mxu0 %v2691
    %2760 = vmatprep.subr.bf16.mxu0 0
    %2761 = vmatpush1.bf16.msra.mxu0 %v2690
    %2762 = vmatprep.subr.bf16.mxu0 0
    %2763 = vmatpush2.bf16.msra.mxu0 0
    %2764 = vmatprep.subr.bf16.mxu0 0
    %2765 = vmatpush2.bf16.msra.mxu0 0
    %2766 = vmatprep.subr.bf16.mxu0 0
    %2767 = vmatpush2.bf16.msra.mxu0 0
    %2768 = vmatprep.subr.bf16.mxu0 0
    %2769 = vmatpush2.bf16.msra.mxu0 0
    %2770 = vmatprep.subr.bf16.mxu0 0
    %2771 = vmatpush2.bf16.msra.mxu0 0
    %2772 = vmatprep.subr.bf16.mxu0 0
    %2773 = vmatpush2.bf16.msra.mxu0 0
    %2774 = vmatprep.subr.bf16.mxu0 0
    %2775 = vmatpush2.bf16.msra.mxu0 0
    %2776 = vmatprep.subr.bf16.mxu0 0
    %2777 = vmatpush2.bf16.msra.mxu0 0
    %2778 = vmatprep.mubr.bf16.mxu0 0
    %2779 = vmatmul.mubr.bf16.gmra.mxu0 %v2744
    %v2780 = vpop.f32.mrf.mxu0
    %v2781 = vadd.f32 0.0, %v2780
    %v2782 = vpop.f32.mrf.mxu0
    %v2783 = vpop.f32.mrf.mxu0
    %v2784 = vpop.f32.mrf.mxu0
    %2785 = vdwg.mxu0
    %v2786 = vpack.c.bf16 %v2781, %v2781
    %s2787 = scalar_lea.vmem %s9, 16
    %v2788 = vld [vmem:[%s2787] sm:$0xf]
    %v2789 = vld [vmem:[%s2787 + $0x4] sm:$0xf]
    %v2790 = vld [vmem:[%s2787 + $0x8] sm:$0xf]
    %v2791 = vld [vmem:[%s2787 + $0xc] sm:$0xf]
    %v2796 = vunpack.c.l.b16 %v2788
    %v2797 = vunpack.c.l.b16 %v2789
    %v2798 = vunpack.c.l.b16 %v2790
    %v2799 = vunpack.c.l.b16 %v2791
    %v2800 = vpack.c.b16 %v2797, %v2796
    %v2801 = vpack.c.b16 %v2799, %v2798
    %v2805 = vsel %vm2491, %v2786, 0
    %2807 = vmatprep.subr.bf16.mxu0 0
    %2808 = vmatpush1.bf16.msra.mxu0 0
    %2809 = vmatprep.subr.bf16.mxu0 0
    %2810 = vmatpush1.bf16.msra.mxu0 0
    %2811 = vmatprep.subr.bf16.mxu0 0
    %2812 = vmatpush1.bf16.msra.mxu0 0
    %2813 = vmatprep.subr.bf16.mxu0 0
    %2814 = vmatpush1.bf16.msra.mxu0 0
    %2815 = vmatprep.subr.bf16.mxu0 0
    %2816 = vmatpush1.bf16.msra.mxu0 0
    %2817 = vmatprep.subr.bf16.mxu0 0
    %2818 = vmatpush1.bf16.msra.mxu0 0
    %2819 = vmatprep.subr.bf16.mxu0 0
    %2820 = vmatpush1.bf16.msra.mxu0 %v2801
    %2821 = vmatprep.subr.bf16.mxu0 0
    %2822 = vmatpush1.bf16.msra.mxu0 %v2800
    %2823 = vmatprep.subr.bf16.mxu0 0
    %2824 = vmatpush2.bf16.msra.mxu0 0
    %2825 = vmatprep.subr.bf16.mxu0 0
    %2826 = vmatpush2.bf16.msra.mxu0 0
    %2827 = vmatprep.subr.bf16.mxu0 0
    %2828 = vmatpush2.bf16.msra.mxu0 0
    %2829 = vmatprep.subr.bf16.mxu0 0
    %2830 = vmatpush2.bf16.msra.mxu0 0
    %2831 = vmatprep.subr.bf16.mxu0 0
    %2832 = vmatpush2.bf16.msra.mxu0 0
    %2833 = vmatprep.subr.bf16.mxu0 0
    %2834 = vmatpush2.bf16.msra.mxu0 0
    %2835 = vmatprep.subr.bf16.mxu0 0
    %2836 = vmatpush2.bf16.msra.mxu0 0
    %2837 = vmatprep.subr.bf16.mxu0 0
    %2838 = vmatpush2.bf16.msra.mxu0 0
    %2839 = vmatprep.mubr.bf16.mxu0 0
    %2840 = vmatmul.mubr.bf16.gmra.mxu0 %v2805
    %v2841 = vpop.f32.mrf.mxu0
    %v2842 = vadd.f32 0.0, %v2841
    %v2843 = vpop.f32.mrf.mxu0
    %v2844 = vpop.f32.mrf.mxu0
    %v2845 = vpop.f32.mrf.mxu0
    %2846 = vdwg.mxu0
    %v2851 = vunpack.c.l.b16 %v2737
    %v2852 = vunpack.c.l.b16 %v2738
    %v2853 = vunpack.c.l.b16 %v2739
    %v2854 = vunpack.c.l.b16 %v2740
    %v2855 = vpack.c.b16 %v2852, %v2851
    %v2856 = vpack.c.b16 %v2854, %v2853
    %v2860 = vsel %vm2491, %v2736, 0
    %2862 = vmatprep.subr.bf16.mxu0 0
    %2863 = vmatpush1.bf16.msra.mxu0 0
    %2864 = vmatprep.subr.bf16.mxu0 0
    %2865 = vmatpush1.bf16.msra.mxu0 0
    %2866 = vmatprep.subr.bf16.mxu0 0
    %2867 = vmatpush1.bf16.msra.mxu0 0
    %2868 = vmatprep.subr.bf16.mxu0 0
    %2869 = vmatpush1.bf16.msra.mxu0 0
    %2870 = vmatprep.subr.bf16.mxu0 0
    %2871 = vmatpush1.bf16.msra.mxu0 0
    %2872 = vmatprep.subr.bf16.mxu0 0
    %2873 = vmatpush1.bf16.msra.mxu0 0
    %2874 = vmatprep.subr.bf16.mxu0 0
    %2875 = vmatpush1.bf16.msra.mxu0 %v2856
    %2876 = vmatprep.subr.bf16.mxu0 0
    %2877 = vmatpush1.bf16.msra.mxu0 %v2855
    %2878 = vmatprep.subr.bf16.mxu0 0
    %2879 = vmatpush2.bf16.msra.mxu0 0
    %2880 = vmatprep.subr.bf16.mxu0 0
    %2881 = vmatpush2.bf16.msra.mxu0 0
    %2882 = vmatprep.subr.bf16.mxu0 0
    %2883 = vmatpush2.bf16.msra.mxu0 0
    %2884 = vmatprep.subr.bf16.mxu0 0
    %2885 = vmatpush2.bf16.msra.mxu0 0
    %2886 = vmatprep.subr.bf16.mxu0 0
    %2887 = vmatpush2.bf16.msra.mxu0 0
    %2888 = vmatprep.subr.bf16.mxu0 0
    %2889 = vmatpush2.bf16.msra.mxu0 0
    %2890 = vmatprep.subr.bf16.mxu0 0
    %2891 = vmatpush2.bf16.msra.mxu0 0
    %2892 = vmatprep.subr.bf16.mxu0 0
    %2893 = vmatpush2.bf16.msra.mxu0 0
    %2894 = vmatprep.mubr.bf16.mxu0 0
    %2895 = vmatmul.mubr.bf16.gmra.mxu0 %v2860
    %v2896 = vpop.f32.mrf.mxu0
    %v2897 = vadd.f32 %v2842, %v2896
    %v2898 = vpop.f32.mrf.mxu0
    %v2899 = vpop.f32.mrf.mxu0
    %v2900 = vpop.f32.mrf.mxu0
    %2901 = vdwg.mxu0
    %s2902 = scalar_lea.vmem %s8, 2
    %v2903 = vld [vmem:[%s2902] sm:$0x1]
    %v2905 = vsel %vm2491, %v2903, 0
    %2907 = vmatprep.subr.bf16.mxu0 0
    %2908 = vmatpush1.bf16.msra.mxu0 0
    %2909 = vmatprep.subr.bf16.mxu0 0
    %2910 = vmatpush1.bf16.msra.mxu0 0
    %2911 = vmatprep.subr.bf16.mxu0 0
    %2912 = vmatpush1.bf16.msra.mxu0 0
    %2913 = vmatprep.subr.bf16.mxu0 0
    %2914 = vmatpush1.bf16.msra.mxu0 0
    %2915 = vmatprep.subr.bf16.mxu0 0
    %2916 = vmatpush1.bf16.msra.mxu0 0
    %2917 = vmatprep.subr.bf16.mxu0 0
    %2918 = vmatpush1.bf16.msra.mxu0 0
    %2919 = vmatprep.subr.bf16.mxu0 0
    %2920 = vmatpush1.bf16.msra.mxu0 %v2691
    %2921 = vmatprep.subr.bf16.mxu0 0
    %2922 = vmatpush1.bf16.msra.mxu0 %v2690
    %2923 = vmatprep.subr.bf16.mxu0 0
    %2924 = vmatpush2.bf16.msra.mxu0 0
    %2925 = vmatprep.subr.bf16.mxu0 0
    %2926 = vmatpush2.bf16.msra.mxu0 0
    %2927 = vmatprep.subr.bf16.mxu0 0
    %2928 = vmatpush2.bf16.msra.mxu0 0
    %2929 = vmatprep.subr.bf16.mxu0 0
    %2930 = vmatpush2.bf16.msra.mxu0 0
    %2931 = vmatprep.subr.bf16.mxu0 0
    %2932 = vmatpush2.bf16.msra.mxu0 0
    %2933 = vmatprep.subr.bf16.mxu0 0
    %2934 = vmatpush2.bf16.msra.mxu0 0
    %2935 = vmatprep.subr.bf16.mxu0 0
    %2936 = vmatpush2.bf16.msra.mxu0 0
    %2937 = vmatprep.subr.bf16.mxu0 0
    %2938 = vmatpush2.bf16.msra.mxu0 0
    %2939 = vmatprep.mubr.bf16.mxu0 0
    %2940 = vmatmul.mubr.bf16.gmra.mxu0 %v2905
    %v2941 = vpop.f32.mrf.mxu0
    %v2942 = vadd.f32 0.0, %v2941
    %v2943 = vpop.f32.mrf.mxu0
    %v2944 = vpop.f32.mrf.mxu0
    %v2945 = vpop.f32.mrf.mxu0
    %2946 = vdwg.mxu0
    %v2947 = vpack.c.bf16 %v2942, %v2942
    %s2948 = scalar_lea.vmem %s9, 32
    %v2949 = vld [vmem:[%s2948] sm:$0xf]
    %v2950 = vld [vmem:[%s2948 + $0x4] sm:$0xf]
    %v2951 = vld [vmem:[%s2948 + $0x8] sm:$0xf]
    %v2952 = vld [vmem:[%s2948 + $0xc] sm:$0xf]
    %v2957 = vunpack.c.l.b16 %v2949
    %v2958 = vunpack.c.l.b16 %v2950
    %v2959 = vunpack.c.l.b16 %v2951
    %v2960 = vunpack.c.l.b16 %v2952
    %v2961 = vpack.c.b16 %v2958, %v2957
    %v2962 = vpack.c.b16 %v2960, %v2959
    %v2966 = vsel %vm2491, %v2947, 0
    %2968 = vmatprep.subr.bf16.mxu0 0
    %2969 = vmatpush1.bf16.msra.mxu0 0
    %2970 = vmatprep.subr.bf16.mxu0 0
    %2971 = vmatpush1.bf16.msra.mxu0 0
    %2972 = vmatprep.subr.bf16.mxu0 0
    %2973 = vmatpush1.bf16.msra.mxu0 0
    %2974 = vmatprep.subr.bf16.mxu0 0
    %2975 = vmatpush1.bf16.msra.mxu0 0
    %2976 = vmatprep.subr.bf16.mxu0 0
    %2977 = vmatpush1.bf16.msra.mxu0 0
    %2978 = vmatprep.subr.bf16.mxu0 0
    %2979 = vmatpush1.bf16.msra.mxu0 0
    %2980 = vmatprep.subr.bf16.mxu0 0
    %2981 = vmatpush1.bf16.msra.mxu0 %v2962
    %2982 = vmatprep.subr.bf16.mxu0 0
    %2983 = vmatpush1.bf16.msra.mxu0 %v2961
    %2984 = vmatprep.subr.bf16.mxu0 0
    %2985 = vmatpush2.bf16.msra.mxu0 0
    %2986 = vmatprep.subr.bf16.mxu0 0
    %2987 = vmatpush2.bf16.msra.mxu0 0
    %2988 = vmatprep.subr.bf16.mxu0 0
    %2989 = vmatpush2.bf16.msra.mxu0 0
    %2990 = vmatprep.subr.bf16.mxu0 0
    %2991 = vmatpush2.bf16.msra.mxu0 0
    %2992 = vmatprep.subr.bf16.mxu0 0
    %2993 = vmatpush2.bf16.msra.mxu0 0
    %2994 = vmatprep.subr.bf16.mxu0 0
    %2995 = vmatpush2.bf16.msra.mxu0 0
    %2996 = vmatprep.subr.bf16.mxu0 0
    %2997 = vmatpush2.bf16.msra.mxu0 0
    %2998 = vmatprep.subr.bf16.mxu0 0
    %2999 = vmatpush2.bf16.msra.mxu0 0
    %3000 = vmatprep.mubr.bf16.mxu0 0
    %3001 = vmatmul.mubr.bf16.gmra.mxu0 %v2966
    %v3002 = vpop.f32.mrf.mxu0
    %v3003 = vadd.f32 0.0, %v3002
    %v3004 = vpop.f32.mrf.mxu0
    %v3005 = vpop.f32.mrf.mxu0
    %v3006 = vpop.f32.mrf.mxu0
    %3007 = vdwg.mxu0
    %v3008 = vadd.f32 %v2897, %v3003
    %s3009 = scalar_lea.vmem %s8, 3
    %v3010 = vld [vmem:[%s3009] sm:$0x1]
    %v3012 = vsel %vm2491, %v3010, 0
    %3014 = vmatprep.subr.bf16.mxu0 0
    %3015 = vmatpush1.bf16.msra.mxu0 0
    %3016 = vmatprep.subr.bf16.mxu0 0
    %3017 = vmatpush1.bf16.msra.mxu0 0
    %3018 = vmatprep.subr.bf16.mxu0 0
    %3019 = vmatpush1.bf16.msra.mxu0 0
    %3020 = vmatprep.subr.bf16.mxu0 0
    %3021 = vmatpush1.bf16.msra.mxu0 0
    %3022 = vmatprep.subr.bf16.mxu0 0
    %3023 = vmatpush1.bf16.msra.mxu0 0
    %3024 = vmatprep.subr.bf16.mxu0 0
    %3025 = vmatpush1.bf16.msra.mxu0 0
    %3026 = vmatprep.subr.bf16.mxu0 0
    %3027 = vmatpush1.bf16.msra.mxu0 %v2691
    %3028 = vmatprep.subr.bf16.mxu0 0
    %3029 = vmatpush1.bf16.msra.mxu0 %v2690
    %3030 = vmatprep.subr.bf16.mxu0 0
    %3031 = vmatpush2.bf16.msra.mxu0 0
    %3032 = vmatprep.subr.bf16.mxu0 0
    %3033 = vmatpush2.bf16.msra.mxu0 0
    %3034 = vmatprep.subr.bf16.mxu0 0
    %3035 = vmatpush2.bf16.msra.mxu0 0
    %3036 = vmatprep.subr.bf16.mxu0 0
    %3037 = vmatpush2.bf16.msra.mxu0 0
    %3038 = vmatprep.subr.bf16.mxu0 0
    %3039 = vmatpush2.bf16.msra.mxu0 0
    %3040 = vmatprep.subr.bf16.mxu0 0
    %3041 = vmatpush2.bf16.msra.mxu0 0
    %3042 = vmatprep.subr.bf16.mxu0 0
    %3043 = vmatpush2.bf16.msra.mxu0 0
    %3044 = vmatprep.subr.bf16.mxu0 0
    %3045 = vmatpush2.bf16.msra.mxu0 0
    %3046 = vmatprep.mubr.bf16.mxu0 0
    %3047 = vmatmul.mubr.bf16.gmra.mxu0 %v3012
    %v3048 = vpop.f32.mrf.mxu0
    %v3049 = vadd.f32 0.0, %v3048
    %v3050 = vpop.f32.mrf.mxu0
    %v3051 = vpop.f32.mrf.mxu0
    %v3052 = vpop.f32.mrf.mxu0
    %3053 = vdwg.mxu0
    %v3054 = vpack.c.bf16 %v3049, %v3049
    %s3055 = scalar_lea.vmem %s9, 48
    %v3056 = vld [vmem:[%s3055] sm:$0xf]
    %v3057 = vld [vmem:[%s3055 + $0x4] sm:$0xf]
    %v3058 = vld [vmem:[%s3055 + $0x8] sm:$0xf]
    %v3059 = vld [vmem:[%s3055 + $0xc] sm:$0xf]
    %v3064 = vunpack.c.l.b16 %v3056
    %v3065 = vunpack.c.l.b16 %v3057
    %v3066 = vunpack.c.l.b16 %v3058
    %v3067 = vunpack.c.l.b16 %v3059
    %v3068 = vpack.c.b16 %v3065, %v3064
    %v3069 = vpack.c.b16 %v3067, %v3066
    %v3073 = vsel %vm2491, %v3054, 0
    %3075 = vmatprep.subr.bf16.mxu0 0
    %3076 = vmatpush1.bf16.msra.mxu0 0
    %3077 = vmatprep.subr.bf16.mxu0 0
    %3078 = vmatpush1.bf16.msra.mxu0 0
    %3079 = vmatprep.subr.bf16.mxu0 0
    %3080 = vmatpush1.bf16.msra.mxu0 0
    %3081 = vmatprep.subr.bf16.mxu0 0
    %3082 = vmatpush1.bf16.msra.mxu0 0
    %3083 = vmatprep.subr.bf16.mxu0 0
    %3084 = vmatpush1.bf16.msra.mxu0 0
    %3085 = vmatprep.subr.bf16.mxu0 0
    %3086 = vmatpush1.bf16.msra.mxu0 0
    %3087 = vmatprep.subr.bf16.mxu0 0
    %3088 = vmatpush1.bf16.msra.mxu0 %v3069
    %3089 = vmatprep.subr.bf16.mxu0 0
    %3090 = vmatpush1.bf16.msra.mxu0 %v3068
    %3091 = vmatprep.subr.bf16.mxu0 0
    %3092 = vmatpush2.bf16.msra.mxu0 0
    %3093 = vmatprep.subr.bf16.mxu0 0
    %3094 = vmatpush2.bf16.msra.mxu0 0
    %3095 = vmatprep.subr.bf16.mxu0 0
    %3096 = vmatpush2.bf16.msra.mxu0 0
    %3097 = vmatprep.subr.bf16.mxu0 0
    %3098 = vmatpush2.bf16.msra.mxu0 0
    %3099 = vmatprep.subr.bf16.mxu0 0
    %3100 = vmatpush2.bf16.msra.mxu0 0
    %3101 = vmatprep.subr.bf16.mxu0 0
    %3102 = vmatpush2.bf16.msra.mxu0 0
    %3103 = vmatprep.subr.bf16.mxu0 0
    %3104 = vmatpush2.bf16.msra.mxu0 0
    %3105 = vmatprep.subr.bf16.mxu0 0
    %3106 = vmatpush2.bf16.msra.mxu0 0
    %3107 = vmatprep.mubr.bf16.mxu0 0
    %3108 = vmatmul.mubr.bf16.gmra.mxu0 %v3073
    %v3109 = vpop.f32.mrf.mxu0
    %v3110 = vadd.f32 0.0, %v3109
    %v3111 = vpop.f32.mrf.mxu0
    %v3112 = vpop.f32.mrf.mxu0
    %v3113 = vpop.f32.mrf.mxu0
    %3114 = vdwg.mxu0
    %v3115 = vadd.f32 %v3008, %v3110
    %s3116 = scalar_lea.vmem %s8, 4
    %v3117 = vld [vmem:[%s3116] sm:$0x1]
    %v3119 = vsel %vm2491, %v3117, 0
    %3121 = vmatprep.subr.bf16.mxu0 0
    %3122 = vmatpush1.bf16.msra.mxu0 0
    %3123 = vmatprep.subr.bf16.mxu0 0
    %3124 = vmatpush1.bf16.msra.mxu0 0
    %3125 = vmatprep.subr.bf16.mxu0 0
    %3126 = vmatpush1.bf16.msra.mxu0 0
    %3127 = vmatprep.subr.bf16.mxu0 0
    %3128 = vmatpush1.bf16.msra.mxu0 0
    %3129 = vmatprep.subr.bf16.mxu0 0
    %3130 = vmatpush1.bf16.msra.mxu0 0
    %3131 = vmatprep.subr.bf16.mxu0 0
    %3132 = vmatpush1.bf16.msra.mxu0 0
    %3133 = vmatprep.subr.bf16.mxu0 0
    %3134 = vmatpush1.bf16.msra.mxu0 %v2691
    %3135 = vmatprep.subr.bf16.mxu0 0
    %3136 = vmatpush1.bf16.msra.mxu0 %v2690
    %3137 = vmatprep.subr.bf16.mxu0 0
    %3138 = vmatpush2.bf16.msra.mxu0 0
    %3139 = vmatprep.subr.bf16.mxu0 0
    %3140 = vmatpush2.bf16.msra.mxu0 0
    %3141 = vmatprep.subr.bf16.mxu0 0
    %3142 = vmatpush2.bf16.msra.mxu0 0
    %3143 = vmatprep.subr.bf16.mxu0 0
    %3144 = vmatpush2.bf16.msra.mxu0 0
    %3145 = vmatprep.subr.bf16.mxu0 0
    %3146 = vmatpush2.bf16.msra.mxu0 0
    %3147 = vmatprep.subr.bf16.mxu0 0
    %3148 = vmatpush2.bf16.msra.mxu0 0
    %3149 = vmatprep.subr.bf16.mxu0 0
    %3150 = vmatpush2.bf16.msra.mxu0 0
    %3151 = vmatprep.subr.bf16.mxu0 0
    %3152 = vmatpush2.bf16.msra.mxu0 0
    %3153 = vmatprep.mubr.bf16.mxu0 0
    %3154 = vmatmul.mubr.bf16.gmra.mxu0 %v3119
    %v3155 = vpop.f32.mrf.mxu0
    %v3156 = vadd.f32 0.0, %v3155
    %v3157 = vpop.f32.mrf.mxu0
    %v3158 = vpop.f32.mrf.mxu0
    %v3159 = vpop.f32.mrf.mxu0
    %3160 = vdwg.mxu0
    %v3161 = vpack.c.bf16 %v3156, %v3156
    %s3162 = scalar_lea.vmem %s9, 64
    %v3163 = vld [vmem:[%s3162] sm:$0xf]
    %v3164 = vld [vmem:[%s3162 + $0x4] sm:$0xf]
    %v3165 = vld [vmem:[%s3162 + $0x8] sm:$0xf]
    %v3166 = vld [vmem:[%s3162 + $0xc] sm:$0xf]
    %v3171 = vunpack.c.l.b16 %v3163
    %v3172 = vunpack.c.l.b16 %v3164
    %v3173 = vunpack.c.l.b16 %v3165
    %v3174 = vunpack.c.l.b16 %v3166
    %v3175 = vpack.c.b16 %v3172, %v3171
    %v3176 = vpack.c.b16 %v3174, %v3173
    %v3180 = vsel %vm2491, %v3161, 0
    %3182 = vmatprep.subr.bf16.mxu0 0
    %3183 = vmatpush1.bf16.msra.mxu0 0
    %3184 = vmatprep.subr.bf16.mxu0 0
    %3185 = vmatpush1.bf16.msra.mxu0 0
    %3186 = vmatprep.subr.bf16.mxu0 0
    %3187 = vmatpush1.bf16.msra.mxu0 0
    %3188 = vmatprep.subr.bf16.mxu0 0
    %3189 = vmatpush1.bf16.msra.mxu0 0
    %3190 = vmatprep.subr.bf16.mxu0 0
    %3191 = vmatpush1.bf16.msra.mxu0 0
    %3192 = vmatprep.subr.bf16.mxu0 0
    %3193 = vmatpush1.bf16.msra.mxu0 0
    %3194 = vmatprep.subr.bf16.mxu0 0
    %3195 = vmatpush1.bf16.msra.mxu0 %v3176
    %3196 = vmatprep.subr.bf16.mxu0 0
    %3197 = vmatpush1.bf16.msra.mxu0 %v3175
    %3198 = vmatprep.subr.bf16.mxu0 0
    %3199 = vmatpush2.bf16.msra.mxu0 0
    %3200 = vmatprep.subr.bf16.mxu0 0
    %3201 = vmatpush2.bf16.msra.mxu0 0
    %3202 = vmatprep.subr.bf16.mxu0 0
    %3203 = vmatpush2.bf16.msra.mxu0 0
    %3204 = vmatprep.subr.bf16.mxu0 0
    %3205 = vmatpush2.bf16.msra.mxu0 0
    %3206 = vmatprep.subr.bf16.mxu0 0
    %3207 = vmatpush2.bf16.msra.mxu0 0
    %3208 = vmatprep.subr.bf16.mxu0 0
    %3209 = vmatpush2.bf16.msra.mxu0 0
    %3210 = vmatprep.subr.bf16.mxu0 0
    %3211 = vmatpush2.bf16.msra.mxu0 0
    %3212 = vmatprep.subr.bf16.mxu0 0
    %3213 = vmatpush2.bf16.msra.mxu0 0
    %3214 = vmatprep.mubr.bf16.mxu0 0
    %3215 = vmatmul.mubr.bf16.gmra.mxu0 %v3180
    %v3216 = vpop.f32.mrf.mxu0
    %v3217 = vadd.f32 0.0, %v3216
    %v3218 = vpop.f32.mrf.mxu0
    %v3219 = vpop.f32.mrf.mxu0
    %v3220 = vpop.f32.mrf.mxu0
    %3221 = vdwg.mxu0
    %v3222 = vadd.f32 %v3115, %v3217
    %s3223 = scalar_lea.vmem %s8, 5
    %v3224 = vld [vmem:[%s3223] sm:$0x1]
    %v3226 = vsel %vm2491, %v3224, 0
    %3228 = vmatprep.subr.bf16.mxu0 0
    %3229 = vmatpush1.bf16.msra.mxu0 0
    %3230 = vmatprep.subr.bf16.mxu0 0
    %3231 = vmatpush1.bf16.msra.mxu0 0
    %3232 = vmatprep.subr.bf16.mxu0 0
    %3233 = vmatpush1.bf16.msra.mxu0 0
    %3234 = vmatprep.subr.bf16.mxu0 0
    %3235 = vmatpush1.bf16.msra.mxu0 0
    %3236 = vmatprep.subr.bf16.mxu0 0
    %3237 = vmatpush1.bf16.msra.mxu0 0
    %3238 = vmatprep.subr.bf16.mxu0 0
    %3239 = vmatpush1.bf16.msra.mxu0 0
    %3240 = vmatprep.subr.bf16.mxu0 0
    %3241 = vmatpush1.bf16.msra.mxu0 %v2691
    %3242 = vmatprep.subr.bf16.mxu0 0
    %3243 = vmatpush1.bf16.msra.mxu0 %v2690
    %3244 = vmatprep.subr.bf16.mxu0 0
    %3245 = vmatpush2.bf16.msra.mxu0 0
    %3246 = vmatprep.subr.bf16.mxu0 0
    %3247 = vmatpush2.bf16.msra.mxu0 0
    %3248 = vmatprep.subr.bf16.mxu0 0
    %3249 = vmatpush2.bf16.msra.mxu0 0
    %3250 = vmatprep.subr.bf16.mxu0 0
    %3251 = vmatpush2.bf16.msra.mxu0 0
    %3252 = vmatprep.subr.bf16.mxu0 0
    %3253 = vmatpush2.bf16.msra.mxu0 0
    %3254 = vmatprep.subr.bf16.mxu0 0
    %3255 = vmatpush2.bf16.msra.mxu0 0
    %3256 = vmatprep.subr.bf16.mxu0 0
    %3257 = vmatpush2.bf16.msra.mxu0 0
    %3258 = vmatprep.subr.bf16.mxu0 0
    %3259 = vmatpush2.bf16.msra.mxu0 0
    %3260 = vmatprep.mubr.bf16.mxu0 0
    %3261 = vmatmul.mubr.bf16.gmra.mxu0 %v3226
    %v3262 = vpop.f32.mrf.mxu0
    %v3263 = vadd.f32 0.0, %v3262
    %v3264 = vpop.f32.mrf.mxu0
    %v3265 = vpop.f32.mrf.mxu0
    %v3266 = vpop.f32.mrf.mxu0
    %3267 = vdwg.mxu0
    %v3268 = vpack.c.bf16 %v3263, %v3263
    %s3269 = scalar_lea.vmem %s9, 80
    %v3270 = vld [vmem:[%s3269] sm:$0xf]
    %v3271 = vld [vmem:[%s3269 + $0x4] sm:$0xf]
    %v3272 = vld [vmem:[%s3269 + $0x8] sm:$0xf]
    %v3273 = vld [vmem:[%s3269 + $0xc] sm:$0xf]
    %v3278 = vunpack.c.l.b16 %v3270
    %v3279 = vunpack.c.l.b16 %v3271
    %v3280 = vunpack.c.l.b16 %v3272
    %v3281 = vunpack.c.l.b16 %v3273
    %v3282 = vpack.c.b16 %v3279, %v3278
    %v3283 = vpack.c.b16 %v3281, %v3280
    %v3287 = vsel %vm2491, %v3268, 0
    %3289 = vmatprep.subr.bf16.mxu0 0
    %3290 = vmatpush1.bf16.msra.mxu0 0
    %3291 = vmatprep.subr.bf16.mxu0 0
    %3292 = vmatpush1.bf16.msra.mxu0 0
    %3293 = vmatprep.subr.bf16.mxu0 0
    %3294 = vmatpush1.bf16.msra.mxu0 0
    %3295 = vmatprep.subr.bf16.mxu0 0
    %3296 = vmatpush1.bf16.msra.mxu0 0
    %3297 = vmatprep.subr.bf16.mxu0 0
    %3298 = vmatpush1.bf16.msra.mxu0 0
    %3299 = vmatprep.subr.bf16.mxu0 0
    %3300 = vmatpush1.bf16.msra.mxu0 0
    %3301 = vmatprep.subr.bf16.mxu0 0
    %3302 = vmatpush1.bf16.msra.mxu0 %v3283
    %3303 = vmatprep.subr.bf16.mxu0 0
    %3304 = vmatpush1.bf16.msra.mxu0 %v3282
    %3305 = vmatprep.subr.bf16.mxu0 0
    %3306 = vmatpush2.bf16.msra.mxu0 0
    %3307 = vmatprep.subr.bf16.mxu0 0
    %3308 = vmatpush2.bf16.msra.mxu0 0
    %3309 = vmatprep.subr.bf16.mxu0 0
    %3310 = vmatpush2.bf16.msra.mxu0 0
    %3311 = vmatprep.subr.bf16.mxu0 0
    %3312 = vmatpush2.bf16.msra.mxu0 0
    %3313 = vmatprep.subr.bf16.mxu0 0
    %3314 = vmatpush2.bf16.msra.mxu0 0
    %3315 = vmatprep.subr.bf16.mxu0 0
    %3316 = vmatpush2.bf16.msra.mxu0 0
    %3317 = vmatprep.subr.bf16.mxu0 0
    %3318 = vmatpush2.bf16.msra.mxu0 0
    %3319 = vmatprep.subr.bf16.mxu0 0
    %3320 = vmatpush2.bf16.msra.mxu0 0
    %3321 = vmatprep.mubr.bf16.mxu0 0
    %3322 = vmatmul.mubr.bf16.gmra.mxu0 %v3287
    %v3323 = vpop.f32.mrf.mxu0
    %v3324 = vadd.f32 0.0, %v3323
    %v3325 = vpop.f32.mrf.mxu0
    %v3326 = vpop.f32.mrf.mxu0
    %v3327 = vpop.f32.mrf.mxu0
    %3328 = vdwg.mxu0
    %v3329 = vadd.f32 %v3222, %v3324
    %s3330 = scalar_lea.vmem %s8, 6
    %v3331 = vld [vmem:[%s3330] sm:$0x1]
    %v3333 = vsel %vm2491, %v3331, 0
    %3335 = vmatprep.subr.bf16.mxu0 0
    %3336 = vmatpush1.bf16.msra.mxu0 0
    %3337 = vmatprep.subr.bf16.mxu0 0
    %3338 = vmatpush1.bf16.msra.mxu0 0
    %3339 = vmatprep.subr.bf16.mxu0 0
    %3340 = vmatpush1.bf16.msra.mxu0 0
    %3341 = vmatprep.subr.bf16.mxu0 0
    %3342 = vmatpush1.bf16.msra.mxu0 0
    %3343 = vmatprep.subr.bf16.mxu0 0
    %3344 = vmatpush1.bf16.msra.mxu0 0
    %3345 = vmatprep.subr.bf16.mxu0 0
    %3346 = vmatpush1.bf16.msra.mxu0 0
    %3347 = vmatprep.subr.bf16.mxu0 0
    %3348 = vmatpush1.bf16.msra.mxu0 %v2691
    %3349 = vmatprep.subr.bf16.mxu0 0
    %3350 = vmatpush1.bf16.msra.mxu0 %v2690
    %3351 = vmatprep.subr.bf16.mxu0 0
    %3352 = vmatpush2.bf16.msra.mxu0 0
    %3353 = vmatprep.subr.bf16.mxu0 0
    %3354 = vmatpush2.bf16.msra.mxu0 0
    %3355 = vmatprep.subr.bf16.mxu0 0
    %3356 = vmatpush2.bf16.msra.mxu0 0
    %3357 = vmatprep.subr.bf16.mxu0 0
    %3358 = vmatpush2.bf16.msra.mxu0 0
    %3359 = vmatprep.subr.bf16.mxu0 0
    %3360 = vmatpush2.bf16.msra.mxu0 0
    %3361 = vmatprep.subr.bf16.mxu0 0
    %3362 = vmatpush2.bf16.msra.mxu0 0
    %3363 = vmatprep.subr.bf16.mxu0 0
    %3364 = vmatpush2.bf16.msra.mxu0 0
    %3365 = vmatprep.subr.bf16.mxu0 0
    %3366 = vmatpush2.bf16.msra.mxu0 0
    %3367 = vmatprep.mubr.bf16.mxu0 0
    %3368 = vmatmul.mubr.bf16.gmra.mxu0 %v3333
    %v3369 = vpop.f32.mrf.mxu0
    %v3370 = vadd.f32 0.0, %v3369
    %v3371 = vpop.f32.mrf.mxu0
    %v3372 = vpop.f32.mrf.mxu0
    %v3373 = vpop.f32.mrf.mxu0
    %3374 = vdwg.mxu0
    %v3375 = vpack.c.bf16 %v3370, %v3370
    %s3376 = scalar_lea.vmem %s9, 96
    %v3377 = vld [vmem:[%s3376] sm:$0xf]
    %v3378 = vld [vmem:[%s3376 + $0x4] sm:$0xf]
    %v3379 = vld [vmem:[%s3376 + $0x8] sm:$0xf]
    %v3380 = vld [vmem:[%s3376 + $0xc] sm:$0xf]
    %v3385 = vunpack.c.l.b16 %v3377
    %v3386 = vunpack.c.l.b16 %v3378
    %v3387 = vunpack.c.l.b16 %v3379
    %v3388 = vunpack.c.l.b16 %v3380
    %v3389 = vpack.c.b16 %v3386, %v3385
    %v3390 = vpack.c.b16 %v3388, %v3387
    %v3394 = vsel %vm2491, %v3375, 0
    %3396 = vmatprep.subr.bf16.mxu0 0
    %3397 = vmatpush1.bf16.msra.mxu0 0
    %3398 = vmatprep.subr.bf16.mxu0 0
    %3399 = vmatpush1.bf16.msra.mxu0 0
    %3400 = vmatprep.subr.bf16.mxu0 0
    %3401 = vmatpush1.bf16.msra.mxu0 0
    %3402 = vmatprep.subr.bf16.mxu0 0
    %3403 = vmatpush1.bf16.msra.mxu0 0
    %3404 = vmatprep.subr.bf16.mxu0 0
    %3405 = vmatpush1.bf16.msra.mxu0 0
    %3406 = vmatprep.subr.bf16.mxu0 0
    %3407 = vmatpush1.bf16.msra.mxu0 0
    %3408 = vmatprep.subr.bf16.mxu0 0
    %3409 = vmatpush1.bf16.msra.mxu0 %v3390
    %3410 = vmatprep.subr.bf16.mxu0 0
    %3411 = vmatpush1.bf16.msra.mxu0 %v3389
    %3412 = vmatprep.subr.bf16.mxu0 0
    %3413 = vmatpush2.bf16.msra.mxu0 0
    %3414 = vmatprep.subr.bf16.mxu0 0
    %3415 = vmatpush2.bf16.msra.mxu0 0
    %3416 = vmatprep.subr.bf16.mxu0 0
    %3417 = vmatpush2.bf16.msra.mxu0 0
    %3418 = vmatprep.subr.bf16.mxu0 0
    %3419 = vmatpush2.bf16.msra.mxu0 0
    %3420 = vmatprep.subr.bf16.mxu0 0
    %3421 = vmatpush2.bf16.msra.mxu0 0
    %3422 = vmatprep.subr.bf16.mxu0 0
    %3423 = vmatpush2.bf16.msra.mxu0 0
    %3424 = vmatprep.subr.bf16.mxu0 0
    %3425 = vmatpush2.bf16.msra.mxu0 0
    %3426 = vmatprep.subr.bf16.mxu0 0
    %3427 = vmatpush2.bf16.msra.mxu0 0
    %3428 = vmatprep.mubr.bf16.mxu0 0
    %3429 = vmatmul.mubr.bf16.gmra.mxu0 %v3394
    %v3430 = vpop.f32.mrf.mxu0
    %v3431 = vadd.f32 0.0, %v3430
    %v3432 = vpop.f32.mrf.mxu0
    %v3433 = vpop.f32.mrf.mxu0
    %v3434 = vpop.f32.mrf.mxu0
    %3435 = vdwg.mxu0
    %v3436 = vadd.f32 %v3329, %v3431
    %s3437 = scalar_lea.vmem %s8, 7
    %v3438 = vld [vmem:[%s3437] sm:$0x1]
    %v3440 = vsel %vm2491, %v3438, 0
    %3442 = vmatprep.subr.bf16.mxu0 0
    %3443 = vmatpush1.bf16.msra.mxu0 0
    %3444 = vmatprep.subr.bf16.mxu0 0
    %3445 = vmatpush1.bf16.msra.mxu0 0
    %3446 = vmatprep.subr.bf16.mxu0 0
    %3447 = vmatpush1.bf16.msra.mxu0 0
    %3448 = vmatprep.subr.bf16.mxu0 0
    %3449 = vmatpush1.bf16.msra.mxu0 0
    %3450 = vmatprep.subr.bf16.mxu0 0
    %3451 = vmatpush1.bf16.msra.mxu0 0
    %3452 = vmatprep.subr.bf16.mxu0 0
    %3453 = vmatpush1.bf16.msra.mxu0 0
    %3454 = vmatprep.subr.bf16.mxu0 0
    %3455 = vmatpush1.bf16.msra.mxu0 %v2691
    %3456 = vmatprep.subr.bf16.mxu0 0
    %3457 = vmatpush1.bf16.msra.mxu0 %v2690
    %3458 = vmatprep.subr.bf16.mxu0 0
    %3459 = vmatpush2.bf16.msra.mxu0 0
    %3460 = vmatprep.subr.bf16.mxu0 0
    %3461 = vmatpush2.bf16.msra.mxu0 0
    %3462 = vmatprep.subr.bf16.mxu0 0
    %3463 = vmatpush2.bf16.msra.mxu0 0
    %3464 = vmatprep.subr.bf16.mxu0 0
    %3465 = vmatpush2.bf16.msra.mxu0 0
    %3466 = vmatprep.subr.bf16.mxu0 0
    %3467 = vmatpush2.bf16.msra.mxu0 0
    %3468 = vmatprep.subr.bf16.mxu0 0
    %3469 = vmatpush2.bf16.msra.mxu0 0
    %3470 = vmatprep.subr.bf16.mxu0 0
    %3471 = vmatpush2.bf16.msra.mxu0 0
    %3472 = vmatprep.subr.bf16.mxu0 0
    %3473 = vmatpush2.bf16.msra.mxu0 0
    %3474 = vmatprep.mubr.bf16.mxu0 0
    %3475 = vmatmul.mubr.bf16.gmra.mxu0 %v3440
    %v3476 = vpop.f32.mrf.mxu0
    %v3477 = vadd.f32 0.0, %v3476
    %v3478 = vpop.f32.mrf.mxu0
    %v3479 = vpop.f32.mrf.mxu0
    %v3480 = vpop.f32.mrf.mxu0
    %3481 = vdwg.mxu0
    %v3482 = vpack.c.bf16 %v3477, %v3477
    %s3483 = scalar_lea.vmem %s9, 112
    %v3484 = vld [vmem:[%s3483] sm:$0xf]
    %v3485 = vld [vmem:[%s3483 + $0x4] sm:$0xf]
    %v3486 = vld [vmem:[%s3483 + $0x8] sm:$0xf]
    %v3487 = vld [vmem:[%s3483 + $0xc] sm:$0xf]
    %v3492 = vunpack.c.l.b16 %v3484
    %v3493 = vunpack.c.l.b16 %v3485
    %v3494 = vunpack.c.l.b16 %v3486
    %v3495 = vunpack.c.l.b16 %v3487
    %v3496 = vpack.c.b16 %v3493, %v3492
    %v3497 = vpack.c.b16 %v3495, %v3494
    %v3501 = vsel %vm2491, %v3482, 0
    %3503 = vmatprep.subr.bf16.mxu0 0
    %3504 = vmatpush1.bf16.msra.mxu0 0
    %3505 = vmatprep.subr.bf16.mxu0 0
    %3506 = vmatpush1.bf16.msra.mxu0 0
    %3507 = vmatprep.subr.bf16.mxu0 0
    %3508 = vmatpush1.bf16.msra.mxu0 0
    %3509 = vmatprep.subr.bf16.mxu0 0
    %3510 = vmatpush1.bf16.msra.mxu0 0
    %3511 = vmatprep.subr.bf16.mxu0 0
    %3512 = vmatpush1.bf16.msra.mxu0 0
    %3513 = vmatprep.subr.bf16.mxu0 0
    %3514 = vmatpush1.bf16.msra.mxu0 0
    %3515 = vmatprep.subr.bf16.mxu0 0
    %3516 = vmatpush1.bf16.msra.mxu0 %v3497
    %3517 = vmatprep.subr.bf16.mxu0 0
    %3518 = vmatpush1.bf16.msra.mxu0 %v3496
    %3519 = vmatprep.subr.bf16.mxu0 0
    %3520 = vmatpush2.bf16.msra.mxu0 0
    %3521 = vmatprep.subr.bf16.mxu0 0
    %3522 = vmatpush2.bf16.msra.mxu0 0
    %3523 = vmatprep.subr.bf16.mxu0 0
    %3524 = vmatpush2.bf16.msra.mxu0 0
    %3525 = vmatprep.subr.bf16.mxu0 0
    %3526 = vmatpush2.bf16.msra.mxu0 0
    %3527 = vmatprep.subr.bf16.mxu0 0
    %3528 = vmatpush2.bf16.msra.mxu0 0
    %3529 = vmatprep.subr.bf16.mxu0 0
    %3530 = vmatpush2.bf16.msra.mxu0 0
    %3531 = vmatprep.subr.bf16.mxu0 0
    %3532 = vmatpush2.bf16.msra.mxu0 0
    %3533 = vmatprep.subr.bf16.mxu0 0
    %3534 = vmatpush2.bf16.msra.mxu0 0
    %3535 = vmatprep.mubr.bf16.mxu0 0
    %3536 = vmatmul.mubr.bf16.gmra.mxu0 %v3501
    %v3537 = vpop.f32.mrf.mxu0
    %v3538 = vadd.f32 0.0, %v3537
    %v3539 = vpop.f32.mrf.mxu0
    %v3540 = vpop.f32.mrf.mxu0
    %v3541 = vpop.f32.mrf.mxu0
    %3542 = vdwg.mxu0
    %v3543 = vadd.f32 %v3436, %v3538
    %s3544 = scalar_lea.vmem %s8, 8
    %v3545 = vld [vmem:[%s3544] sm:$0x1]
    %v3547 = vsel %vm2491, %v3545, 0
    %3549 = vmatprep.subr.bf16.mxu0 0
    %3550 = vmatpush1.bf16.msra.mxu0 0
    %3551 = vmatprep.subr.bf16.mxu0 0
    %3552 = vmatpush1.bf16.msra.mxu0 0
    %3553 = vmatprep.subr.bf16.mxu0 0
    %3554 = vmatpush1.bf16.msra.mxu0 0
    %3555 = vmatprep.subr.bf16.mxu0 0
    %3556 = vmatpush1.bf16.msra.mxu0 0
    %3557 = vmatprep.subr.bf16.mxu0 0
    %3558 = vmatpush1.bf16.msra.mxu0 0
    %3559 = vmatprep.subr.bf16.mxu0 0
    %3560 = vmatpush1.bf16.msra.mxu0 0
    %3561 = vmatprep.subr.bf16.mxu0 0
    %3562 = vmatpush1.bf16.msra.mxu0 %v2691
    %3563 = vmatprep.subr.bf16.mxu0 0
    %3564 = vmatpush1.bf16.msra.mxu0 %v2690
    %3565 = vmatprep.subr.bf16.mxu0 0
    %3566 = vmatpush2.bf16.msra.mxu0 0
    %3567 = vmatprep.subr.bf16.mxu0 0
    %3568 = vmatpush2.bf16.msra.mxu0 0
    %3569 = vmatprep.subr.bf16.mxu0 0
    %3570 = vmatpush2.bf16.msra.mxu0 0
    %3571 = vmatprep.subr.bf16.mxu0 0
    %3572 = vmatpush2.bf16.msra.mxu0 0
    %3573 = vmatprep.subr.bf16.mxu0 0
    %3574 = vmatpush2.bf16.msra.mxu0 0
    %3575 = vmatprep.subr.bf16.mxu0 0
    %3576 = vmatpush2.bf16.msra.mxu0 0
    %3577 = vmatprep.subr.bf16.mxu0 0
    %3578 = vmatpush2.bf16.msra.mxu0 0
    %3579 = vmatprep.subr.bf16.mxu0 0
    %3580 = vmatpush2.bf16.msra.mxu0 0
    %3581 = vmatprep.mubr.bf16.mxu0 0
    %3582 = vmatmul.mubr.bf16.gmra.mxu0 %v3547
    %v3583 = vpop.f32.mrf.mxu0
    %v3584 = vadd.f32 0.0, %v3583
    %v3585 = vpop.f32.mrf.mxu0
    %v3586 = vpop.f32.mrf.mxu0
    %v3587 = vpop.f32.mrf.mxu0
    %3588 = vdwg.mxu0
    %v3589 = vpack.c.bf16 %v3584, %v3584
    %s3590 = scalar_lea.vmem %s9, 128
    %v3591 = vld [vmem:[%s3590] sm:$0xf]
    %v3592 = vld [vmem:[%s3590 + $0x4] sm:$0xf]
    %v3593 = vld [vmem:[%s3590 + $0x8] sm:$0xf]
    %v3594 = vld [vmem:[%s3590 + $0xc] sm:$0xf]
    %v3599 = vunpack.c.l.b16 %v3591
    %v3600 = vunpack.c.l.b16 %v3592
    %v3601 = vunpack.c.l.b16 %v3593
    %v3602 = vunpack.c.l.b16 %v3594
    %v3603 = vpack.c.b16 %v3600, %v3599
    %v3604 = vpack.c.b16 %v3602, %v3601
    %v3608 = vsel %vm2491, %v3589, 0
    %3610 = vmatprep.subr.bf16.mxu0 0
    %3611 = vmatpush1.bf16.msra.mxu0 0
    %3612 = vmatprep.subr.bf16.mxu0 0
    %3613 = vmatpush1.bf16.msra.mxu0 0
    %3614 = vmatprep.subr.bf16.mxu0 0
    %3615 = vmatpush1.bf16.msra.mxu0 0
    %3616 = vmatprep.subr.bf16.mxu0 0
    %3617 = vmatpush1.bf16.msra.mxu0 0
    %3618 = vmatprep.subr.bf16.mxu0 0
    %3619 = vmatpush1.bf16.msra.mxu0 0
    %3620 = vmatprep.subr.bf16.mxu0 0
    %3621 = vmatpush1.bf16.msra.mxu0 0
    %3622 = vmatprep.subr.bf16.mxu0 0
    %3623 = vmatpush1.bf16.msra.mxu0 %v3604
    %3624 = vmatprep.subr.bf16.mxu0 0
    %3625 = vmatpush1.bf16.msra.mxu0 %v3603
    %3626 = vmatprep.subr.bf16.mxu0 0
    %3627 = vmatpush2.bf16.msra.mxu0 0
    %3628 = vmatprep.subr.bf16.mxu0 0
    %3629 = vmatpush2.bf16.msra.mxu0 0
    %3630 = vmatprep.subr.bf16.mxu0 0
    %3631 = vmatpush2.bf16.msra.mxu0 0
    %3632 = vmatprep.subr.bf16.mxu0 0
    %3633 = vmatpush2.bf16.msra.mxu0 0
    %3634 = vmatprep.subr.bf16.mxu0 0
    %3635 = vmatpush2.bf16.msra.mxu0 0
    %3636 = vmatprep.subr.bf16.mxu0 0
    %3637 = vmatpush2.bf16.msra.mxu0 0
    %3638 = vmatprep.subr.bf16.mxu0 0
    %3639 = vmatpush2.bf16.msra.mxu0 0
    %3640 = vmatprep.subr.bf16.mxu0 0
    %3641 = vmatpush2.bf16.msra.mxu0 0
    %3642 = vmatprep.mubr.bf16.mxu0 0
    %3643 = vmatmul.mubr.bf16.gmra.mxu0 %v3608
    %v3644 = vpop.f32.mrf.mxu0
    %v3645 = vadd.f32 0.0, %v3644
    %v3646 = vpop.f32.mrf.mxu0
    %v3647 = vpop.f32.mrf.mxu0
    %v3648 = vpop.f32.mrf.mxu0
    %3649 = vdwg.mxu0
    %v3650 = vadd.f32 %v3543, %v3645
    %s3651 = scalar_lea.vmem %s8, 9
    %v3652 = vld [vmem:[%s3651] sm:$0x1]
    %v3654 = vsel %vm2491, %v3652, 0
    %3656 = vmatprep.subr.bf16.mxu0 0
    %3657 = vmatpush1.bf16.msra.mxu0 0
    %3658 = vmatprep.subr.bf16.mxu0 0
    %3659 = vmatpush1.bf16.msra.mxu0 0
    %3660 = vmatprep.subr.bf16.mxu0 0
    %3661 = vmatpush1.bf16.msra.mxu0 0
    %3662 = vmatprep.subr.bf16.mxu0 0
    %3663 = vmatpush1.bf16.msra.mxu0 0
    %3664 = vmatprep.subr.bf16.mxu0 0
    %3665 = vmatpush1.bf16.msra.mxu0 0
    %3666 = vmatprep.subr.bf16.mxu0 0
    %3667 = vmatpush1.bf16.msra.mxu0 0
    %3668 = vmatprep.subr.bf16.mxu0 0
    %3669 = vmatpush1.bf16.msra.mxu0 %v2691
    %3670 = vmatprep.subr.bf16.mxu0 0
    %3671 = vmatpush1.bf16.msra.mxu0 %v2690
    %3672 = vmatprep.subr.bf16.mxu0 0
    %3673 = vmatpush2.bf16.msra.mxu0 0
    %3674 = vmatprep.subr.bf16.mxu0 0
    %3675 = vmatpush2.bf16.msra.mxu0 0
    %3676 = vmatprep.subr.bf16.mxu0 0
    %3677 = vmatpush2.bf16.msra.mxu0 0
    %3678 = vmatprep.subr.bf16.mxu0 0
    %3679 = vmatpush2.bf16.msra.mxu0 0
    %3680 = vmatprep.subr.bf16.mxu0 0
    %3681 = vmatpush2.bf16.msra.mxu0 0
    %3682 = vmatprep.subr.bf16.mxu0 0
    %3683 = vmatpush2.bf16.msra.mxu0 0
    %3684 = vmatprep.subr.bf16.mxu0 0
    %3685 = vmatpush2.bf16.msra.mxu0 0
    %3686 = vmatprep.subr.bf16.mxu0 0
    %3687 = vmatpush2.bf16.msra.mxu0 0
    %3688 = vmatprep.mubr.bf16.mxu0 0
    %3689 = vmatmul.mubr.bf16.gmra.mxu0 %v3654
    %v3690 = vpop.f32.mrf.mxu0
    %v3691 = vadd.f32 0.0, %v3690
    %v3692 = vpop.f32.mrf.mxu0
    %v3693 = vpop.f32.mrf.mxu0
    %v3694 = vpop.f32.mrf.mxu0
    %3695 = vdwg.mxu0
    %v3696 = vpack.c.bf16 %v3691, %v3691
    %s3697 = scalar_lea.vmem %s9, 144
    %v3698 = vld [vmem:[%s3697] sm:$0xf]
    %v3699 = vld [vmem:[%s3697 + $0x4] sm:$0xf]
    %v3700 = vld [vmem:[%s3697 + $0x8] sm:$0xf]
    %v3701 = vld [vmem:[%s3697 + $0xc] sm:$0xf]
    %v3706 = vunpack.c.l.b16 %v3698
    %v3707 = vunpack.c.l.b16 %v3699
    %v3708 = vunpack.c.l.b16 %v3700
    %v3709 = vunpack.c.l.b16 %v3701
    %v3710 = vpack.c.b16 %v3707, %v3706
    %v3711 = vpack.c.b16 %v3709, %v3708
    %v3715 = vsel %vm2491, %v3696, 0
    %3717 = vmatprep.subr.bf16.mxu0 0
    %3718 = vmatpush1.bf16.msra.mxu0 0
    %3719 = vmatprep.subr.bf16.mxu0 0
    %3720 = vmatpush1.bf16.msra.mxu0 0
    %3721 = vmatprep.subr.bf16.mxu0 0
    %3722 = vmatpush1.bf16.msra.mxu0 0
    %3723 = vmatprep.subr.bf16.mxu0 0
    %3724 = vmatpush1.bf16.msra.mxu0 0
    %3725 = vmatprep.subr.bf16.mxu0 0
    %3726 = vmatpush1.bf16.msra.mxu0 0
    %3727 = vmatprep.subr.bf16.mxu0 0
    %3728 = vmatpush1.bf16.msra.mxu0 0
    %3729 = vmatprep.subr.bf16.mxu0 0
    %3730 = vmatpush1.bf16.msra.mxu0 %v3711
    %3731 = vmatprep.subr.bf16.mxu0 0
    %3732 = vmatpush1.bf16.msra.mxu0 %v3710
    %3733 = vmatprep.subr.bf16.mxu0 0
    %3734 = vmatpush2.bf16.msra.mxu0 0
    %3735 = vmatprep.subr.bf16.mxu0 0
    %3736 = vmatpush2.bf16.msra.mxu0 0
    %3737 = vmatprep.subr.bf16.mxu0 0
    %3738 = vmatpush2.bf16.msra.mxu0 0
    %3739 = vmatprep.subr.bf16.mxu0 0
    %3740 = vmatpush2.bf16.msra.mxu0 0
    %3741 = vmatprep.subr.bf16.mxu0 0
    %3742 = vmatpush2.bf16.msra.mxu0 0
    %3743 = vmatprep.subr.bf16.mxu0 0
    %3744 = vmatpush2.bf16.msra.mxu0 0
    %3745 = vmatprep.subr.bf16.mxu0 0
    %3746 = vmatpush2.bf16.msra.mxu0 0
    %3747 = vmatprep.subr.bf16.mxu0 0
    %3748 = vmatpush2.bf16.msra.mxu0 0
    %3749 = vmatprep.mubr.bf16.mxu0 0
    %3750 = vmatmul.mubr.bf16.gmra.mxu0 %v3715
    %v3751 = vpop.f32.mrf.mxu0
    %v3752 = vadd.f32 0.0, %v3751
    %v3753 = vpop.f32.mrf.mxu0
    %v3754 = vpop.f32.mrf.mxu0
    %v3755 = vpop.f32.mrf.mxu0
    %3756 = vdwg.mxu0
    %v3757 = vadd.f32 %v3650, %v3752
    %s3758 = scalar_lea.vmem %s8, 10
    %v3759 = vld [vmem:[%s3758] sm:$0x1]
    %v3761 = vsel %vm2491, %v3759, 0
    %3763 = vmatprep.subr.bf16.mxu0 0
    %3764 = vmatpush1.bf16.msra.mxu0 0
    %3765 = vmatprep.subr.bf16.mxu0 0
    %3766 = vmatpush1.bf16.msra.mxu0 0
    %3767 = vmatprep.subr.bf16.mxu0 0
    %3768 = vmatpush1.bf16.msra.mxu0 0
    %3769 = vmatprep.subr.bf16.mxu0 0
    %3770 = vmatpush1.bf16.msra.mxu0 0
    %3771 = vmatprep.subr.bf16.mxu0 0
    %3772 = vmatpush1.bf16.msra.mxu0 0
    %3773 = vmatprep.subr.bf16.mxu0 0
    %3774 = vmatpush1.bf16.msra.mxu0 0
    %3775 = vmatprep.subr.bf16.mxu0 0
    %3776 = vmatpush1.bf16.msra.mxu0 %v2691
    %3777 = vmatprep.subr.bf16.mxu0 0
    %3778 = vmatpush1.bf16.msra.mxu0 %v2690
    %3779 = vmatprep.subr.bf16.mxu0 0
    %3780 = vmatpush2.bf16.msra.mxu0 0
    %3781 = vmatprep.subr.bf16.mxu0 0
    %3782 = vmatpush2.bf16.msra.mxu0 0
    %3783 = vmatprep.subr.bf16.mxu0 0
    %3784 = vmatpush2.bf16.msra.mxu0 0
    %3785 = vmatprep.subr.bf16.mxu0 0
    %3786 = vmatpush2.bf16.msra.mxu0 0
    %3787 = vmatprep.subr.bf16.mxu0 0
    %3788 = vmatpush2.bf16.msra.mxu0 0
    %3789 = vmatprep.subr.bf16.mxu0 0
    %3790 = vmatpush2.bf16.msra.mxu0 0
    %3791 = vmatprep.subr.bf16.mxu0 0
    %3792 = vmatpush2.bf16.msra.mxu0 0
    %3793 = vmatprep.subr.bf16.mxu0 0
    %3794 = vmatpush2.bf16.msra.mxu0 0
    %3795 = vmatprep.mubr.bf16.mxu0 0
    %3796 = vmatmul.mubr.bf16.gmra.mxu0 %v3761
    %v3797 = vpop.f32.mrf.mxu0
    %v3798 = vadd.f32 0.0, %v3797
    %v3799 = vpop.f32.mrf.mxu0
    %v3800 = vpop.f32.mrf.mxu0
    %v3801 = vpop.f32.mrf.mxu0
    %3802 = vdwg.mxu0
    %v3803 = vpack.c.bf16 %v3798, %v3798
    %s3804 = scalar_lea.vmem %s9, 160
    %v3805 = vld [vmem:[%s3804] sm:$0xf]
    %v3806 = vld [vmem:[%s3804 + $0x4] sm:$0xf]
    %v3807 = vld [vmem:[%s3804 + $0x8] sm:$0xf]
    %v3808 = vld [vmem:[%s3804 + $0xc] sm:$0xf]
    %v3813 = vunpack.c.l.b16 %v3805
    %v3814 = vunpack.c.l.b16 %v3806
    %v3815 = vunpack.c.l.b16 %v3807
    %v3816 = vunpack.c.l.b16 %v3808
    %v3817 = vpack.c.b16 %v3814, %v3813
    %v3818 = vpack.c.b16 %v3816, %v3815
    %v3822 = vsel %vm2491, %v3803, 0
    %3824 = vmatprep.subr.bf16.mxu0 0
    %3825 = vmatpush1.bf16.msra.mxu0 0
    %3826 = vmatprep.subr.bf16.mxu0 0
    %3827 = vmatpush1.bf16.msra.mxu0 0
    %3828 = vmatprep.subr.bf16.mxu0 0
    %3829 = vmatpush1.bf16.msra.mxu0 0
    %3830 = vmatprep.subr.bf16.mxu0 0
    %3831 = vmatpush1.bf16.msra.mxu0 0
    %3832 = vmatprep.subr.bf16.mxu0 0
    %3833 = vmatpush1.bf16.msra.mxu0 0
    %3834 = vmatprep.subr.bf16.mxu0 0
    %3835 = vmatpush1.bf16.msra.mxu0 0
    %3836 = vmatprep.subr.bf16.mxu0 0
    %3837 = vmatpush1.bf16.msra.mxu0 %v3818
    %3838 = vmatprep.subr.bf16.mxu0 0
    %3839 = vmatpush1.bf16.msra.mxu0 %v3817
    %3840 = vmatprep.subr.bf16.mxu0 0
    %3841 = vmatpush2.bf16.msra.mxu0 0
    %3842 = vmatprep.subr.bf16.mxu0 0
    %3843 = vmatpush2.bf16.msra.mxu0 0
    %3844 = vmatprep.subr.bf16.mxu0 0
    %3845 = vmatpush2.bf16.msra.mxu0 0
    %3846 = vmatprep.subr.bf16.mxu0 0
    %3847 = vmatpush2.bf16.msra.mxu0 0
    %3848 = vmatprep.subr.bf16.mxu0 0
    %3849 = vmatpush2.bf16.msra.mxu0 0
    %3850 = vmatprep.subr.bf16.mxu0 0
    %3851 = vmatpush2.bf16.msra.mxu0 0
    %3852 = vmatprep.subr.bf16.mxu0 0
    %3853 = vmatpush2.bf16.msra.mxu0 0
    %3854 = vmatprep.subr.bf16.mxu0 0
    %3855 = vmatpush2.bf16.msra.mxu0 0
    %3856 = vmatprep.mubr.bf16.mxu0 0
    %3857 = vmatmul.mubr.bf16.gmra.mxu0 %v3822
    %v3858 = vpop.f32.mrf.mxu0
    %v3859 = vadd.f32 0.0, %v3858
    %v3860 = vpop.f32.mrf.mxu0
    %v3861 = vpop.f32.mrf.mxu0
    %v3862 = vpop.f32.mrf.mxu0
    %3863 = vdwg.mxu0
    %v3864 = vadd.f32 %v3757, %v3859
    %s3865 = scalar_lea.vmem %s8, 11
    %v3866 = vld [vmem:[%s3865] sm:$0x1]
    %v3868 = vsel %vm2491, %v3866, 0
    %3870 = vmatprep.subr.bf16.mxu0 0
    %3871 = vmatpush1.bf16.msra.mxu0 0
    %3872 = vmatprep.subr.bf16.mxu0 0
    %3873 = vmatpush1.bf16.msra.mxu0 0
    %3874 = vmatprep.subr.bf16.mxu0 0
    %3875 = vmatpush1.bf16.msra.mxu0 0
    %3876 = vmatprep.subr.bf16.mxu0 0
    %3877 = vmatpush1.bf16.msra.mxu0 0
    %3878 = vmatprep.subr.bf16.mxu0 0
    %3879 = vmatpush1.bf16.msra.mxu0 0
    %3880 = vmatprep.subr.bf16.mxu0 0
    %3881 = vmatpush1.bf16.msra.mxu0 0
    %3882 = vmatprep.subr.bf16.mxu0 0
    %3883 = vmatpush1.bf16.msra.mxu0 %v2691
    %3884 = vmatprep.subr.bf16.mxu0 0
    %3885 = vmatpush1.bf16.msra.mxu0 %v2690
    %3886 = vmatprep.subr.bf16.mxu0 0
    %3887 = vmatpush2.bf16.msra.mxu0 0
    %3888 = vmatprep.subr.bf16.mxu0 0
    %3889 = vmatpush2.bf16.msra.mxu0 0
    %3890 = vmatprep.subr.bf16.mxu0 0
    %3891 = vmatpush2.bf16.msra.mxu0 0
    %3892 = vmatprep.subr.bf16.mxu0 0
    %3893 = vmatpush2.bf16.msra.mxu0 0
    %3894 = vmatprep.subr.bf16.mxu0 0
    %3895 = vmatpush2.bf16.msra.mxu0 0
    %3896 = vmatprep.subr.bf16.mxu0 0
    %3897 = vmatpush2.bf16.msra.mxu0 0
    %3898 = vmatprep.subr.bf16.mxu0 0
    %3899 = vmatpush2.bf16.msra.mxu0 0
    %3900 = vmatprep.subr.bf16.mxu0 0
    %3901 = vmatpush2.bf16.msra.mxu0 0
    %3902 = vmatprep.mubr.bf16.mxu0 0
    %3903 = vmatmul.mubr.bf16.gmra.mxu0 %v3868
    %v3904 = vpop.f32.mrf.mxu0
    %v3905 = vadd.f32 0.0, %v3904
    %v3906 = vpop.f32.mrf.mxu0
    %v3907 = vpop.f32.mrf.mxu0
    %v3908 = vpop.f32.mrf.mxu0
    %3909 = vdwg.mxu0
    %v3910 = vpack.c.bf16 %v3905, %v3905
    %s3911 = scalar_lea.vmem %s9, 176
    %v3912 = vld [vmem:[%s3911] sm:$0xf]
    %v3913 = vld [vmem:[%s3911 + $0x4] sm:$0xf]
    %v3914 = vld [vmem:[%s3911 + $0x8] sm:$0xf]
    %v3915 = vld [vmem:[%s3911 + $0xc] sm:$0xf]
    %v3920 = vunpack.c.l.b16 %v3912
    %v3921 = vunpack.c.l.b16 %v3913
    %v3922 = vunpack.c.l.b16 %v3914
    %v3923 = vunpack.c.l.b16 %v3915
    %v3924 = vpack.c.b16 %v3921, %v3920
    %v3925 = vpack.c.b16 %v3923, %v3922
    %v3929 = vsel %vm2491, %v3910, 0
    %3931 = vmatprep.subr.bf16.mxu0 0
    %3932 = vmatpush1.bf16.msra.mxu0 0
    %3933 = vmatprep.subr.bf16.mxu0 0
    %3934 = vmatpush1.bf16.msra.mxu0 0
    %3935 = vmatprep.subr.bf16.mxu0 0
    %3936 = vmatpush1.bf16.msra.mxu0 0
    %3937 = vmatprep.subr.bf16.mxu0 0
    %3938 = vmatpush1.bf16.msra.mxu0 0
    %3939 = vmatprep.subr.bf16.mxu0 0
    %3940 = vmatpush1.bf16.msra.mxu0 0
    %3941 = vmatprep.subr.bf16.mxu0 0
    %3942 = vmatpush1.bf16.msra.mxu0 0
    %3943 = vmatprep.subr.bf16.mxu0 0
    %3944 = vmatpush1.bf16.msra.mxu0 %v3925
    %3945 = vmatprep.subr.bf16.mxu0 0
    %3946 = vmatpush1.bf16.msra.mxu0 %v3924
    %3947 = vmatprep.subr.bf16.mxu0 0
    %3948 = vmatpush2.bf16.msra.mxu0 0
    %3949 = vmatprep.subr.bf16.mxu0 0
    %3950 = vmatpush2.bf16.msra.mxu0 0
    %3951 = vmatprep.subr.bf16.mxu0 0
    %3952 = vmatpush2.bf16.msra.mxu0 0
    %3953 = vmatprep.subr.bf16.mxu0 0
    %3954 = vmatpush2.bf16.msra.mxu0 0
    %3955 = vmatprep.subr.bf16.mxu0 0
    %3956 = vmatpush2.bf16.msra.mxu0 0
    %3957 = vmatprep.subr.bf16.mxu0 0
    %3958 = vmatpush2.bf16.msra.mxu0 0
    %3959 = vmatprep.subr.bf16.mxu0 0
    %3960 = vmatpush2.bf16.msra.mxu0 0
    %3961 = vmatprep.subr.bf16.mxu0 0
    %3962 = vmatpush2.bf16.msra.mxu0 0
    %3963 = vmatprep.mubr.bf16.mxu0 0
    %3964 = vmatmul.mubr.bf16.gmra.mxu0 %v3929
    %v3965 = vpop.f32.mrf.mxu0
    %v3966 = vadd.f32 0.0, %v3965
    %v3967 = vpop.f32.mrf.mxu0
    %v3968 = vpop.f32.mrf.mxu0
    %v3969 = vpop.f32.mrf.mxu0
    %3970 = vdwg.mxu0
    %v3971 = vadd.f32 %v3864, %v3966
    %s3972 = scalar_lea.vmem %s8, 12
    %v3973 = vld [vmem:[%s3972] sm:$0x1]
    %v3975 = vsel %vm2491, %v3973, 0
    %3977 = vmatprep.subr.bf16.mxu0 0
    %3978 = vmatpush1.bf16.msra.mxu0 0
    %3979 = vmatprep.subr.bf16.mxu0 0
    %3980 = vmatpush1.bf16.msra.mxu0 0
    %3981 = vmatprep.subr.bf16.mxu0 0
    %3982 = vmatpush1.bf16.msra.mxu0 0
    %3983 = vmatprep.subr.bf16.mxu0 0
    %3984 = vmatpush1.bf16.msra.mxu0 0
    %3985 = vmatprep.subr.bf16.mxu0 0
    %3986 = vmatpush1.bf16.msra.mxu0 0
    %3987 = vmatprep.subr.bf16.mxu0 0
    %3988 = vmatpush1.bf16.msra.mxu0 0
    %3989 = vmatprep.subr.bf16.mxu0 0
    %3990 = vmatpush1.bf16.msra.mxu0 %v2691
    %3991 = vmatprep.subr.bf16.mxu0 0
    %3992 = vmatpush1.bf16.msra.mxu0 %v2690
    %3993 = vmatprep.subr.bf16.mxu0 0
    %3994 = vmatpush2.bf16.msra.mxu0 0
    %3995 = vmatprep.subr.bf16.mxu0 0
    %3996 = vmatpush2.bf16.msra.mxu0 0
    %3997 = vmatprep.subr.bf16.mxu0 0
    %3998 = vmatpush2.bf16.msra.mxu0 0
    %3999 = vmatprep.subr.bf16.mxu0 0
    %4000 = vmatpush2.bf16.msra.mxu0 0
    %4001 = vmatprep.subr.bf16.mxu0 0
    %4002 = vmatpush2.bf16.msra.mxu0 0
    %4003 = vmatprep.subr.bf16.mxu0 0
    %4004 = vmatpush2.bf16.msra.mxu0 0
    %4005 = vmatprep.subr.bf16.mxu0 0
    %4006 = vmatpush2.bf16.msra.mxu0 0
    %4007 = vmatprep.subr.bf16.mxu0 0
    %4008 = vmatpush2.bf16.msra.mxu0 0
    %4009 = vmatprep.mubr.bf16.mxu0 0
    %4010 = vmatmul.mubr.bf16.gmra.mxu0 %v3975
    %v4011 = vpop.f32.mrf.mxu0
    %v4012 = vadd.f32 0.0, %v4011
    %v4013 = vpop.f32.mrf.mxu0
    %v4014 = vpop.f32.mrf.mxu0
    %v4015 = vpop.f32.mrf.mxu0
    %4016 = vdwg.mxu0
    %v4017 = vpack.c.bf16 %v4012, %v4012
    %s4018 = scalar_lea.vmem %s9, 192
    %v4019 = vld [vmem:[%s4018] sm:$0xf]
    %v4020 = vld [vmem:[%s4018 + $0x4] sm:$0xf]
    %v4021 = vld [vmem:[%s4018 + $0x8] sm:$0xf]
    %v4022 = vld [vmem:[%s4018 + $0xc] sm:$0xf]
    %v4027 = vunpack.c.l.b16 %v4019
    %v4028 = vunpack.c.l.b16 %v4020
    %v4029 = vunpack.c.l.b16 %v4021
    %v4030 = vunpack.c.l.b16 %v4022
    %v4031 = vpack.c.b16 %v4028, %v4027
    %v4032 = vpack.c.b16 %v4030, %v4029
    %v4036 = vsel %vm2491, %v4017, 0
    %4038 = vmatprep.subr.bf16.mxu0 0
    %4039 = vmatpush1.bf16.msra.mxu0 0
    %4040 = vmatprep.subr.bf16.mxu0 0
    %4041 = vmatpush1.bf16.msra.mxu0 0
    %4042 = vmatprep.subr.bf16.mxu0 0
    %4043 = vmatpush1.bf16.msra.mxu0 0
    %4044 = vmatprep.subr.bf16.mxu0 0
    %4045 = vmatpush1.bf16.msra.mxu0 0
    %4046 = vmatprep.subr.bf16.mxu0 0
    %4047 = vmatpush1.bf16.msra.mxu0 0
    %4048 = vmatprep.subr.bf16.mxu0 0
    %4049 = vmatpush1.bf16.msra.mxu0 0
    %4050 = vmatprep.subr.bf16.mxu0 0
    %4051 = vmatpush1.bf16.msra.mxu0 %v4032
    %4052 = vmatprep.subr.bf16.mxu0 0
    %4053 = vmatpush1.bf16.msra.mxu0 %v4031
    %4054 = vmatprep.subr.bf16.mxu0 0
    %4055 = vmatpush2.bf16.msra.mxu0 0
    %4056 = vmatprep.subr.bf16.mxu0 0
    %4057 = vmatpush2.bf16.msra.mxu0 0
    %4058 = vmatprep.subr.bf16.mxu0 0
    %4059 = vmatpush2.bf16.msra.mxu0 0
    %4060 = vmatprep.subr.bf16.mxu0 0
    %4061 = vmatpush2.bf16.msra.mxu0 0
    %4062 = vmatprep.subr.bf16.mxu0 0
    %4063 = vmatpush2.bf16.msra.mxu0 0
    %4064 = vmatprep.subr.bf16.mxu0 0
    %4065 = vmatpush2.bf16.msra.mxu0 0
    %4066 = vmatprep.subr.bf16.mxu0 0
    %4067 = vmatpush2.bf16.msra.mxu0 0
    %4068 = vmatprep.subr.bf16.mxu0 0
    %4069 = vmatpush2.bf16.msra.mxu0 0
    %4070 = vmatprep.mubr.bf16.mxu0 0
    %4071 = vmatmul.mubr.bf16.gmra.mxu0 %v4036
    %v4072 = vpop.f32.mrf.mxu0
    %v4073 = vadd.f32 0.0, %v4072
    %v4074 = vpop.f32.mrf.mxu0
    %v4075 = vpop.f32.mrf.mxu0
    %v4076 = vpop.f32.mrf.mxu0
    %4077 = vdwg.mxu0
    %v4078 = vadd.f32 %v3971, %v4073
    %s4079 = scalar_lea.vmem %s8, 13
    %v4080 = vld [vmem:[%s4079] sm:$0x1]
    %v4082 = vsel %vm2491, %v4080, 0
    %4084 = vmatprep.subr.bf16.mxu0 0
    %4085 = vmatpush1.bf16.msra.mxu0 0
    %4086 = vmatprep.subr.bf16.mxu0 0
    %4087 = vmatpush1.bf16.msra.mxu0 0
    %4088 = vmatprep.subr.bf16.mxu0 0
    %4089 = vmatpush1.bf16.msra.mxu0 0
    %4090 = vmatprep.subr.bf16.mxu0 0
    %4091 = vmatpush1.bf16.msra.mxu0 0
    %4092 = vmatprep.subr.bf16.mxu0 0
    %4093 = vmatpush1.bf16.msra.mxu0 0
    %4094 = vmatprep.subr.bf16.mxu0 0
    %4095 = vmatpush1.bf16.msra.mxu0 0
    %4096 = vmatprep.subr.bf16.mxu0 0
    %4097 = vmatpush1.bf16.msra.mxu0 %v2691
    %4098 = vmatprep.subr.bf16.mxu0 0
    %4099 = vmatpush1.bf16.msra.mxu0 %v2690
    %4100 = vmatprep.subr.bf16.mxu0 0
    %4101 = vmatpush2.bf16.msra.mxu0 0
    %4102 = vmatprep.subr.bf16.mxu0 0
    %4103 = vmatpush2.bf16.msra.mxu0 0
    %4104 = vmatprep.subr.bf16.mxu0 0
    %4105 = vmatpush2.bf16.msra.mxu0 0
    %4106 = vmatprep.subr.bf16.mxu0 0
    %4107 = vmatpush2.bf16.msra.mxu0 0
    %4108 = vmatprep.subr.bf16.mxu0 0
    %4109 = vmatpush2.bf16.msra.mxu0 0
    %4110 = vmatprep.subr.bf16.mxu0 0
    %4111 = vmatpush2.bf16.msra.mxu0 0
    %4112 = vmatprep.subr.bf16.mxu0 0
    %4113 = vmatpush2.bf16.msra.mxu0 0
    %4114 = vmatprep.subr.bf16.mxu0 0
    %4115 = vmatpush2.bf16.msra.mxu0 0
    %4116 = vmatprep.mubr.bf16.mxu0 0
    %4117 = vmatmul.mubr.bf16.gmra.mxu0 %v4082
    %v4118 = vpop.f32.mrf.mxu0
    %v4119 = vadd.f32 0.0, %v4118
    %v4120 = vpop.f32.mrf.mxu0
    %v4121 = vpop.f32.mrf.mxu0
    %v4122 = vpop.f32.mrf.mxu0
    %4123 = vdwg.mxu0
    %v4124 = vpack.c.bf16 %v4119, %v4119
    %s4125 = scalar_lea.vmem %s9, 208
    %v4126 = vld [vmem:[%s4125] sm:$0xf]
    %v4127 = vld [vmem:[%s4125 + $0x4] sm:$0xf]
    %v4128 = vld [vmem:[%s4125 + $0x8] sm:$0xf]
    %v4129 = vld [vmem:[%s4125 + $0xc] sm:$0xf]
    %v4134 = vunpack.c.l.b16 %v4126
    %v4135 = vunpack.c.l.b16 %v4127
    %v4136 = vunpack.c.l.b16 %v4128
    %v4137 = vunpack.c.l.b16 %v4129
    %v4138 = vpack.c.b16 %v4135, %v4134
    %v4139 = vpack.c.b16 %v4137, %v4136
    %v4143 = vsel %vm2491, %v4124, 0
    %4145 = vmatprep.subr.bf16.mxu0 0
    %4146 = vmatpush1.bf16.msra.mxu0 0
    %4147 = vmatprep.subr.bf16.mxu0 0
    %4148 = vmatpush1.bf16.msra.mxu0 0
    %4149 = vmatprep.subr.bf16.mxu0 0
    %4150 = vmatpush1.bf16.msra.mxu0 0
    %4151 = vmatprep.subr.bf16.mxu0 0
    %4152 = vmatpush1.bf16.msra.mxu0 0
    %4153 = vmatprep.subr.bf16.mxu0 0
    %4154 = vmatpush1.bf16.msra.mxu0 0
    %4155 = vmatprep.subr.bf16.mxu0 0
    %4156 = vmatpush1.bf16.msra.mxu0 0
    %4157 = vmatprep.subr.bf16.mxu0 0
    %4158 = vmatpush1.bf16.msra.mxu0 %v4139
    %4159 = vmatprep.subr.bf16.mxu0 0
    %4160 = vmatpush1.bf16.msra.mxu0 %v4138
    %4161 = vmatprep.subr.bf16.mxu0 0
    %4162 = vmatpush2.bf16.msra.mxu0 0
    %4163 = vmatprep.subr.bf16.mxu0 0
    %4164 = vmatpush2.bf16.msra.mxu0 0
    %4165 = vmatprep.subr.bf16.mxu0 0
    %4166 = vmatpush2.bf16.msra.mxu0 0
    %4167 = vmatprep.subr.bf16.mxu0 0
    %4168 = vmatpush2.bf16.msra.mxu0 0
    %4169 = vmatprep.subr.bf16.mxu0 0
    %4170 = vmatpush2.bf16.msra.mxu0 0
    %4171 = vmatprep.subr.bf16.mxu0 0
    %4172 = vmatpush2.bf16.msra.mxu0 0
    %4173 = vmatprep.subr.bf16.mxu0 0
    %4174 = vmatpush2.bf16.msra.mxu0 0
    %4175 = vmatprep.subr.bf16.mxu0 0
    %4176 = vmatpush2.bf16.msra.mxu0 0
    %4177 = vmatprep.mubr.bf16.mxu0 0
    %4178 = vmatmul.mubr.bf16.gmra.mxu0 %v4143
    %v4179 = vpop.f32.mrf.mxu0
    %v4180 = vadd.f32 0.0, %v4179
    %v4181 = vpop.f32.mrf.mxu0
    %v4182 = vpop.f32.mrf.mxu0
    %v4183 = vpop.f32.mrf.mxu0
    %4184 = vdwg.mxu0
    %v4185 = vadd.f32 %v4078, %v4180
    %s4186 = scalar_lea.vmem %s8, 14
    %v4187 = vld [vmem:[%s4186] sm:$0x1]
    %v4189 = vsel %vm2491, %v4187, 0
    %4191 = vmatprep.subr.bf16.mxu0 0
    %4192 = vmatpush1.bf16.msra.mxu0 0
    %4193 = vmatprep.subr.bf16.mxu0 0
    %4194 = vmatpush1.bf16.msra.mxu0 0
    %4195 = vmatprep.subr.bf16.mxu0 0
    %4196 = vmatpush1.bf16.msra.mxu0 0
    %4197 = vmatprep.subr.bf16.mxu0 0
    %4198 = vmatpush1.bf16.msra.mxu0 0
    %4199 = vmatprep.subr.bf16.mxu0 0
    %4200 = vmatpush1.bf16.msra.mxu0 0
    %4201 = vmatprep.subr.bf16.mxu0 0
    %4202 = vmatpush1.bf16.msra.mxu0 0
    %4203 = vmatprep.subr.bf16.mxu0 0
    %4204 = vmatpush1.bf16.msra.mxu0 %v2691
    %4205 = vmatprep.subr.bf16.mxu0 0
    %4206 = vmatpush1.bf16.msra.mxu0 %v2690
    %4207 = vmatprep.subr.bf16.mxu0 0
    %4208 = vmatpush2.bf16.msra.mxu0 0
    %4209 = vmatprep.subr.bf16.mxu0 0
    %4210 = vmatpush2.bf16.msra.mxu0 0
    %4211 = vmatprep.subr.bf16.mxu0 0
    %4212 = vmatpush2.bf16.msra.mxu0 0
    %4213 = vmatprep.subr.bf16.mxu0 0
    %4214 = vmatpush2.bf16.msra.mxu0 0
    %4215 = vmatprep.subr.bf16.mxu0 0
    %4216 = vmatpush2.bf16.msra.mxu0 0
    %4217 = vmatprep.subr.bf16.mxu0 0
    %4218 = vmatpush2.bf16.msra.mxu0 0
    %4219 = vmatprep.subr.bf16.mxu0 0
    %4220 = vmatpush2.bf16.msra.mxu0 0
    %4221 = vmatprep.subr.bf16.mxu0 0
    %4222 = vmatpush2.bf16.msra.mxu0 0
    %4223 = vmatprep.mubr.bf16.mxu0 0
    %4224 = vmatmul.mubr.bf16.gmra.mxu0 %v4189
    %v4225 = vpop.f32.mrf.mxu0
    %v4226 = vadd.f32 0.0, %v4225
    %v4227 = vpop.f32.mrf.mxu0
    %v4228 = vpop.f32.mrf.mxu0
    %v4229 = vpop.f32.mrf.mxu0
    %4230 = vdwg.mxu0
    %v4231 = vpack.c.bf16 %v4226, %v4226
    %s4232 = scalar_lea.vmem %s9, 224
    %v4233 = vld [vmem:[%s4232] sm:$0xf]
    %v4234 = vld [vmem:[%s4232 + $0x4] sm:$0xf]
    %v4235 = vld [vmem:[%s4232 + $0x8] sm:$0xf]
    %v4236 = vld [vmem:[%s4232 + $0xc] sm:$0xf]
    %v4241 = vunpack.c.l.b16 %v4233
    %v4242 = vunpack.c.l.b16 %v4234
    %v4243 = vunpack.c.l.b16 %v4235
    %v4244 = vunpack.c.l.b16 %v4236
    %v4245 = vpack.c.b16 %v4242, %v4241
    %v4246 = vpack.c.b16 %v4244, %v4243
    %v4250 = vsel %vm2491, %v4231, 0
    %4252 = vmatprep.subr.bf16.mxu0 0
    %4253 = vmatpush1.bf16.msra.mxu0 0
    %4254 = vmatprep.subr.bf16.mxu0 0
    %4255 = vmatpush1.bf16.msra.mxu0 0
    %4256 = vmatprep.subr.bf16.mxu0 0
    %4257 = vmatpush1.bf16.msra.mxu0 0
    %4258 = vmatprep.subr.bf16.mxu0 0
    %4259 = vmatpush1.bf16.msra.mxu0 0
    %4260 = vmatprep.subr.bf16.mxu0 0
    %4261 = vmatpush1.bf16.msra.mxu0 0
    %4262 = vmatprep.subr.bf16.mxu0 0
    %4263 = vmatpush1.bf16.msra.mxu0 0
    %4264 = vmatprep.subr.bf16.mxu0 0
    %4265 = vmatpush1.bf16.msra.mxu0 %v4246
    %4266 = vmatprep.subr.bf16.mxu0 0
    %4267 = vmatpush1.bf16.msra.mxu0 %v4245
    %4268 = vmatprep.subr.bf16.mxu0 0
    %4269 = vmatpush2.bf16.msra.mxu0 0
    %4270 = vmatprep.subr.bf16.mxu0 0
    %4271 = vmatpush2.bf16.msra.mxu0 0
    %4272 = vmatprep.subr.bf16.mxu0 0
    %4273 = vmatpush2.bf16.msra.mxu0 0
    %4274 = vmatprep.subr.bf16.mxu0 0
    %4275 = vmatpush2.bf16.msra.mxu0 0
    %4276 = vmatprep.subr.bf16.mxu0 0
    %4277 = vmatpush2.bf16.msra.mxu0 0
    %4278 = vmatprep.subr.bf16.mxu0 0
    %4279 = vmatpush2.bf16.msra.mxu0 0
    %4280 = vmatprep.subr.bf16.mxu0 0
    %4281 = vmatpush2.bf16.msra.mxu0 0
    %4282 = vmatprep.subr.bf16.mxu0 0
    %4283 = vmatpush2.bf16.msra.mxu0 0
    %4284 = vmatprep.mubr.bf16.mxu0 0
    %4285 = vmatmul.mubr.bf16.gmra.mxu0 %v4250
    %v4286 = vpop.f32.mrf.mxu0
    %v4287 = vadd.f32 0.0, %v4286
    %v4288 = vpop.f32.mrf.mxu0
    %v4289 = vpop.f32.mrf.mxu0
    %v4290 = vpop.f32.mrf.mxu0
    %4291 = vdwg.mxu0
    %v4292 = vadd.f32 %v4185, %v4287
    %s4293 = scalar_lea.vmem %s8, 15
    %v4294 = vld [vmem:[%s4293] sm:$0x1]
    %v4296 = vsel %vm2491, %v4294, 0
    %4298 = vmatprep.subr.bf16.mxu0 0
    %4299 = vmatpush1.bf16.msra.mxu0 0
    %4300 = vmatprep.subr.bf16.mxu0 0
    %4301 = vmatpush1.bf16.msra.mxu0 0
    %4302 = vmatprep.subr.bf16.mxu0 0
    %4303 = vmatpush1.bf16.msra.mxu0 0
    %4304 = vmatprep.subr.bf16.mxu0 0
    %4305 = vmatpush1.bf16.msra.mxu0 0
    %4306 = vmatprep.subr.bf16.mxu0 0
    %4307 = vmatpush1.bf16.msra.mxu0 0
    %4308 = vmatprep.subr.bf16.mxu0 0
    %4309 = vmatpush1.bf16.msra.mxu0 0
    %4310 = vmatprep.subr.bf16.mxu0 0
    %4311 = vmatpush1.bf16.msra.mxu0 %v2691
    %4312 = vmatprep.subr.bf16.mxu0 0
    %4313 = vmatpush1.bf16.msra.mxu0 %v2690
    %4314 = vmatprep.subr.bf16.mxu0 0
    %4315 = vmatpush2.bf16.msra.mxu0 0
    %4316 = vmatprep.subr.bf16.mxu0 0
    %4317 = vmatpush2.bf16.msra.mxu0 0
    %4318 = vmatprep.subr.bf16.mxu0 0
    %4319 = vmatpush2.bf16.msra.mxu0 0
    %4320 = vmatprep.subr.bf16.mxu0 0
    %4321 = vmatpush2.bf16.msra.mxu0 0
    %4322 = vmatprep.subr.bf16.mxu0 0
    %4323 = vmatpush2.bf16.msra.mxu0 0
    %4324 = vmatprep.subr.bf16.mxu0 0
    %4325 = vmatpush2.bf16.msra.mxu0 0
    %4326 = vmatprep.subr.bf16.mxu0 0
    %4327 = vmatpush2.bf16.msra.mxu0 0
    %4328 = vmatprep.subr.bf16.mxu0 0
    %4329 = vmatpush2.bf16.msra.mxu0 0
    %4330 = vmatprep.mubr.bf16.mxu0 0
    %4331 = vmatmul.mubr.bf16.gmra.mxu0 %v4296
    %v4332 = vpop.f32.mrf.mxu0
    %v4333 = vadd.f32 0.0, %v4332
    %v4334 = vpop.f32.mrf.mxu0
    %v4335 = vpop.f32.mrf.mxu0
    %v4336 = vpop.f32.mrf.mxu0
    %4337 = vdwg.mxu0
    %v4338 = vpack.c.bf16 %v4333, %v4333
    %s4339 = scalar_lea.vmem %s9, 240
    %v4340 = vld [vmem:[%s4339] sm:$0xf]
    %v4341 = vld [vmem:[%s4339 + $0x4] sm:$0xf]
    %v4342 = vld [vmem:[%s4339 + $0x8] sm:$0xf]
    %v4343 = vld [vmem:[%s4339 + $0xc] sm:$0xf]
    %v4348 = vunpack.c.l.b16 %v4340
    %v4349 = vunpack.c.l.b16 %v4341
    %v4350 = vunpack.c.l.b16 %v4342
    %v4351 = vunpack.c.l.b16 %v4343
    %v4352 = vpack.c.b16 %v4349, %v4348
    %v4353 = vpack.c.b16 %v4351, %v4350
    %v4357 = vsel %vm2491, %v4338, 0
    %4359 = vmatprep.subr.bf16.mxu0 0
    %4360 = vmatpush1.bf16.msra.mxu0 0
    %4361 = vmatprep.subr.bf16.mxu0 0
    %4362 = vmatpush1.bf16.msra.mxu0 0
    %4363 = vmatprep.subr.bf16.mxu0 0
    %4364 = vmatpush1.bf16.msra.mxu0 0
    %4365 = vmatprep.subr.bf16.mxu0 0
    %4366 = vmatpush1.bf16.msra.mxu0 0
    %4367 = vmatprep.subr.bf16.mxu0 0
    %4368 = vmatpush1.bf16.msra.mxu0 0
    %4369 = vmatprep.subr.bf16.mxu0 0
    %4370 = vmatpush1.bf16.msra.mxu0 0
    %4371 = vmatprep.subr.bf16.mxu0 0
    %4372 = vmatpush1.bf16.msra.mxu0 %v4353
    %4373 = vmatprep.subr.bf16.mxu0 0
    %4374 = vmatpush1.bf16.msra.mxu0 %v4352
    %4375 = vmatprep.subr.bf16.mxu0 0
    %4376 = vmatpush2.bf16.msra.mxu0 0
    %4377 = vmatprep.subr.bf16.mxu0 0
    %4378 = vmatpush2.bf16.msra.mxu0 0
    %4379 = vmatprep.subr.bf16.mxu0 0
    %4380 = vmatpush2.bf16.msra.mxu0 0
    %4381 = vmatprep.subr.bf16.mxu0 0
    %4382 = vmatpush2.bf16.msra.mxu0 0
    %4383 = vmatprep.subr.bf16.mxu0 0
    %4384 = vmatpush2.bf16.msra.mxu0 0
    %4385 = vmatprep.subr.bf16.mxu0 0
    %4386 = vmatpush2.bf16.msra.mxu0 0
    %4387 = vmatprep.subr.bf16.mxu0 0
    %4388 = vmatpush2.bf16.msra.mxu0 0
    %4389 = vmatprep.subr.bf16.mxu0 0
    %4390 = vmatpush2.bf16.msra.mxu0 0
    %4391 = vmatprep.mubr.bf16.mxu0 0
    %4392 = vmatmul.mubr.bf16.gmra.mxu0 %v4357
    %v4393 = vpop.f32.mrf.mxu0
    %v4394 = vadd.f32 0.0, %v4393
    %v4395 = vpop.f32.mrf.mxu0
    %v4396 = vpop.f32.mrf.mxu0
    %v4397 = vpop.f32.mrf.mxu0
    %4398 = vdwg.mxu0
    %v4399 = vadd.f32 %v4292, %v4394
    %v4400 = vld [vmem:[%s10] sm:$0x1]
    %v4402 = vlaneseq
    %v4403 = vshrl.u32 %v4402, 7
    %v4404 = vsub.s32 0, %v4403
    %v4405 = vrot.slane %v4400, %v4404
    %v4407 = vadd.f32 %v4399, %v4405
    %vm4408 = vcmask 254976
    %4409 = vst.msk [vmem:[#allocation2] sm:$0x3] %vm4408, %v4407
    // Predicated region
    $region46: #{encoder_forward.1} parent=1 // pred_check
      _
    $region47: #{encoder_forward.1} parent=1 // pred_check_branch
      %4411 = sbr.rel (0) target = $region49
    $region48: #{encoder_forward.1} parent=1 // pred_region
      %s4413 = ssub.s32 32, 32
      %4414 = vsyncadd [#allocation3], %s4413
      %s4416 = sshll.u32 [#allocation2], 4
      %s4417 = int_to_ptr.vmem [resolvable:$true] %s4416
      %4419 = dma.vmem_to_hbm [thread:$0]  %s4417, 32, %s11, [#allocation3]
    $region49: #{encoder_forward.1} parent=1 // pred_fallthru
      _
    // Predicated region
    $region50: #{encoder_forward.1} parent=1 // pred_check
      _
    $region51: #{encoder_forward.1} parent=1 // pred_check_branch
      %4421 = sbr.rel (0) target = $region53
    $region52: #{encoder_forward.1} parent=1 // pred_region
      %4422 = dma.done [#allocation3], 32
    $region53: #{encoder_forward.1} parent=1 // pred_fallthru
      _
    %4423 = vsyncpa [#allocation3], 1

</llo_original>
